<compile_context>
chip_gen: v7x
topology: tpu7x:2x2x1
jax: 0.10.0
libtpu: 0.0.40
codegen_flags: <defaults>
</compile_context>

<pallas_src>
import functools

import numpy as np
import jax
import jax.numpy as jnp
from jax import lax
from jax.experimental import pallas as pl
from jax.experimental.pallas import tpu as pltpu


def _rb_kernel(x_ref, a_ref, k1_ref, g_ref, k3_ref, ks_ref, bias_ref, o_ref,
               *, w_cmid, wo_cmid, wo_cout):
    """One grid step = NB images, all math on lane-dense 2-D slabs.

    x_ref   : (NB*H,  W*Cin)        input slab (f32)
    a_ref   : (3, NB*Ho, NB*H)      0/1 row-gather matrices (H offsets -1,0,+1)
    k1_ref  : (W*Cin,  W*Cmid)      block-diag expansion weights (BN1 folded)
    g_ref   : (3, W*Cmid, Wo*Cmid)  banded 3x3-conv weights, one per kernel row
    k3_ref  : (Wo*Cmid, Wo*Cout)    block-diag projection weights (BN3 folded)
    ks_ref  : (W*Cin,  Wo*Cout)     block-diag / strided skip-conv weights
    bias_ref: (1, W*Cmid + Wo*Cmid + Wo*Cout)  packed per-lane biases
    o_ref   : (NB*Ho, Wo*Cout)      output slab (f32)
    """
    f32 = jnp.float32
    bf16 = jnp.bfloat16

    xb = x_ref[...].astype(bf16)                                   # (NB*H, W*Cin)

    # ---- 1x1 conv + (folded) BN1 bias + ReLU --------------------------------
    b1 = bias_ref[:, 0:w_cmid]
    h = jnp.dot(xb, k1_ref[...], preferred_element_type=f32) + b1
    h = jnp.maximum(h, 0.0)
    hb = h.astype(bf16)                                            # (NB*H, W*Cmid)

    # ---- 3x3 conv (stride, pad=1) + BN2 bias + ReLU -------------------------
    # sum over kernel rows a: (A_a @ h) selects the input H-rows for that tap
    # (exact: A_a is 0/1), then a banded matrix G_a applies all three W taps.
    b2 = bias_ref[:, w_cmid:w_cmid + wo_cmid]
    acc = None
    for a in range(3):
        rows = jnp.dot(a_ref[a], hb, preferred_element_type=f32).astype(bf16)
        part = jnp.dot(rows, g_ref[a], preferred_element_type=f32)
        acc = part if acc is None else acc + part
    y = jnp.maximum(acc + b2, 0.0).astype(bf16)                    # (NB*Ho, Wo*Cmid)

    # ---- 1x1 projection conv (BN3 folded; bias merged with skip bias) -------
    z = jnp.dot(y, k3_ref[...], preferred_element_type=f32)        # (NB*Ho, Wo*Cout)

    # ---- skip branch: 1x1 conv (stride via row/col selection matrices) ------
    xc = jnp.dot(a_ref[1], xb, preferred_element_type=f32).astype(bf16)
    sk = jnp.dot(xc, ks_ref[...], preferred_element_type=f32)      # (NB*Ho, Wo*Cout)

    # ---- residual add + final ReLU ------------------------------------------
    b34 = bias_ref[:, w_cmid + wo_cmid:w_cmid + wo_cmid + wo_cout]
    o_ref[...] = jnp.maximum(z + sk + b34, 0.0)


def residual_bottleneck(x, params, *, stride=1, nb=None):
    """x: (B, H, W, Cin) float32 NHWC.  Returns (B, Ho, Wo, Cout) float32."""
    assert stride in (1, 2), "only stride 1 and 2 are supported (as in the module)"
    B, H, W, Cin = x.shape
    Cmid = params["w1"].shape[1]
    Cout = params["w3"].shape[1]
    Ho = (H + 2 - 3) // stride + 1
    Wo = (W + 2 - 3) // stride + 1
    if nb is None:
        nb = 2 if B % 2 == 0 else 1
    assert B % nb == 0

    eps = 1e-5
    f32, bf16 = jnp.float32, jnp.bfloat16

    # ---- fold BN (inference mode) into conv weights / biases ----------------
    def fold(g, beta, m, v):
        s = g / jnp.sqrt(v + eps)
        return s, beta - m * s

    s1, b1 = fold(params["g1"], params["be1"], params["m1"], params["v1"])
    s2, b2 = fold(params["g2"], params["be2"], params["m2"], params["v2"])
    s3, b3 = fold(params["g3"], params["be3"], params["m3"], params["v3"])

    w1f = params["w1"] * s1[None, :]                # (Cin, Cmid)
    w2f = params["w2"] * s2[None, None, None, :]    # (3, 3, Cmid, Cmid)
    w3f = params["w3"] * s3[None, :]                # (Cmid, Cout)

    if stride == 2:
        wsk, bsk = params["wd"], params["bd"]       # down_skip_connection
    else:
        # `x.size() is not out.size()` is always True -> dim_equalizer always runs.
        wsk, bsk = params["weq"], params["beq"]     # dim_equalizer

    # ---- build lane-dense "slab space" matrices in the wrapper --------------
    k1 = jnp.kron(jnp.asarray(np.eye(W, dtype=np.float32)), w1f)        # (W*Cin, W*Cmid)
    k3 = jnp.kron(jnp.asarray(np.eye(Wo, dtype=np.float32)), w3f)       # (Wo*Cmid, Wo*Cout)

    # banded matrices for the 3x3 conv's W dimension (one per kernel row a)
    g_mats = []
    for a in range(3):
        g_a = jnp.zeros((W * Cmid, Wo * Cmid), f32)
        for b in range(3):
            t = np.zeros((W, Wo), np.float32)
            for j in range(Wo):
                wcol = stride * j + b - 1           # input W column for tap b
                if 0 <= wcol < W:
                    t[wcol, j] = 1.0
            g_a = g_a + jnp.kron(jnp.asarray(t), w2f[a, b])
        g_mats.append(g_a)
    g_stack = jnp.stack(g_mats, axis=0)                                  # (3, W*Cmid, Wo*Cmid)

    # skip 1x1 conv: column selection (stride, no padding) kron'd with weights
    t_skip = np.zeros((W, Wo), np.float32)
    for j in range(Wo):
        t_skip[stride * j, j] = 1.0
    k_skip = jnp.kron(jnp.asarray(t_skip), wsk)                          # (W*Cin, Wo*Cout)

    # row-gather matrices A_a (H offset a-1, stride), block-diag over NB images
    a_mats = np.zeros((3, nb * Ho, nb * H), np.float32)
    for a in range(3):
        for i in range(Ho):
            p = stride * i + a - 1
            if 0 <= p < H:
                for n in range(nb):
                    a_mats[a, n * Ho + i, n * H + p] = 1.0
    a_stack = jnp.asarray(a_mats)

    # packed per-lane biases: [ b1 slab | b2 slab | b3 slab + skip-bias slab ]
    bias_packed = jnp.concatenate([
        jnp.tile(b1, W),
        jnp.tile(b2, Wo),
        jnp.tile(b3, Wo) + jnp.tile(bsk, Wo),
    ]).reshape(1, -1).astype(f32)
    lb = W * Cmid + Wo * Cmid + Wo * Cout

    # MXU operands in bf16 (f32 accumulation happens in the kernel)
    k1, g_stack, k3, k_skip, a_stack = (m.astype(bf16)
                                        for m in (k1, g_stack, k3, k_skip, a_stack))

    # lane-dense input / output slabs (contiguous reshapes, free outside the kernel)
    x2 = x.reshape(B * H, W * Cin)

    kernel = functools.partial(_rb_kernel, w_cmid=W * Cmid,
                               wo_cmid=Wo * Cmid, wo_cout=Wo * Cout)

    grid_spec = pltpu.PrefetchScalarGridSpec(
        num_scalar_prefetch=0,
        grid=(B // nb,),
        in_specs=[
            pl.BlockSpec((nb * H, W * Cin), lambda i: (i, 0)),           # x slab
            pl.BlockSpec((3, nb * Ho, nb * H), lambda i: (0, 0, 0)),     # A row-gather
            pl.BlockSpec((W * Cin, W * Cmid), lambda i: (0, 0)),         # K1
            pl.BlockSpec((3, W * Cmid, Wo * Cmid), lambda i: (0, 0, 0)), # G (3x3 conv)
            pl.BlockSpec((Wo * Cmid, Wo * Cout), lambda i: (0, 0)),      # K3
            pl.BlockSpec((W * Cin, Wo * Cout), lambda i: (0, 0)),        # K_skip
            pl.BlockSpec((1, lb), lambda i: (0, 0)),                     # packed biases
        ],
        out_specs=pl.BlockSpec((nb * Ho, Wo * Cout), lambda i: (i, 0)),
    )

    out2 = pl.pallas_call(
        kernel,
        out_shape=jax.ShapeDtypeStruct((B * Ho, Wo * Cout), f32),
        grid_spec=grid_spec,
        compiler_params=pltpu.CompilerParams(
            dimension_semantics=("parallel",)),                          # v7x: 2 TCs
    )(x2, a_stack, k1, g_stack, k3, k_skip, bias_packed)

    return out2.reshape(B, Ho, Wo, Cout)


def make_params(key, cin, cmid, cout):
    """Deterministic synthetic parameters (conv weights + raw BN statistics)."""
    ks = jax.random.split(key, 19)

    def nrm(k, shape, scale):
        return scale * jax.random.normal(k, shape, jnp.float32)

    p = dict(
        w1=nrm(ks[0], (cin, cmid), 0.1),
        w2=nrm(ks[1], (3, 3, cmid, cmid), 0.1),
        w3=nrm(ks[2], (cmid, cout), 0.1),
        wd=nrm(ks[3], (cin, cout), 0.1),   bd=nrm(ks[4], (cout,), 0.1),
        weq=nrm(ks[5], (cin, cout), 0.1),  beq=nrm(ks[6], (cout,), 0.1),
    )
    idx = 7
    for name, c in (("1", cmid), ("2", cmid), ("3", cout)):
        p["g" + name] = 1.0 + 0.1 * jax.random.normal(ks[idx], (c,), jnp.float32)
        p["be" + name] = 0.1 * jax.random.normal(ks[idx + 1], (c,), jnp.float32)
        p["m" + name] = 0.05 * jax.random.normal(ks[idx + 2], (c,), jnp.float32)
        p["v" + name] = 1.0 + 0.1 * jax.random.uniform(ks[idx + 3], (c,), jnp.float32)
        idx += 4
    return p


def reference(x, p, stride):
    """Pure-JAX NHWC reference of the same forward pass (inference-mode BN)."""
    eps = 1e-5

    def bn(h, g, b, m, v):
        return (h - m) / jnp.sqrt(v + eps) * g + b

    h = jnp.einsum("bhwc,cd->bhwd", x, p["w1"])
    h = jax.nn.relu(bn(h, p["g1"], p["be1"], p["m1"], p["v1"]))
    h = lax.conv_general_dilated(h, p["w2"], (stride, stride), ((1, 1), (1, 1)),
                                 dimension_numbers=("NHWC", "HWIO", "NHWC"))
    h = jax.nn.relu(bn(h, p["g2"], p["be2"], p["m2"], p["v2"]))
    h = jnp.einsum("bhwc,cd->bhwd", h, p["w3"])
    h = bn(h, p["g3"], p["be3"], p["m3"], p["v3"])
    if stride == 2:
        skip = jnp.einsum("bhwc,cd->bhwd", x[:, ::2, ::2, :], p["wd"]) + p["bd"]
    else:
        # replicate `x.size() is not out.size()` == True -> dim_equalizer always
        skip = jnp.einsum("bhwc,cd->bhwd", x, p["weq"]) + p["beq"]
    return jax.nn.relu(h + skip)


if __name__ == "__main__":
    key = jax.random.PRNGKey(0)
    kx, kp = jax.random.split(key)

    B, H, W = 4, 16, 16
    Cin, Cmid, Cout = 16, 32, 32     # in_channels, inner_channels, out_channels

    x = jax.random.normal(kx, (B, H, W, Cin), jnp.float32)
    params = make_params(kp, Cin, Cmid, Cout)

    for stride in (1, 2):            # exercises both forward branches (dim_eq / down_skip)
        out = residual_bottleneck(x, params, stride=stride, nb=2)
        out = jax.block_until_ready(out)
        ref = reference(x, params, stride)
        assert out.shape == ref.shape, (stride, out.shape, ref.shape)
        err = float(jnp.max(jnp.abs(out - ref)))
        assert jnp.allclose(out, ref, rtol=5e-2, atol=5e-2), \
            f"stride={stride}: max abs err {err}"

    print("KERNEL_OK")
</pallas_src>

<mosaic_0001>
module attributes {stable_mosaic.version = 11 : i64} {
  func.func @_rb_kernel(%arg0: i32, %arg1: memref<32x256xf32, #tpu.memory_space<vmem>>, %arg2: memref<3x32x32xbf16, #tpu.memory_space<vmem>>, %arg3: memref<256x512xbf16, #tpu.memory_space<vmem>>, %arg4: memref<3x512x512xbf16, #tpu.memory_space<vmem>>, %arg5: memref<512x512xbf16, #tpu.memory_space<vmem>>, %arg6: memref<256x512xbf16, #tpu.memory_space<vmem>>, %arg7: memref<1x1536xf32, #tpu.memory_space<vmem>>, %arg8: memref<32x512xf32, #tpu.memory_space<vmem>>) attributes {dimension_semantics = [#tpu.dimension_semantics<parallel>], iteration_bounds = array<i64: 2>, scalar_prefetch = 0 : i64, scratch_operands = 0 : i64, tpu.core_type = #tpu.core_type<tc>, window_params = [{transform_indices = @transform_0, window_bounds = array<i64: 32, 256>}, {pipeline_mode = #tpu.pipeline_mode<synchronous>, transform_indices = @transform_1, window_bounds = array<i64: 3, 32, 32>}, {pipeline_mode = #tpu.pipeline_mode<synchronous>, transform_indices = @transform_2, window_bounds = array<i64: 256, 512>}, {pipeline_mode = #tpu.pipeline_mode<synchronous>, transform_indices = @transform_3, window_bounds = array<i64: 3, 512, 512>}, {pipeline_mode = #tpu.pipeline_mode<synchronous>, transform_indices = @transform_4, window_bounds = array<i64: 512, 512>}, {pipeline_mode = #tpu.pipeline_mode<synchronous>, transform_indices = @transform_5, window_bounds = array<i64: 256, 512>}, {pipeline_mode = #tpu.pipeline_mode<synchronous>, transform_indices = @transform_6, window_bounds = array<i64: 1, 1536>}, {transform_indices = @transform_7, window_bounds = array<i64: 32, 512>}]} {
    %c0 = arith.constant 0 : index
    %c0_0 = arith.constant 0 : index
    %0 = vector.load %arg1[%c0, %c0_0] : memref<32x256xf32, #tpu.memory_space<vmem>>, vector<32x256xf32>
    %1 = arith.truncf %0 : vector<32x256xf32> to vector<32x256xbf16>
    %c0_1 = arith.constant 0 : index
    %c0_2 = arith.constant 0 : index
    %2 = vector.load %arg7[%c0_1, %c0_2] : memref<1x1536xf32, #tpu.memory_space<vmem>>, vector<1x512xf32>
    %c0_3 = arith.constant 0 : index
    %c0_4 = arith.constant 0 : index
    %3 = vector.load %arg3[%c0_3, %c0_4] : memref<256x512xbf16, #tpu.memory_space<vmem>>, vector<256x512xbf16>
    %cst = arith.constant dense<0.000000e+00> : vector<32x512xf32>
    %4 = tpu.matmul %1, %3, %cst {dimension_numbers = #tpu.dot_dimension_numbers<[1], [0], [0], [1], [0, 0, 1, 1], [], []>} : vector<32x256xbf16>, vector<256x512xbf16>, vector<32x512xf32> -> vector<32x512xf32>
    %5 = vector.broadcast %2 : vector<1x512xf32> to vector<32x512xf32>
    %6 = arith.addf %4, %5 : vector<32x512xf32>
    %cst_5 = arith.constant 0.000000e+00 : f32
    %7 = vector.broadcast %cst_5 : f32 to vector<32x512xf32>
    %8 = arith.maximumf %6, %7 : vector<32x512xf32>
    %9 = arith.truncf %8 : vector<32x512xf32> to vector<32x512xbf16>
    %c0_6 = arith.constant 0 : index
    %c512 = arith.constant 512 : index
    %10 = vector.load %arg7[%c0_6, %c512] : memref<1x1536xf32, #tpu.memory_space<vmem>>, vector<1x512xf32>
    %c0_7 = arith.constant 0 : index
    %c0_8 = arith.constant 0 : index
    %c0_9 = arith.constant 0 : index
    %11 = vector.load %arg2[%c0_7, %c0_8, %c0_9] : memref<3x32x32xbf16, #tpu.memory_space<vmem>>, vector<1x32x32xbf16>
    %12 = vector.shape_cast %11 : vector<1x32x32xbf16> to vector<32x32xbf16>
    %cst_10 = arith.constant dense<0.000000e+00> : vector<32x512xf32>
    %13 = tpu.matmul %12, %9, %cst_10 {dimension_numbers = #tpu.dot_dimension_numbers<[1], [0], [0], [1], [0, 0, 1, 1], [], []>} : vector<32x32xbf16>, vector<32x512xbf16>, vector<32x512xf32> -> vector<32x512xf32>
    %14 = arith.truncf %13 : vector<32x512xf32> to vector<32x512xbf16>
    %c0_11 = arith.constant 0 : index
    %c0_12 = arith.constant 0 : index
    %c0_13 = arith.constant 0 : index
    %15 = vector.load %arg4[%c0_11, %c0_12, %c0_13] : memref<3x512x512xbf16, #tpu.memory_space<vmem>>, vector<1x512x512xbf16>
    %16 = vector.shape_cast %15 : vector<1x512x512xbf16> to vector<512x512xbf16>
    %cst_14 = arith.constant dense<0.000000e+00> : vector<32x512xf32>
    %17 = tpu.matmul %14, %16, %cst_14 {dimension_numbers = #tpu.dot_dimension_numbers<[1], [0], [0], [1], [0, 0, 1, 1], [], []>} : vector<32x512xbf16>, vector<512x512xbf16>, vector<32x512xf32> -> vector<32x512xf32>
    %c1 = arith.constant 1 : index
    %c0_15 = arith.constant 0 : index
    %c0_16 = arith.constant 0 : index
    %18 = vector.load %arg2[%c1, %c0_15, %c0_16] : memref<3x32x32xbf16, #tpu.memory_space<vmem>>, vector<1x32x32xbf16>
    %19 = vector.shape_cast %18 : vector<1x32x32xbf16> to vector<32x32xbf16>
    %cst_17 = arith.constant dense<0.000000e+00> : vector<32x512xf32>
    %20 = tpu.matmul %19, %9, %cst_17 {dimension_numbers = #tpu.dot_dimension_numbers<[1], [0], [0], [1], [0, 0, 1, 1], [], []>} : vector<32x32xbf16>, vector<32x512xbf16>, vector<32x512xf32> -> vector<32x512xf32>
    %21 = arith.truncf %20 : vector<32x512xf32> to vector<32x512xbf16>
    %c1_18 = arith.constant 1 : index
    %c0_19 = arith.constant 0 : index
    %c0_20 = arith.constant 0 : index
    %22 = vector.load %arg4[%c1_18, %c0_19, %c0_20] : memref<3x512x512xbf16, #tpu.memory_space<vmem>>, vector<1x512x512xbf16>
    %23 = vector.shape_cast %22 : vector<1x512x512xbf16> to vector<512x512xbf16>
    %cst_21 = arith.constant dense<0.000000e+00> : vector<32x512xf32>
    %24 = tpu.matmul %21, %23, %cst_21 {dimension_numbers = #tpu.dot_dimension_numbers<[1], [0], [0], [1], [0, 0, 1, 1], [], []>} : vector<32x512xbf16>, vector<512x512xbf16>, vector<32x512xf32> -> vector<32x512xf32>
    %25 = arith.addf %17, %24 : vector<32x512xf32>
    %c2 = arith.constant 2 : index
    %c0_22 = arith.constant 0 : index
    %c0_23 = arith.constant 0 : index
    %26 = vector.load %arg2[%c2, %c0_22, %c0_23] : memref<3x32x32xbf16, #tpu.memory_space<vmem>>, vector<1x32x32xbf16>
    %27 = vector.shape_cast %26 : vector<1x32x32xbf16> to vector<32x32xbf16>
    %cst_24 = arith.constant dense<0.000000e+00> : vector<32x512xf32>
    %28 = tpu.matmul %27, %9, %cst_24 {dimension_numbers = #tpu.dot_dimension_numbers<[1], [0], [0], [1], [0, 0, 1, 1], [], []>} : vector<32x32xbf16>, vector<32x512xbf16>, vector<32x512xf32> -> vector<32x512xf32>
    %29 = arith.truncf %28 : vector<32x512xf32> to vector<32x512xbf16>
    %c2_25 = arith.constant 2 : index
    %c0_26 = arith.constant 0 : index
    %c0_27 = arith.constant 0 : index
    %30 = vector.load %arg4[%c2_25, %c0_26, %c0_27] : memref<3x512x512xbf16, #tpu.memory_space<vmem>>, vector<1x512x512xbf16>
    %31 = vector.shape_cast %30 : vector<1x512x512xbf16> to vector<512x512xbf16>
    %cst_28 = arith.constant dense<0.000000e+00> : vector<32x512xf32>
    %32 = tpu.matmul %29, %31, %cst_28 {dimension_numbers = #tpu.dot_dimension_numbers<[1], [0], [0], [1], [0, 0, 1, 1], [], []>} : vector<32x512xbf16>, vector<512x512xbf16>, vector<32x512xf32> -> vector<32x512xf32>
    %33 = arith.addf %25, %32 : vector<32x512xf32>
    %34 = vector.broadcast %10 : vector<1x512xf32> to vector<32x512xf32>
    %35 = arith.addf %33, %34 : vector<32x512xf32>
    %cst_29 = arith.constant 0.000000e+00 : f32
    %36 = vector.broadcast %cst_29 : f32 to vector<32x512xf32>
    %37 = arith.maximumf %35, %36 : vector<32x512xf32>
    %38 = arith.truncf %37 : vector<32x512xf32> to vector<32x512xbf16>
    %c0_30 = arith.constant 0 : index
    %c0_31 = arith.constant 0 : index
    %39 = vector.load %arg5[%c0_30, %c0_31] : memref<512x512xbf16, #tpu.memory_space<vmem>>, vector<512x512xbf16>
    %cst_32 = arith.constant dense<0.000000e+00> : vector<32x512xf32>
    %40 = tpu.matmul %38, %39, %cst_32 {dimension_numbers = #tpu.dot_dimension_numbers<[1], [0], [0], [1], [0, 0, 1, 1], [], []>} : vector<32x512xbf16>, vector<512x512xbf16>, vector<32x512xf32> -> vector<32x512xf32>
    %c1_33 = arith.constant 1 : index
    %c0_34 = arith.constant 0 : index
    %c0_35 = arith.constant 0 : index
    %41 = vector.load %arg2[%c1_33, %c0_34, %c0_35] : memref<3x32x32xbf16, #tpu.memory_space<vmem>>, vector<1x32x32xbf16>
    %42 = vector.shape_cast %41 : vector<1x32x32xbf16> to vector<32x32xbf16>
    %cst_36 = arith.constant dense<0.000000e+00> : vector<32x256xf32>
    %43 = tpu.matmul %42, %1, %cst_36 {dimension_numbers = #tpu.dot_dimension_numbers<[1], [0], [0], [1], [0, 0, 1, 1], [], []>} : vector<32x32xbf16>, vector<32x256xbf16>, vector<32x256xf32> -> vector<32x256xf32>
    %44 = arith.truncf %43 : vector<32x256xf32> to vector<32x256xbf16>
    %c0_37 = arith.constant 0 : index
    %c0_38 = arith.constant 0 : index
    %45 = vector.load %arg6[%c0_37, %c0_38] : memref<256x512xbf16, #tpu.memory_space<vmem>>, vector<256x512xbf16>
    %cst_39 = arith.constant dense<0.000000e+00> : vector<32x512xf32>
    %46 = tpu.matmul %44, %45, %cst_39 {dimension_numbers = #tpu.dot_dimension_numbers<[1], [0], [0], [1], [0, 0, 1, 1], [], []>} : vector<32x256xbf16>, vector<256x512xbf16>, vector<32x512xf32> -> vector<32x512xf32>
    %c0_40 = arith.constant 0 : index
    %c1024 = arith.constant 1024 : index
    %47 = vector.load %arg7[%c0_40, %c1024] : memref<1x1536xf32, #tpu.memory_space<vmem>>, vector<1x512xf32>
    %48 = arith.addf %40, %46 : vector<32x512xf32>
    %49 = vector.broadcast %47 : vector<1x512xf32> to vector<32x512xf32>
    %50 = arith.addf %48, %49 : vector<32x512xf32>
    %cst_41 = arith.constant 0.000000e+00 : f32
    %51 = vector.broadcast %cst_41 : f32 to vector<32x512xf32>
    %52 = arith.maximumf %50, %51 : vector<32x512xf32>
    %c0_42 = arith.constant 0 : index
    %c0_43 = arith.constant 0 : index
    %53 = vector.load %arg8[%c0_42, %c0_43] : memref<32x512xf32, #tpu.memory_space<vmem>>, vector<32x512xf32>
    tpu.vector_store %arg8[%c0_42, %c0_43], %52 {strides = array<i32>} : memref<32x512xf32, #tpu.memory_space<vmem>>, vector<32x512xf32>,
    return
  }
  func.func @transform_0(%arg0: i32) -> (i32, i32) {
    %c0_i32 = arith.constant 0 : i32
    %c0_i32_0 = arith.constant 0 : i32
    return %arg0, %c0_i32 : i32, i32
  }
  func.func @transform_1(%arg0: i32) -> (i32, i32, i32) {
    %c0_i32 = arith.constant 0 : i32
    %c0_i32_0 = arith.constant 0 : i32
    %c0_i32_1 = arith.constant 0 : i32
    %c0_i32_2 = arith.constant 0 : i32
    return %c0_i32, %c0_i32_0, %c0_i32_1 : i32, i32, i32
  }
  func.func @transform_2(%arg0: i32) -> (i32, i32) {
    %c0_i32 = arith.constant 0 : i32
    %c0_i32_0 = arith.constant 0 : i32
    %c0_i32_1 = arith.constant 0 : i32
    return %c0_i32, %c0_i32_0 : i32, i32
  }
  func.func @transform_3(%arg0: i32) -> (i32, i32, i32) {
    %c0_i32 = arith.constant 0 : i32
    %c0_i32_0 = arith.constant 0 : i32
    %c0_i32_1 = arith.constant 0 : i32
    %c0_i32_2 = arith.constant 0 : i32
    return %c0_i32, %c0_i32_0, %c0_i32_1 : i32, i32, i32
  }
  func.func @transform_4(%arg0: i32) -> (i32, i32) {
    %c0_i32 = arith.constant 0 : i32
    %c0_i32_0 = arith.constant 0 : i32
    %c0_i32_1 = arith.constant 0 : i32
    return %c0_i32, %c0_i32_0 : i32, i32
  }
  func.func @transform_5(%arg0: i32) -> (i32, i32) {
    %c0_i32 = arith.constant 0 : i32
    %c0_i32_0 = arith.constant 0 : i32
    %c0_i32_1 = arith.constant 0 : i32
    return %c0_i32, %c0_i32_0 : i32, i32
  }
  func.func @transform_6(%arg0: i32) -> (i32, i32) {
    %c0_i32 = arith.constant 0 : i32
    %c0_i32_0 = arith.constant 0 : i32
    %c0_i32_1 = arith.constant 0 : i32
    return %c0_i32, %c0_i32_0 : i32, i32
  }
  func.func @transform_7(%arg0: i32) -> (i32, i32) {
    %c0_i32 = arith.constant 0 : i32
    %c0_i32_0 = arith.constant 0 : i32
    return %arg0, %c0_i32 : i32, i32
  }
}

</mosaic_0001>

<llo_original>
// kernel: tpu_custom_call.1
$region0: #{tpu_custom_call.1}
  #allocation0 [shape = 'u32[]', space=smem, size = 0x4, offset = 0x4, fixed_abs, tag = 'smem constant byte address 0x4 - core index']
  #allocation1 [shape = 'u32[144,128]{1,0:T(1,128)}', space=vmem, size = 0x12000, scoped, tag = 'internal scratch']
  %s0 = inlined_call_operand.hbm [shape: f32[64,256], index: 0, kind: input, shape index: {}]
  %s1 = inlined_call_operand.hbm [shape: bf16[3,32,32], index: 1, kind: input, shape index: {}]
  %s2 = inlined_call_operand.hbm [shape: bf16[256,512], index: 2, kind: input, shape index: {}]
  %s3 = inlined_call_operand.hbm [shape: bf16[3,512,512], index: 3, kind: input, shape index: {}]
  %s4 = inlined_call_operand.hbm [shape: bf16[512,512], index: 4, kind: input, shape index: {}]
  %s5 = inlined_call_operand.hbm [shape: bf16[256,512], index: 5, kind: input, shape index: {}]
  %s6 = inlined_call_operand.hbm [shape: f32[1,1536], index: 6, kind: input, shape index: {}]
  %s7 = inlined_call_operand.hbm [shape: f32[64,512], index: 7, kind: output, shape index: {}]
  %s8 = sld [smem:[#allocation0]]
  $region89: #{tpu_custom_call.1} parent=0
    _
  %s10 = ssub.s32 1, %s8
  %s11 = scalar_select 0, %s10, %s8
  $region1: #{tpu_custom_call.1} parent=0
    #allocation2 [shape = 'u8[65536]{0}', space=vmem, size = 0x10000, scoped, tag = 'input window, operand 0']
    #allocation3 [shape = 's32[2]{0}', space=sflag, size = 0x8, scoped, tag = 'scoped memory for tpu_custom_call.1']
    #allocation4 [shape = 's32[2]{0}', space=sflag, size = 0x8, scoped, tag = 'scoped memory for tpu_custom_call.1']
    #allocation5 [shape = 'u8[24576]{0}', space=vmem, size = 0x6000, scoped, tag = 'input window, operand 1, single buffered']
    #allocation6 [shape = 's32[1]{0}', space=sflag, size = 0x4, scoped, tag = 'scoped memory for tpu_custom_call.1']
    #allocation7 [shape = 'u8[262144]{0}', space=vmem, size = 0x40000, scoped, tag = 'input window, operand 2, single buffered']
    #allocation8 [shape = 'u8[1572864]{0}', space=vmem, size = 0x180000, scoped, tag = 'input window, operand 3, single buffered']
    #allocation9 [shape = 's32[1]{0}', space=sflag, size = 0x4, scoped, tag = 'scoped memory for tpu_custom_call.1']
    #allocation10 [shape = 'u8[524288]{0}', space=vmem, size = 0x80000, scoped, tag = 'input window, operand 4, single buffered']
    #allocation11 [shape = 'u8[262144]{0}', space=vmem, size = 0x40000, scoped, tag = 'input window, operand 5, single buffered']
    #allocation12 [shape = 's32[1]{0}', space=sflag, size = 0x4, scoped, tag = 'scoped memory for tpu_custom_call.1']
    #allocation13 [shape = 'u8[6144]{0}', space=vmem, size = 0x1800, scoped, tag = 'input window, operand 6, single buffered']
    #allocation14 [shape = 'u8[131072]{0}', space=vmem, size = 0x20000, scoped, tag = 'output window, operand 0']
    %12 = vsyncpa [#allocation3], 0
    %s13 = scalar_lea.sflag [#allocation3], 1
    %14 = vsyncpa %s13, 0
    %15 = vsyncpa [#allocation6], 0
    %16 = vsyncpa [#allocation9], 0
    %17 = vsyncpa [#allocation12], 0
    %18 = vsyncpa [#allocation4], 0
    %s19 = scalar_lea.sflag [#allocation4], 1
    %20 = vsyncpa %s19, 0
    loop: start=0, step=1, limit=4
    $region2: #{tpu_custom_call.1} parent=1 // loop_pre_header
      _
    $region3: #{tpu_custom_call.1} parent=1 // loop_header
      %s22 = sphi 0, %s26
      %p23 = scmp.ge.s32.totalorder %s22, 4
      %s32 = sphi 0, %s34
      %s35 = sphi 0, %s32
      %s36 = sphi 0, %s35
      %s52 = sphi 0, %s36
      %s56 = sphi 0, %s56
      %s58 = sphi 0, %s56
      %s59 = sphi 0, %s58
      %s73 = sphi 0, %s59
      %s77 = sphi 0, %s77
      %s79 = sphi 0, %s77
      %s80 = sphi 0, %s79
      %s94 = sphi 0, %s80
      %s98 = sphi 0, %s98
      %s100 = sphi 0, %s98
      %s101 = sphi 0, %s100
      %s115 = sphi 0, %s101
      %s119 = sphi 0, %s119
      %s121 = sphi 0, %s119
      %s122 = sphi 0, %s121
      %s136 = sphi 0, %s122
      %s140 = sphi 0, %s140
      %s142 = sphi 0, %s140
      %s143 = sphi 0, %s142
      %s157 = sphi 0, %s143
      %s161 = sphi 0, %s161
      %s163 = sphi 0, %s161
      %s164 = sphi 0, %s163
      %s178 = sphi 0, %s164
      %s184 = sphi 0, %s186
      %s187 = sphi 0, %s184
      %s188 = sphi 0, %s187
      %s204 = sphi 0, %s188
    $region4: #{tpu_custom_call.1} parent=1 // loop_header_branch
      %25 = sbr.rel (%p23) target = $region8
    $region5: #{tpu_custom_call.1} parent=1 // loop_body
      %s27 = ssub.s32 %s22, 1
      %s28 = ssub.s32 %s22, 2
      %s29 = sadd.s32 %s22, 1
      %s30 = ssub.s32 %s22, %s29
      %p31 = scmp.eq.s32.totalorder %s30, 0
      %s33 = sadd.s32 %s32, 1
      %s34 = scalar_select %p31, %s32, %s33
      %p37 = pneg %p31
      %p38 = scmp.eq.s32.totalorder %s22, 1
      %p39 = por %p37, %p38
      %p40 = scmp.ne.s32.totalorder %s32, %s35
      %p41 = scmp.eq.s32.totalorder %s22, 0
      %p42 = por %p40, %p41
      %p43 = scmp.ne.s32.totalorder %s32, %s35
      %p44 = scmp.eq.s32.totalorder %s27, 1
      %p45 = por %p43, %p44
      %p46 = scmp.ne.s32.totalorder %s35, %s36
      %p47 = scmp.eq.s32.totalorder %s27, 0
      %p48 = por %p46, %p47
      %p49 = scmp.ne.s32.totalorder %s35, %s36
      %p50 = scmp.eq.s32.totalorder %s28, 1
      %p51 = por %p49, %p50
      %p53 = scmp.ne.s32.totalorder %s36, %s52
      %p54 = scmp.eq.s32.totalorder %s28, 0
      %p55 = por %p53, %p54
      %s57 = sadd.s32 %s56, 1
      %p60 = scmp.eq.s32.totalorder %s22, 1
      %p61 = scmp.ne.s32.totalorder %s56, %s58
      %p62 = scmp.eq.s32.totalorder %s22, 0
      %p63 = por %p61, %p62
      %p64 = scmp.ne.s32.totalorder %s56, %s58
      %p65 = scmp.eq.s32.totalorder %s27, 1
      %p66 = por %p64, %p65
      %p67 = scmp.ne.s32.totalorder %s58, %s59
      %p68 = scmp.eq.s32.totalorder %s27, 0
      %p69 = por %p67, %p68
      %p70 = scmp.ne.s32.totalorder %s58, %s59
      %p71 = scmp.eq.s32.totalorder %s28, 1
      %p72 = por %p70, %p71
      %p74 = scmp.ne.s32.totalorder %s59, %s73
      %p75 = scmp.eq.s32.totalorder %s28, 0
      %p76 = por %p74, %p75
      %s78 = sadd.s32 %s77, 1
      %p81 = scmp.eq.s32.totalorder %s22, 1
      %p82 = scmp.ne.s32.totalorder %s77, %s79
      %p83 = scmp.eq.s32.totalorder %s22, 0
      %p84 = por %p82, %p83
      %p85 = scmp.ne.s32.totalorder %s77, %s79
      %p86 = scmp.eq.s32.totalorder %s27, 1
      %p87 = por %p85, %p86
      %p88 = scmp.ne.s32.totalorder %s79, %s80
      %p89 = scmp.eq.s32.totalorder %s27, 0
      %p90 = por %p88, %p89
      %p91 = scmp.ne.s32.totalorder %s79, %s80
      %p92 = scmp.eq.s32.totalorder %s28, 1
      %p93 = por %p91, %p92
      %p95 = scmp.ne.s32.totalorder %s80, %s94
      %p96 = scmp.eq.s32.totalorder %s28, 0
      %p97 = por %p95, %p96
      %s99 = sadd.s32 %s98, 1
      %p102 = scmp.eq.s32.totalorder %s22, 1
      %p103 = scmp.ne.s32.totalorder %s98, %s100
      %p104 = scmp.eq.s32.totalorder %s22, 0
      %p105 = por %p103, %p104
      %p106 = scmp.ne.s32.totalorder %s98, %s100
      %p107 = scmp.eq.s32.totalorder %s27, 1
      %p108 = por %p106, %p107
      %p109 = scmp.ne.s32.totalorder %s100, %s101
      %p110 = scmp.eq.s32.totalorder %s27, 0
      %p111 = por %p109, %p110
      %p112 = scmp.ne.s32.totalorder %s100, %s101
      %p113 = scmp.eq.s32.totalorder %s28, 1
      %p114 = por %p112, %p113
      %p116 = scmp.ne.s32.totalorder %s101, %s115
      %p117 = scmp.eq.s32.totalorder %s28, 0
      %p118 = por %p116, %p117
      %s120 = sadd.s32 %s119, 1
      %p123 = scmp.eq.s32.totalorder %s22, 1
      %p124 = scmp.ne.s32.totalorder %s119, %s121
      %p125 = scmp.eq.s32.totalorder %s22, 0
      %p126 = por %p124, %p125
      %p127 = scmp.ne.s32.totalorder %s119, %s121
      %p128 = scmp.eq.s32.totalorder %s27, 1
      %p129 = por %p127, %p128
      %p130 = scmp.ne.s32.totalorder %s121, %s122
      %p131 = scmp.eq.s32.totalorder %s27, 0
      %p132 = por %p130, %p131
      %p133 = scmp.ne.s32.totalorder %s121, %s122
      %p134 = scmp.eq.s32.totalorder %s28, 1
      %p135 = por %p133, %p134
      %p137 = scmp.ne.s32.totalorder %s122, %s136
      %p138 = scmp.eq.s32.totalorder %s28, 0
      %p139 = por %p137, %p138
      %s141 = sadd.s32 %s140, 1
      %p144 = scmp.eq.s32.totalorder %s22, 1
      %p145 = scmp.ne.s32.totalorder %s140, %s142
      %p146 = scmp.eq.s32.totalorder %s22, 0
      %p147 = por %p145, %p146
      %p148 = scmp.ne.s32.totalorder %s140, %s142
      %p149 = scmp.eq.s32.totalorder %s27, 1
      %p150 = por %p148, %p149
      %p151 = scmp.ne.s32.totalorder %s142, %s143
      %p152 = scmp.eq.s32.totalorder %s27, 0
      %p153 = por %p151, %p152
      %p154 = scmp.ne.s32.totalorder %s142, %s143
      %p155 = scmp.eq.s32.totalorder %s28, 1
      %p156 = por %p154, %p155
      %p158 = scmp.ne.s32.totalorder %s143, %s157
      %p159 = scmp.eq.s32.totalorder %s28, 0
      %p160 = por %p158, %p159
      %s162 = sadd.s32 %s161, 1
      %p165 = scmp.eq.s32.totalorder %s22, 1
      %p166 = scmp.ne.s32.totalorder %s161, %s163
      %p167 = scmp.eq.s32.totalorder %s22, 0
      %p168 = por %p166, %p167
      %p169 = scmp.ne.s32.totalorder %s161, %s163
      %p170 = scmp.eq.s32.totalorder %s27, 1
      %p171 = por %p169, %p170
      %p172 = scmp.ne.s32.totalorder %s163, %s164
      %p173 = scmp.eq.s32.totalorder %s27, 0
      %p174 = por %p172, %p173
      %p175 = scmp.ne.s32.totalorder %s163, %s164
      %p176 = scmp.eq.s32.totalorder %s28, 1
      %p177 = por %p175, %p176
      %p179 = scmp.ne.s32.totalorder %s164, %s178
      %p180 = scmp.eq.s32.totalorder %s28, 0
      %p181 = por %p179, %p180
      %s182 = ssub.s32 %s22, %s29
      %p183 = scmp.eq.s32.totalorder %s182, 0
      %s185 = sadd.s32 %s184, 1
      %s186 = scalar_select %p183, %s184, %s185
      %p189 = pneg %p183
      %p190 = scmp.eq.s32.totalorder %s22, 1
      %p191 = por %p189, %p190
      %p192 = scmp.ne.s32.totalorder %s184, %s187
      %p193 = scmp.eq.s32.totalorder %s22, 0
      %p194 = por %p192, %p193
      %p195 = scmp.ne.s32.totalorder %s184, %s187
      %p196 = scmp.eq.s32.totalorder %s27, 1
      %p197 = por %p195, %p196
      %p198 = scmp.ne.s32.totalorder %s187, %s188
      %p199 = scmp.eq.s32.totalorder %s27, 0
      %p200 = por %p198, %p199
      %p201 = scmp.ne.s32.totalorder %s187, %s188
      %p202 = scmp.eq.s32.totalorder %s28, 1
      %p203 = por %p201, %p202
      %p205 = scmp.ne.s32.totalorder %s188, %s204
      %p206 = scmp.eq.s32.totalorder %s28, 0
      %p207 = por %p205, %p206
      %p208 = scmp.le.s32.totalorder 1, %s22
      %p209 = scmp.lt.s32.totalorder %s22, 3
      %p210 = pnand %p208, %p209
      %p211 = pneg %p210
      // Predicated region
      $region9: #{tpu_custom_call.1} parent=5 // pred_check
        _
      $region10: #{tpu_custom_call.1} parent=5 // pred_check_branch
        %213 = sbr.rel (%p210) target = $region12
      $region11: #{tpu_custom_call.1} parent=5 // pred_region
        %s214 = ssub.s32 %s22, 1
        // Predicated region
        $region13: #{tpu_custom_call.1} parent=11 // pred_check
          %p215 = pneg %p69
        $region14: #{tpu_custom_call.1} parent=11 // pred_check_branch
          %217 = sbr.rel (%p215) target = $region16
        $region15: #{tpu_custom_call.1} parent=11 // pred_region
          %s219 = ssub.s32 768, 768
          %220 = vsyncadd [#allocation6], %s219
          %s221 = sshll.u32 [#allocation5], 4
          %s222 = int_to_ptr.vmem [resolvable:$true] %s221
          %227 = dma.hbm_to_vmem [thread:$0]  %s1, 768, %s222, [#allocation6], 64, 64, 4
        $region16: #{tpu_custom_call.1} parent=11 // pred_fallthru
          _
        // Predicated region
        $region17: #{tpu_custom_call.1} parent=11 // pred_check
          %p228 = pneg %p90
        $region18: #{tpu_custom_call.1} parent=11 // pred_check_branch
          %230 = sbr.rel (%p228) target = $region20
        $region19: #{tpu_custom_call.1} parent=11 // pred_region
          %s232 = ssub.s32 8192, 8192
          %233 = vsyncadd [#allocation6], %s232
          %s234 = sshll.u32 [#allocation7], 4
          %s235 = int_to_ptr.vmem [resolvable:$true] %s234
          %240 = dma.hbm_to_vmem [thread:$0]  %s2, 8192, %s235, [#allocation6], 256, 256, 16
        $region20: #{tpu_custom_call.1} parent=11 // pred_fallthru
          _
        // Predicated region
        $region21: #{tpu_custom_call.1} parent=11 // pred_check
          %p241 = pneg %p111
        $region22: #{tpu_custom_call.1} parent=11 // pred_check_branch
          %243 = sbr.rel (%p241) target = $region24
        $region23: #{tpu_custom_call.1} parent=11 // pred_region
          %s245 = ssub.s32 49152, 49152
          %246 = vsyncadd [#allocation9], %s245
          %s247 = sshll.u32 [#allocation8], 4
          %s248 = int_to_ptr.vmem [resolvable:$true] %s247
          %253 = dma.hbm_to_vmem [thread:$0]  %s3, 49152, %s248, [#allocation9], 256, 256, 16
        $region24: #{tpu_custom_call.1} parent=11 // pred_fallthru
          _
        // Predicated region
        $region25: #{tpu_custom_call.1} parent=11 // pred_check
          %p254 = pneg %p132
        $region26: #{tpu_custom_call.1} parent=11 // pred_check_branch
          %256 = sbr.rel (%p254) target = $region28
        $region27: #{tpu_custom_call.1} parent=11 // pred_region
          %s258 = ssub.s32 16384, 16384
          %259 = vsyncadd [#allocation9], %s258
          %s260 = sshll.u32 [#allocation10], 4
          %s261 = int_to_ptr.vmem [resolvable:$true] %s260
          %266 = dma.hbm_to_vmem [thread:$0]  %s4, 16384, %s261, [#allocation9], 256, 256, 16
        $region28: #{tpu_custom_call.1} parent=11 // pred_fallthru
          _
        // Predicated region
        $region29: #{tpu_custom_call.1} parent=11 // pred_check
          %p267 = pneg %p153
        $region30: #{tpu_custom_call.1} parent=11 // pred_check_branch
          %269 = sbr.rel (%p267) target = $region32
        $region31: #{tpu_custom_call.1} parent=11 // pred_region
          %s271 = ssub.s32 8192, 8192
          %272 = vsyncadd [#allocation12], %s271
          %s273 = sshll.u32 [#allocation11], 4
          %s274 = int_to_ptr.vmem [resolvable:$true] %s273
          %279 = dma.hbm_to_vmem [thread:$0]  %s5, 8192, %s274, [#allocation12], 256, 256, 16
        $region32: #{tpu_custom_call.1} parent=11 // pred_fallthru
          _
        // Predicated region
        $region33: #{tpu_custom_call.1} parent=11 // pred_check
          %p280 = pneg %p174
        $region34: #{tpu_custom_call.1} parent=11 // pred_check_branch
          %282 = sbr.rel (%p280) target = $region36
        $region35: #{tpu_custom_call.1} parent=11 // pred_region
          %s284 = ssub.s32 192, 192
          %285 = vsyncadd [#allocation12], %s284
          %s287 = sshll.u32 [#allocation13], 4
          %s288 = int_to_ptr.vmem [resolvable:$true] %s287
          %290 = dma.hbm_to_vmem [thread:$0]  %s6, 192, %s288, [#allocation12]
        $region36: #{tpu_custom_call.1} parent=11 // pred_fallthru
          _
      $region12: #{tpu_custom_call.1} parent=5 // pred_fallthru
        _
      %p291 = scmp.lt.s32.totalorder %s22, 2
      // Predicated region
      $region37: #{tpu_custom_call.1} parent=5 // pred_check
        %p292 = pneg %p291
      $region38: #{tpu_custom_call.1} parent=5 // pred_check_branch
        %294 = sbr.rel (%p292) target = $region40
      $region39: #{tpu_custom_call.1} parent=5 // pred_region
        // Predicated region
        $region41: #{tpu_custom_call.1} parent=39 // pred_check
          %p295 = pneg %p42
        $region42: #{tpu_custom_call.1} parent=39 // pred_check_branch
          %297 = sbr.rel (%p295) target = $region44
        $region43: #{tpu_custom_call.1} parent=39 // pred_region
          %s298 = sand.u32 %s32, 1
          %s299 = scalar_lea.sflag [#allocation3], %s298
          %s300 = sand.u32 %s32, 1
          %s301 = smul.addr %s300, 64
          %s302 = scalar_lea.vmem [#allocation2], %s301
          %s303 = smul.u32 4, %s22
          %s305 = ssub.s32 1024, 1024
          %306 = vsyncadd %s299, %s305
          %s307 = smul.addr %s303, 2
          %s308 = smul.addr %s307, 128
          %s309 = scalar_lea.hbm %s0, %s308
          %s310 = sshll.u32 %s302, 4
          %s311 = int_to_ptr.vmem [resolvable:$true] %s310
          %316 = dma.hbm_to_vmem [thread:$0]  %s309, 1024, %s311, %s299, 256, 256, 16
        $region44: #{tpu_custom_call.1} parent=39 // pred_fallthru
          _
      $region40: #{tpu_custom_call.1} parent=5 // pred_fallthru
        _
      %p317 = scmp.le.s32.totalorder 1, %s22
      %p318 = scmp.lt.s32.totalorder %s22, 3
      %p319 = pnand %p317, %p318
      %p320 = pneg %p319
      // Predicated region
      $region45: #{tpu_custom_call.1} parent=5 // pred_check
        _
      $region46: #{tpu_custom_call.1} parent=5 // pred_check_branch
        %322 = sbr.rel (%p319) target = $region48
      $region47: #{tpu_custom_call.1} parent=5 // pred_region
        %s323 = ssub.s32 %s22, 1
        %s324 = sand.u32 %s35, 1
        %s325 = scalar_lea.sflag [#allocation3], %s324
        %s326 = sand.u32 %s35, 1
        %s327 = smul.addr %s326, 64
        %s328 = scalar_lea.vmem [#allocation2], %s327
        // Predicated region
        $region49: #{tpu_custom_call.1} parent=47 // pred_check
          %p329 = pneg %p48
        $region50: #{tpu_custom_call.1} parent=47 // pred_check_branch
          %331 = sbr.rel (%p329) target = $region52
        $region51: #{tpu_custom_call.1} parent=47 // pred_region
          %332 = dma.done %s325, 1024
        $region52: #{tpu_custom_call.1} parent=47 // pred_fallthru
          _
        // Predicated region
        $region53: #{tpu_custom_call.1} parent=47 // pred_check
          %p333 = pneg %p69
        $region54: #{tpu_custom_call.1} parent=47 // pred_check_branch
          %335 = sbr.rel (%p333) target = $region56
        $region55: #{tpu_custom_call.1} parent=47 // pred_region
          %336 = dma.done [#allocation6], 768
        $region56: #{tpu_custom_call.1} parent=47 // pred_fallthru
          _
        // Predicated region
        $region57: #{tpu_custom_call.1} parent=47 // pred_check
          %p337 = pneg %p90
        $region58: #{tpu_custom_call.1} parent=47 // pred_check_branch
          %339 = sbr.rel (%p337) target = $region60
        $region59: #{tpu_custom_call.1} parent=47 // pred_region
          %340 = dma.done [#allocation6], 8192
        $region60: #{tpu_custom_call.1} parent=47 // pred_fallthru
          _
        // Predicated region
        $region61: #{tpu_custom_call.1} parent=47 // pred_check
          %p341 = pneg %p111
        $region62: #{tpu_custom_call.1} parent=47 // pred_check_branch
          %343 = sbr.rel (%p341) target = $region64
        $region63: #{tpu_custom_call.1} parent=47 // pred_region
          %344 = dma.done [#allocation9], 49152
        $region64: #{tpu_custom_call.1} parent=47 // pred_fallthru
          _
        // Predicated region
        $region65: #{tpu_custom_call.1} parent=47 // pred_check
          %p345 = pneg %p132
        $region66: #{tpu_custom_call.1} parent=47 // pred_check_branch
          %347 = sbr.rel (%p345) target = $region68
        $region67: #{tpu_custom_call.1} parent=47 // pred_region
          %348 = dma.done [#allocation9], 16384
        $region68: #{tpu_custom_call.1} parent=47 // pred_fallthru
          _
        // Predicated region
        $region69: #{tpu_custom_call.1} parent=47 // pred_check
          %p349 = pneg %p153
        $region70: #{tpu_custom_call.1} parent=47 // pred_check_branch
          %351 = sbr.rel (%p349) target = $region72
        $region71: #{tpu_custom_call.1} parent=47 // pred_region
          %352 = dma.done [#allocation12], 8192
        $region72: #{tpu_custom_call.1} parent=47 // pred_fallthru
          _
        // Predicated region
        $region73: #{tpu_custom_call.1} parent=47 // pred_check
          %p353 = pneg %p174
        $region74: #{tpu_custom_call.1} parent=47 // pred_check_branch
          %355 = sbr.rel (%p353) target = $region76
        $region75: #{tpu_custom_call.1} parent=47 // pred_region
          %356 = dma.done [#allocation12], 192
        $region76: #{tpu_custom_call.1} parent=47 // pred_fallthru
          _
        %s357 = sand.u32 %s35, 1
        %s358 = scalar_lea.sflag [#allocation3], %s357
        %s359 = sand.u32 %s35, 1
        %s360 = smul.addr %s359, 64
        %s361 = scalar_lea.vmem [#allocation2], %s360
        %p362 = pneg %p48
        %p363 = pneg %p45
        %p364 = pneg %p69
        %p365 = pneg %p66
        %p366 = pneg %p90
        %p367 = pneg %p87
        %p368 = pneg %p111
        %p369 = pneg %p108
        %p370 = pneg %p132
        %p371 = pneg %p129
        %p372 = pneg %p153
        %p373 = pneg %p150
        %p374 = pneg %p174
        %p375 = pneg %p171
        %p376 = pneg %p200
        %p377 = pneg %p197
        %s378 = sand.u32 %s187, 1
        %s379 = scalar_lea.sflag [#allocation4], %s378
        %s380 = sand.u32 %s187, 1
        %s381 = smul.addr %s380, 128
        %s382 = scalar_lea.vmem [#allocation14], %s381
        %s383 = smul.u32 4, %s27
        %s384 = smul.u32 4, %s27
        %v386 = vld [vmem:[%s328] sm:$0xff]
        %v387 = vld [vmem:[%s328 + $0x8] sm:$0xff]
        %v388 = vld [vmem:[%s328 + $0x10] sm:$0xff]
        %v389 = vld [vmem:[%s328 + $0x18] sm:$0xff]
        %v390 = vld [vmem:[%s328 + $0x20] sm:$0xff]
        %v391 = vld [vmem:[%s328 + $0x28] sm:$0xff]
        %v392 = vld [vmem:[%s328 + $0x30] sm:$0xff]
        %v393 = vld [vmem:[%s328 + $0x38] sm:$0xff]
        %v394 = vpack.c.bf16 %v388, %v386
        %v395 = vpack.c.bf16 %v389, %v387
        %v396 = vpack.c.bf16 %v392, %v390
        %v397 = vpack.c.bf16 %v393, %v391
        %v398 = vld [vmem:[#allocation13] sm:$0xf]
        %v399 = vld [vmem:[#allocation7] sm:$0xff]
        %v400 = vld [vmem:[#allocation7 + $0x8] sm:$0xff]
        %v401 = vld [vmem:[#allocation7 + $0x10] sm:$0xff]
        %v402 = vld [vmem:[#allocation7 + $0x18] sm:$0xff]
        %v403 = vld [vmem:[#allocation7 + $0x20] sm:$0xff]
        %v404 = vld [vmem:[#allocation7 + $0x28] sm:$0xff]
        %v405 = vld [vmem:[#allocation7 + $0x30] sm:$0xff]
        %v406 = vld [vmem:[#allocation7 + $0x38] sm:$0xff]
        %v407 = vld [vmem:[#allocation7 + $0x40] sm:$0xff]
        %v408 = vld [vmem:[#allocation7 + $0x48] sm:$0xff]
        %v409 = vld [vmem:[#allocation7 + $0x50] sm:$0xff]
        %v410 = vld [vmem:[#allocation7 + $0x58] sm:$0xff]
        %v411 = vld [vmem:[#allocation7 + $0x60] sm:$0xff]
        %v412 = vld [vmem:[#allocation7 + $0x68] sm:$0xff]
        %v413 = vld [vmem:[#allocation7 + $0x70] sm:$0xff]
        %v414 = vld [vmem:[#allocation7 + $0x78] sm:$0xff]
        %v415 = vld [vmem:[#allocation7 + $0x80] sm:$0xff]
        %v416 = vld [vmem:[#allocation7 + $0x88] sm:$0xff]
        %v417 = vld [vmem:[#allocation7 + $0x90] sm:$0xff]
        %v418 = vld [vmem:[#allocation7 + $0x98] sm:$0xff]
        %v419 = vld [vmem:[#allocation7 + $0xa0] sm:$0xff]
        %v420 = vld [vmem:[#allocation7 + $0xa8] sm:$0xff]
        %v421 = vld [vmem:[#allocation7 + $0xb0] sm:$0xff]
        %v422 = vld [vmem:[#allocation7 + $0xb8] sm:$0xff]
        %v423 = vld [vmem:[#allocation7 + $0xc0] sm:$0xff]
        %v424 = vld [vmem:[#allocation7 + $0xc8] sm:$0xff]
        %v425 = vld [vmem:[#allocation7 + $0xd0] sm:$0xff]
        %v426 = vld [vmem:[#allocation7 + $0xd8] sm:$0xff]
        %v427 = vld [vmem:[#allocation7 + $0xe0] sm:$0xff]
        %v428 = vld [vmem:[#allocation7 + $0xe8] sm:$0xff]
        %v429 = vld [vmem:[#allocation7 + $0xf0] sm:$0xff]
        %v430 = vld [vmem:[#allocation7 + $0xf8] sm:$0xff]
        %v431 = vld [vmem:[#allocation7 + $0x100] sm:$0xff]
        %v432 = vld [vmem:[#allocation7 + $0x108] sm:$0xff]
        %v433 = vld [vmem:[#allocation7 + $0x110] sm:$0xff]
        %v434 = vld [vmem:[#allocation7 + $0x118] sm:$0xff]
        %v435 = vld [vmem:[#allocation7 + $0x120] sm:$0xff]
        %v436 = vld [vmem:[#allocation7 + $0x128] sm:$0xff]
        %v437 = vld [vmem:[#allocation7 + $0x130] sm:$0xff]
        %v438 = vld [vmem:[#allocation7 + $0x138] sm:$0xff]
        %v439 = vld [vmem:[#allocation7 + $0x140] sm:$0xff]
        %v440 = vld [vmem:[#allocation7 + $0x148] sm:$0xff]
        %v441 = vld [vmem:[#allocation7 + $0x150] sm:$0xff]
        %v442 = vld [vmem:[#allocation7 + $0x158] sm:$0xff]
        %v443 = vld [vmem:[#allocation7 + $0x160] sm:$0xff]
        %v444 = vld [vmem:[#allocation7 + $0x168] sm:$0xff]
        %v445 = vld [vmem:[#allocation7 + $0x170] sm:$0xff]
        %v446 = vld [vmem:[#allocation7 + $0x178] sm:$0xff]
        %v447 = vld [vmem:[#allocation7 + $0x180] sm:$0xff]
        %v448 = vld [vmem:[#allocation7 + $0x188] sm:$0xff]
        %v449 = vld [vmem:[#allocation7 + $0x190] sm:$0xff]
        %v450 = vld [vmem:[#allocation7 + $0x198] sm:$0xff]
        %v451 = vld [vmem:[#allocation7 + $0x1a0] sm:$0xff]
        %v452 = vld [vmem:[#allocation7 + $0x1a8] sm:$0xff]
        %v453 = vld [vmem:[#allocation7 + $0x1b0] sm:$0xff]
        %v454 = vld [vmem:[#allocation7 + $0x1b8] sm:$0xff]
        %v455 = vld [vmem:[#allocation7 + $0x1c0] sm:$0xff]
        %v456 = vld [vmem:[#allocation7 + $0x1c8] sm:$0xff]
        %v457 = vld [vmem:[#allocation7 + $0x1d0] sm:$0xff]
        %v458 = vld [vmem:[#allocation7 + $0x1d8] sm:$0xff]
        %v459 = vld [vmem:[#allocation7 + $0x1e0] sm:$0xff]
        %v460 = vld [vmem:[#allocation7 + $0x1e8] sm:$0xff]
        %v461 = vld [vmem:[#allocation7 + $0x1f0] sm:$0xff]
        %v462 = vld [vmem:[#allocation7 + $0x1f8] sm:$0xff]
        %v464 = vlaneseq
        %v465 = vshrl.u32 %v464, 7
        %v466 = vsub.s32 0, %v465
        %v467 = vrot.slane %v398, %v466
        %v468 = vlaneseq
        %v469 = vshrl.u32 %v468, 7
        %v470 = vsub.s32 1, %v469
        %v471 = vrot.slane %v398, %v470
        %v472 = vlaneseq
        %v473 = vshrl.u32 %v472, 7
        %v474 = vsub.s32 2, %v473
        %v475 = vrot.slane %v398, %v474
        %v476 = vlaneseq
        %v477 = vshrl.u32 %v476, 7
        %v478 = vsub.s32 3, %v477
        %v479 = vrot.slane %v398, %v478
        %v548 = vunpack.c.l.b16 %v399
        %v549 = vunpack.c.h.b16 %v399
        %v550 = vunpack.c.l.b16 %v400
        %v551 = vunpack.c.h.b16 %v400
        %v552 = vunpack.c.l.b16 %v401
        %v553 = vunpack.c.h.b16 %v401
        %v554 = vunpack.c.l.b16 %v402
        %v555 = vunpack.c.h.b16 %v402
        %v556 = vunpack.c.l.b16 %v403
        %v557 = vunpack.c.h.b16 %v403
        %v558 = vunpack.c.l.b16 %v404
        %v559 = vunpack.c.h.b16 %v404
        %v560 = vunpack.c.l.b16 %v405
        %v561 = vunpack.c.h.b16 %v405
        %v562 = vunpack.c.l.b16 %v406
        %v563 = vunpack.c.h.b16 %v406
        %v564 = vunpack.c.l.b16 %v407
        %v565 = vunpack.c.h.b16 %v407
        %v566 = vunpack.c.l.b16 %v408
        %v567 = vunpack.c.h.b16 %v408
        %v568 = vunpack.c.l.b16 %v409
        %v569 = vunpack.c.h.b16 %v409
        %v570 = vunpack.c.l.b16 %v410
        %v571 = vunpack.c.h.b16 %v410
        %v572 = vunpack.c.l.b16 %v411
        %v573 = vunpack.c.h.b16 %v411
        %v574 = vunpack.c.l.b16 %v412
        %v575 = vunpack.c.h.b16 %v412
        %v576 = vunpack.c.l.b16 %v413
        %v577 = vunpack.c.h.b16 %v413
        %v578 = vunpack.c.l.b16 %v414
        %v579 = vunpack.c.h.b16 %v414
        %v580 = vunpack.c.l.b16 %v415
        %v581 = vunpack.c.h.b16 %v415
        %v582 = vunpack.c.l.b16 %v416
        %v583 = vunpack.c.h.b16 %v416
        %v584 = vunpack.c.l.b16 %v417
        %v585 = vunpack.c.h.b16 %v417
        %v586 = vunpack.c.l.b16 %v418
        %v587 = vunpack.c.h.b16 %v418
        %v588 = vunpack.c.l.b16 %v419
        %v589 = vunpack.c.h.b16 %v419
        %v590 = vunpack.c.l.b16 %v420
        %v591 = vunpack.c.h.b16 %v420
        %v592 = vunpack.c.l.b16 %v421
        %v593 = vunpack.c.h.b16 %v421
        %v594 = vunpack.c.l.b16 %v422
        %v595 = vunpack.c.h.b16 %v422
        %v596 = vunpack.c.l.b16 %v423
        %v597 = vunpack.c.h.b16 %v423
        %v598 = vunpack.c.l.b16 %v424
        %v599 = vunpack.c.h.b16 %v424
        %v600 = vunpack.c.l.b16 %v425
        %v601 = vunpack.c.h.b16 %v425
        %v602 = vunpack.c.l.b16 %v426
        %v603 = vunpack.c.h.b16 %v426
        %v604 = vunpack.c.l.b16 %v427
        %v605 = vunpack.c.h.b16 %v427
        %v606 = vunpack.c.l.b16 %v428
        %v607 = vunpack.c.h.b16 %v428
        %v608 = vunpack.c.l.b16 %v429
        %v609 = vunpack.c.h.b16 %v429
        %v610 = vunpack.c.l.b16 %v430
        %v611 = vunpack.c.h.b16 %v430
        %v612 = vunpack.c.l.b16 %v431
        %v613 = vunpack.c.h.b16 %v431
        %v614 = vunpack.c.l.b16 %v432
        %v615 = vunpack.c.h.b16 %v432
        %v616 = vunpack.c.l.b16 %v433
        %v617 = vunpack.c.h.b16 %v433
        %v618 = vunpack.c.l.b16 %v434
        %v619 = vunpack.c.h.b16 %v434
        %v620 = vunpack.c.l.b16 %v435
        %v621 = vunpack.c.h.b16 %v435
        %v622 = vunpack.c.l.b16 %v436
        %v623 = vunpack.c.h.b16 %v436
        %v624 = vunpack.c.l.b16 %v437
        %v625 = vunpack.c.h.b16 %v437
        %v626 = vunpack.c.l.b16 %v438
        %v627 = vunpack.c.h.b16 %v438
        %v628 = vunpack.c.l.b16 %v439
        %v629 = vunpack.c.h.b16 %v439
        %v630 = vunpack.c.l.b16 %v440
        %v631 = vunpack.c.h.b16 %v440
        %v632 = vunpack.c.l.b16 %v441
        %v633 = vunpack.c.h.b16 %v441
        %v634 = vunpack.c.l.b16 %v442
        %v635 = vunpack.c.h.b16 %v442
        %v636 = vunpack.c.l.b16 %v443
        %v637 = vunpack.c.h.b16 %v443
        %v638 = vunpack.c.l.b16 %v444
        %v639 = vunpack.c.h.b16 %v444
        %v640 = vunpack.c.l.b16 %v445
        %v641 = vunpack.c.h.b16 %v445
        %v642 = vunpack.c.l.b16 %v446
        %v643 = vunpack.c.h.b16 %v446
        %v644 = vunpack.c.l.b16 %v447
        %v645 = vunpack.c.h.b16 %v447
        %v646 = vunpack.c.l.b16 %v448
        %v647 = vunpack.c.h.b16 %v448
        %v648 = vunpack.c.l.b16 %v449
        %v649 = vunpack.c.h.b16 %v449
        %v650 = vunpack.c.l.b16 %v450
        %v651 = vunpack.c.h.b16 %v450
        %v652 = vunpack.c.l.b16 %v451
        %v653 = vunpack.c.h.b16 %v451
        %v654 = vunpack.c.l.b16 %v452
        %v655 = vunpack.c.h.b16 %v452
        %v656 = vunpack.c.l.b16 %v453
        %v657 = vunpack.c.h.b16 %v453
        %v658 = vunpack.c.l.b16 %v454
        %v659 = vunpack.c.h.b16 %v454
        %v660 = vunpack.c.l.b16 %v455
        %v661 = vunpack.c.h.b16 %v455
        %v662 = vunpack.c.l.b16 %v456
        %v663 = vunpack.c.h.b16 %v456
        %v664 = vunpack.c.l.b16 %v457
        %v665 = vunpack.c.h.b16 %v457
        %v666 = vunpack.c.l.b16 %v458
        %v667 = vunpack.c.h.b16 %v458
        %v668 = vunpack.c.l.b16 %v459
        %v669 = vunpack.c.h.b16 %v459
        %v670 = vunpack.c.l.b16 %v460
        %v671 = vunpack.c.h.b16 %v460
        %v672 = vunpack.c.l.b16 %v461
        %v673 = vunpack.c.h.b16 %v461
        %v674 = vunpack.c.l.b16 %v462
        %v675 = vunpack.c.h.b16 %v462
        %v676 = vpack.c.b16 %v552, %v548
        %v677 = vpack.c.b16 %v553, %v549
        %v678 = vpack.c.b16 %v554, %v550
        %v679 = vpack.c.b16 %v555, %v551
        %v680 = vpack.c.b16 %v560, %v556
        %v681 = vpack.c.b16 %v561, %v557
        %v682 = vpack.c.b16 %v562, %v558
        %v683 = vpack.c.b16 %v563, %v559
        %v684 = vpack.c.b16 %v568, %v564
        %v685 = vpack.c.b16 %v569, %v565
        %v686 = vpack.c.b16 %v570, %v566
        %v687 = vpack.c.b16 %v571, %v567
        %v688 = vpack.c.b16 %v576, %v572
        %v689 = vpack.c.b16 %v577, %v573
        %v690 = vpack.c.b16 %v578, %v574
        %v691 = vpack.c.b16 %v579, %v575
        %v692 = vpack.c.b16 %v584, %v580
        %v693 = vpack.c.b16 %v585, %v581
        %v694 = vpack.c.b16 %v586, %v582
        %v695 = vpack.c.b16 %v587, %v583
        %v696 = vpack.c.b16 %v592, %v588
        %v697 = vpack.c.b16 %v593, %v589
        %v698 = vpack.c.b16 %v594, %v590
        %v699 = vpack.c.b16 %v595, %v591
        %v700 = vpack.c.b16 %v600, %v596
        %v701 = vpack.c.b16 %v601, %v597
        %v702 = vpack.c.b16 %v602, %v598
        %v703 = vpack.c.b16 %v603, %v599
        %v704 = vpack.c.b16 %v608, %v604
        %v705 = vpack.c.b16 %v609, %v605
        %v706 = vpack.c.b16 %v610, %v606
        %v707 = vpack.c.b16 %v611, %v607
        %v708 = vpack.c.b16 %v616, %v612
        %v709 = vpack.c.b16 %v617, %v613
        %v710 = vpack.c.b16 %v618, %v614
        %v711 = vpack.c.b16 %v619, %v615
        %v712 = vpack.c.b16 %v624, %v620
        %v713 = vpack.c.b16 %v625, %v621
        %v714 = vpack.c.b16 %v626, %v622
        %v715 = vpack.c.b16 %v627, %v623
        %v716 = vpack.c.b16 %v632, %v628
        %v717 = vpack.c.b16 %v633, %v629
        %v718 = vpack.c.b16 %v634, %v630
        %v719 = vpack.c.b16 %v635, %v631
        %v720 = vpack.c.b16 %v640, %v636
        %v721 = vpack.c.b16 %v641, %v637
        %v722 = vpack.c.b16 %v642, %v638
        %v723 = vpack.c.b16 %v643, %v639
        %v724 = vpack.c.b16 %v648, %v644
        %v725 = vpack.c.b16 %v649, %v645
        %v726 = vpack.c.b16 %v650, %v646
        %v727 = vpack.c.b16 %v651, %v647
        %v728 = vpack.c.b16 %v656, %v652
        %v729 = vpack.c.b16 %v657, %v653
        %v730 = vpack.c.b16 %v658, %v654
        %v731 = vpack.c.b16 %v659, %v655
        %v732 = vpack.c.b16 %v664, %v660
        %v733 = vpack.c.b16 %v665, %v661
        %v734 = vpack.c.b16 %v666, %v662
        %v735 = vpack.c.b16 %v667, %v663
        %v736 = vpack.c.b16 %v672, %v668
        %v737 = vpack.c.b16 %v673, %v669
        %v738 = vpack.c.b16 %v674, %v670
        %v739 = vpack.c.b16 %v675, %v671
        %804 = vmatprep.subr.bf16.mxu0 %v677
        %805 = vmatpush1.bf16.msra.mxu0 %v676
        %806 = vmatprep.subr.bf16.mxu0 %v681
        %807 = vmatpush1.bf16.msra.mxu0 %v680
        %808 = vmatprep.subr.bf16.mxu0 %v685
        %809 = vmatpush1.bf16.msra.mxu0 %v684
        %810 = vmatprep.subr.bf16.mxu0 %v689
        %811 = vmatpush1.bf16.msra.mxu0 %v688
        %812 = vmatprep.subr.bf16.mxu0 %v693
        %813 = vmatpush1.bf16.msra.mxu0 %v692
        %814 = vmatprep.subr.bf16.mxu0 %v697
        %815 = vmatpush1.bf16.msra.mxu0 %v696
        %816 = vmatprep.subr.bf16.mxu0 %v701
        %817 = vmatpush1.bf16.msra.mxu0 %v700
        %818 = vmatprep.subr.bf16.mxu0 %v705
        %819 = vmatpush1.bf16.msra.mxu0 %v704
        %820 = vmatprep.subr.bf16.mxu0 %v709
        %821 = vmatpush1.bf16.msra.mxu0 %v708
        %822 = vmatprep.subr.bf16.mxu0 %v713
        %823 = vmatpush1.bf16.msra.mxu0 %v712
        %824 = vmatprep.subr.bf16.mxu0 %v717
        %825 = vmatpush1.bf16.msra.mxu0 %v716
        %826 = vmatprep.subr.bf16.mxu0 %v721
        %827 = vmatpush1.bf16.msra.mxu0 %v720
        %828 = vmatprep.subr.bf16.mxu0 %v725
        %829 = vmatpush1.bf16.msra.mxu0 %v724
        %830 = vmatprep.subr.bf16.mxu0 %v729
        %831 = vmatpush1.bf16.msra.mxu0 %v728
        %832 = vmatprep.subr.bf16.mxu0 %v733
        %833 = vmatpush1.bf16.msra.mxu0 %v732
        %834 = vmatprep.subr.bf16.mxu0 %v737
        %835 = vmatpush1.bf16.msra.mxu0 %v736
        %836 = vmatprep.mubr.bf16.mxu0 %v395
        %837 = vmatmul.mubr.bf16.gmra.mrb[0].mxu0 %v394
        %v838 = vpop.f32.mrb[0].mxu0
        %v839 = vadd.f32 %v467, %v838
        %v840 = vpop.f32.mrb[0].mxu0
        %v841 = vadd.f32 %v471, %v840
        %v842 = vpop.f32.mrb[0].mxu0
        %v843 = vadd.f32 %v467, %v842
        %v844 = vpop.f32.mrb[0].mxu0
        %v845 = vadd.f32 %v471, %v844
        %846 = vmatprep.mubr.bf16.mxu0 %v397
        %847 = vmatmul.mubr.bf16.gmra.mrb[0].mxu0 %v396
        %v848 = vpop.f32.mrb[0].mxu0
        %v849 = vadd.f32 %v467, %v848
        %v850 = vpop.f32.mrb[0].mxu0
        %v851 = vadd.f32 %v471, %v850
        %v852 = vpop.f32.mrb[0].mxu0
        %v853 = vadd.f32 %v467, %v852
        %v854 = vpop.f32.mrb[0].mxu0
        %v855 = vadd.f32 %v471, %v854
        %856 = vdwg.mxu0
        %857 = vmatprep.subr.bf16.mxu0 %v679
        %858 = vmatpush1.bf16.msra.mxu0 %v678
        %859 = vmatprep.subr.bf16.mxu0 %v683
        %860 = vmatpush1.bf16.msra.mxu0 %v682
        %861 = vmatprep.subr.bf16.mxu0 %v687
        %862 = vmatpush1.bf16.msra.mxu0 %v686
        %863 = vmatprep.subr.bf16.mxu0 %v691
        %864 = vmatpush1.bf16.msra.mxu0 %v690
        %865 = vmatprep.subr.bf16.mxu0 %v695
        %866 = vmatpush1.bf16.msra.mxu0 %v694
        %867 = vmatprep.subr.bf16.mxu0 %v699
        %868 = vmatpush1.bf16.msra.mxu0 %v698
        %869 = vmatprep.subr.bf16.mxu0 %v703
        %870 = vmatpush1.bf16.msra.mxu0 %v702
        %871 = vmatprep.subr.bf16.mxu0 %v707
        %872 = vmatpush1.bf16.msra.mxu0 %v706
        %873 = vmatprep.subr.bf16.mxu0 %v711
        %874 = vmatpush1.bf16.msra.mxu0 %v710
        %875 = vmatprep.subr.bf16.mxu0 %v715
        %876 = vmatpush1.bf16.msra.mxu0 %v714
        %877 = vmatprep.subr.bf16.mxu0 %v719
        %878 = vmatpush1.bf16.msra.mxu0 %v718
        %879 = vmatprep.subr.bf16.mxu0 %v723
        %880 = vmatpush1.bf16.msra.mxu0 %v722
        %881 = vmatprep.subr.bf16.mxu0 %v727
        %882 = vmatpush1.bf16.msra.mxu0 %v726
        %883 = vmatprep.subr.bf16.mxu0 %v731
        %884 = vmatpush1.bf16.msra.mxu0 %v730
        %885 = vmatprep.subr.bf16.mxu0 %v735
        %886 = vmatpush1.bf16.msra.mxu0 %v734
        %887 = vmatprep.subr.bf16.mxu0 %v739
        %888 = vmatpush1.bf16.msra.mxu0 %v738
        %889 = vmatprep.mubr.bf16.mxu0 %v395
        %890 = vmatmul.mubr.bf16.gmra.mrb[0].mxu0 %v394
        %v891 = vpop.f32.mrb[0].mxu0
        %v892 = vadd.f32 %v475, %v891
        %v893 = vpop.f32.mrb[0].mxu0
        %v894 = vadd.f32 %v479, %v893
        %v895 = vpop.f32.mrb[0].mxu0
        %v896 = vadd.f32 %v475, %v895
        %v897 = vpop.f32.mrb[0].mxu0
        %v898 = vadd.f32 %v479, %v897
        %899 = vmatprep.mubr.bf16.mxu0 %v397
        %900 = vmatmul.mubr.bf16.gmra.mrb[0].mxu0 %v396
        %v901 = vpop.f32.mrb[0].mxu0
        %v902 = vadd.f32 %v475, %v901
        %v903 = vpop.f32.mrb[0].mxu0
        %v904 = vadd.f32 %v479, %v903
        %v905 = vpop.f32.mrb[0].mxu0
        %v906 = vadd.f32 %v475, %v905
        %v907 = vpop.f32.mrb[0].mxu0
        %v908 = vadd.f32 %v479, %v907
        %909 = vdwg.mxu0
        %v910 = vmax.f32 %v839, 0.0
        %v911 = vmax.f32 %v841, 0.0
        %v912 = vmax.f32 %v892, 0.0
        %v913 = vmax.f32 %v894, 0.0
        %v914 = vmax.f32 %v843, 0.0
        %v915 = vmax.f32 %v845, 0.0
        %v916 = vmax.f32 %v896, 0.0
        %v917 = vmax.f32 %v898, 0.0
        %v918 = vmax.f32 %v849, 0.0
        %v919 = vmax.f32 %v851, 0.0
        %v920 = vmax.f32 %v902, 0.0
        %v921 = vmax.f32 %v904, 0.0
        %v922 = vmax.f32 %v853, 0.0
        %v923 = vmax.f32 %v855, 0.0
        %v924 = vmax.f32 %v906, 0.0
        %v925 = vmax.f32 %v908, 0.0
        %v926 = vpack.c.bf16 %v914, %v910
        %v927 = vpack.c.bf16 %v915, %v911
        %v928 = vpack.c.bf16 %v916, %v912
        %v929 = vpack.c.bf16 %v917, %v913
        %v930 = vpack.c.bf16 %v922, %v918
        %v931 = vpack.c.bf16 %v923, %v919
        %v932 = vpack.c.bf16 %v924, %v920
        %v933 = vpack.c.bf16 %v925, %v921
        %v934 = vld [vmem:[#allocation13 + $0x4] sm:$0xf]
        %v935 = vld [vmem:[#allocation5] sm:$0xf]
        %v936 = vld [vmem:[#allocation5 + $0x4] sm:$0xf]
        %v937 = vld [vmem:[#allocation5 + $0x8] sm:$0xf]
        %v938 = vld [vmem:[#allocation5 + $0xc] sm:$0xf]
        %v943 = vunpack.c.l.b16 %v935
        %v944 = vunpack.c.l.b16 %v936
        %v945 = vunpack.c.l.b16 %v937
        %v946 = vunpack.c.l.b16 %v938
        %v947 = vpack.c.b16 %v944, %v943
        %v948 = vpack.c.b16 %v946, %v945
        %vm949 = vcmask 261120
        %v951 = vsel %vm949, %v947, 0
        %v954 = vsel %vm949, %v948, 0
        %956 = vmatprep.subr.bf16.mxu0 %v927
        %957 = vmatpush1.bf16.msra.mxu0 %v926
        %958 = vmatprep.subr.bf16.mxu0 %v931
        %959 = vmatpush1.bf16.msra.mxu0 %v930
        %960 = vmatprep.subr.bf16.mxu0 0
        %961 = vmatpush1.bf16.msra.mxu0 0
        %962 = vmatprep.subr.bf16.mxu0 0
        %963 = vmatpush1.bf16.msra.mxu0 0
        %964 = vmatprep.subr.bf16.mxu0 0
        %965 = vmatpush1.bf16.msra.mxu0 0
        %966 = vmatprep.subr.bf16.mxu0 0
        %967 = vmatpush1.bf16.msra.mxu0 0
        %968 = vmatprep.subr.bf16.mxu0 0
        %969 = vmatpush1.bf16.msra.mxu0 0
        %970 = vmatprep.subr.bf16.mxu0 0
        %971 = vmatpush1.bf16.msra.mxu0 0
        %972 = vmatprep.subr.bf16.mxu0 0
        %973 = vmatpush1.bf16.msra.mxu0 0
        %974 = vmatprep.subr.bf16.mxu0 0
        %975 = vmatpush1.bf16.msra.mxu0 0
        %976 = vmatprep.subr.bf16.mxu0 0
        %977 = vmatpush1.bf16.msra.mxu0 0
        %978 = vmatprep.subr.bf16.mxu0 0
        %979 = vmatpush1.bf16.msra.mxu0 0
        %980 = vmatprep.subr.bf16.mxu0 0
        %981 = vmatpush1.bf16.msra.mxu0 0
        %982 = vmatprep.subr.bf16.mxu0 0
        %983 = vmatpush1.bf16.msra.mxu0 0
        %984 = vmatprep.subr.bf16.mxu0 0
        %985 = vmatpush1.bf16.msra.mxu0 0
        %986 = vmatprep.subr.bf16.mxu0 0
        %987 = vmatpush1.bf16.msra.mxu0 0
        %988 = vmatprep.mubr.bf16.mxu0 0
        %989 = vmatmul.mubr.bf16.gmra.mrb[0].mxu0 %v951
        %v990 = vpop.f32.mrb[0].mxu0
        %v991 = vadd.f32 0.0, %v990
        %v992 = vpop.f32.mrb[0].mxu0
        %v993 = vadd.f32 0.0, %v992
        %v994 = vpop.f32.mrb[0].mxu0
        %v995 = vadd.f32 0.0, %v994
        %v996 = vpop.f32.mrb[0].mxu0
        %v997 = vadd.f32 0.0, %v996
        %998 = vmatprep.mubr.bf16.mxu0 0
        %999 = vmatmul.mubr.bf16.gmra.mrb[0].mxu0 %v954
        %v1000 = vpop.f32.mrb[0].mxu0
        %v1001 = vadd.f32 0.0, %v1000
        %v1002 = vpop.f32.mrb[0].mxu0
        %v1003 = vadd.f32 0.0, %v1002
        %v1004 = vpop.f32.mrb[0].mxu0
        %v1005 = vadd.f32 0.0, %v1004
        %v1006 = vpop.f32.mrb[0].mxu0
        %v1007 = vadd.f32 0.0, %v1006
        %1008 = vdwg.mxu0
        %1009 = vmatprep.subr.bf16.mxu0 %v929
        %1010 = vmatpush1.bf16.msra.mxu0 %v928
        %1011 = vmatprep.subr.bf16.mxu0 %v933
        %1012 = vmatpush1.bf16.msra.mxu0 %v932
        %1013 = vmatprep.subr.bf16.mxu0 0
        %1014 = vmatpush1.bf16.msra.mxu0 0
        %1015 = vmatprep.subr.bf16.mxu0 0
        %1016 = vmatpush1.bf16.msra.mxu0 0
        %1017 = vmatprep.subr.bf16.mxu0 0
        %1018 = vmatpush1.bf16.msra.mxu0 0
        %1019 = vmatprep.subr.bf16.mxu0 0
        %1020 = vmatpush1.bf16.msra.mxu0 0
        %1021 = vmatprep.subr.bf16.mxu0 0
        %1022 = vmatpush1.bf16.msra.mxu0 0
        %1023 = vmatprep.subr.bf16.mxu0 0
        %1024 = vmatpush1.bf16.msra.mxu0 0
        %1025 = vmatprep.subr.bf16.mxu0 0
        %1026 = vmatpush1.bf16.msra.mxu0 0
        %1027 = vmatprep.subr.bf16.mxu0 0
        %1028 = vmatpush1.bf16.msra.mxu0 0
        %1029 = vmatprep.subr.bf16.mxu0 0
        %1030 = vmatpush1.bf16.msra.mxu0 0
        %1031 = vmatprep.subr.bf16.mxu0 0
        %1032 = vmatpush1.bf16.msra.mxu0 0
        %1033 = vmatprep.subr.bf16.mxu0 0
        %1034 = vmatpush1.bf16.msra.mxu0 0
        %1035 = vmatprep.subr.bf16.mxu0 0
        %1036 = vmatpush1.bf16.msra.mxu0 0
        %1037 = vmatprep.subr.bf16.mxu0 0
        %1038 = vmatpush1.bf16.msra.mxu0 0
        %1039 = vmatprep.subr.bf16.mxu0 0
        %1040 = vmatpush1.bf16.msra.mxu0 0
        %1041 = vmatprep.mubr.bf16.mxu0 0
        %1042 = vmatmul.mubr.bf16.gmra.mrb[0].mxu0 %v951
        %v1043 = vpop.f32.mrb[0].mxu0
        %v1044 = vadd.f32 0.0, %v1043
        %v1045 = vpop.f32.mrb[0].mxu0
        %v1046 = vadd.f32 0.0, %v1045
        %v1047 = vpop.f32.mrb[0].mxu0
        %v1048 = vadd.f32 0.0, %v1047
        %v1049 = vpop.f32.mrb[0].mxu0
        %v1050 = vadd.f32 0.0, %v1049
        %1051 = vmatprep.mubr.bf16.mxu0 0
        %1052 = vmatmul.mubr.bf16.gmra.mrb[0].mxu0 %v954
        %v1053 = vpop.f32.mrb[0].mxu0
        %v1054 = vadd.f32 0.0, %v1053
        %v1055 = vpop.f32.mrb[0].mxu0
        %v1056 = vadd.f32 0.0, %v1055
        %v1057 = vpop.f32.mrb[0].mxu0
        %v1058 = vadd.f32 0.0, %v1057
        %v1059 = vpop.f32.mrb[0].mxu0
        %v1060 = vadd.f32 0.0, %v1059
        %1061 = vdwg.mxu0
        %v1062 = vpack.c.bf16 %v995, %v991
        %v1063 = vpack.c.bf16 %v997, %v993
        %v1064 = vpack.c.bf16 %v1048, %v1044
        %v1065 = vpack.c.bf16 %v1050, %v1046
        %v1066 = vpack.c.bf16 %v1005, %v1001
        %v1067 = vpack.c.bf16 %v1007, %v1003
        %v1068 = vpack.c.bf16 %v1058, %v1054
        %v1069 = vpack.c.bf16 %v1060, %v1056
        %v1070 = vld [vmem:[#allocation8] sm:$0xff]
        %v1071 = vld [vmem:[#allocation8 + $0x8] sm:$0xff]
        %v1072 = vld [vmem:[#allocation8 + $0x10] sm:$0xff]
        %v1073 = vld [vmem:[#allocation8 + $0x18] sm:$0xff]
        %v1074 = vld [vmem:[#allocation8 + $0x20] sm:$0xff]
        %v1075 = vld [vmem:[#allocation8 + $0x28] sm:$0xff]
        %v1076 = vld [vmem:[#allocation8 + $0x30] sm:$0xff]
        %v1077 = vld [vmem:[#allocation8 + $0x38] sm:$0xff]
        %v1078 = vld [vmem:[#allocation8 + $0x40] sm:$0xff]
        %v1079 = vld [vmem:[#allocation8 + $0x48] sm:$0xff]
        %v1080 = vld [vmem:[#allocation8 + $0x50] sm:$0xff]
        %v1081 = vld [vmem:[#allocation8 + $0x58] sm:$0xff]
        %v1082 = vld [vmem:[#allocation8 + $0x60] sm:$0xff]
        %v1083 = vld [vmem:[#allocation8 + $0x68] sm:$0xff]
        %v1084 = vld [vmem:[#allocation8 + $0x70] sm:$0xff]
        %v1085 = vld [vmem:[#allocation8 + $0x78] sm:$0xff]
        %v1086 = vld [vmem:[#allocation8 + $0x80] sm:$0xff]
        %v1087 = vld [vmem:[#allocation8 + $0x88] sm:$0xff]
        %v1088 = vld [vmem:[#allocation8 + $0x90] sm:$0xff]
        %v1089 = vld [vmem:[#allocation8 + $0x98] sm:$0xff]
        %v1090 = vld [vmem:[#allocation8 + $0xa0] sm:$0xff]
        %v1091 = vld [vmem:[#allocation8 + $0xa8] sm:$0xff]
        %v1092 = vld [vmem:[#allocation8 + $0xb0] sm:$0xff]
        %v1093 = vld [vmem:[#allocation8 + $0xb8] sm:$0xff]
        %v1094 = vld [vmem:[#allocation8 + $0xc0] sm:$0xff]
        %v1095 = vld [vmem:[#allocation8 + $0xc8] sm:$0xff]
        %v1096 = vld [vmem:[#allocation8 + $0xd0] sm:$0xff]
        %v1097 = vld [vmem:[#allocation8 + $0xd8] sm:$0xff]
        %v1098 = vld [vmem:[#allocation8 + $0xe0] sm:$0xff]
        %v1099 = vld [vmem:[#allocation8 + $0xe8] sm:$0xff]
        %v1100 = vld [vmem:[#allocation8 + $0xf0] sm:$0xff]
        %v1101 = vld [vmem:[#allocation8 + $0xf8] sm:$0xff]
        %v1102 = vld [vmem:[#allocation8 + $0x100] sm:$0xff]
        %v1103 = vld [vmem:[#allocation8 + $0x108] sm:$0xff]
        %v1104 = vld [vmem:[#allocation8 + $0x110] sm:$0xff]
        %v1105 = vld [vmem:[#allocation8 + $0x118] sm:$0xff]
        %v1106 = vld [vmem:[#allocation8 + $0x120] sm:$0xff]
        %v1107 = vld [vmem:[#allocation8 + $0x128] sm:$0xff]
        %v1108 = vld [vmem:[#allocation8 + $0x130] sm:$0xff]
        %v1109 = vld [vmem:[#allocation8 + $0x138] sm:$0xff]
        %v1110 = vld [vmem:[#allocation8 + $0x140] sm:$0xff]
        %v1111 = vld [vmem:[#allocation8 + $0x148] sm:$0xff]
        %v1112 = vld [vmem:[#allocation8 + $0x150] sm:$0xff]
        %v1113 = vld [vmem:[#allocation8 + $0x158] sm:$0xff]
        %v1114 = vld [vmem:[#allocation8 + $0x160] sm:$0xff]
        %v1115 = vld [vmem:[#allocation8 + $0x168] sm:$0xff]
        %v1116 = vld [vmem:[#allocation8 + $0x170] sm:$0xff]
        %v1117 = vld [vmem:[#allocation8 + $0x178] sm:$0xff]
        %v1118 = vld [vmem:[#allocation8 + $0x180] sm:$0xff]
        %v1119 = vld [vmem:[#allocation8 + $0x188] sm:$0xff]
        %v1120 = vld [vmem:[#allocation8 + $0x190] sm:$0xff]
        %v1121 = vld [vmem:[#allocation8 + $0x198] sm:$0xff]
        %v1122 = vld [vmem:[#allocation8 + $0x1a0] sm:$0xff]
        %v1123 = vld [vmem:[#allocation8 + $0x1a8] sm:$0xff]
        %v1124 = vld [vmem:[#allocation8 + $0x1b0] sm:$0xff]
        %v1125 = vld [vmem:[#allocation8 + $0x1b8] sm:$0xff]
        %v1126 = vld [vmem:[#allocation8 + $0x1c0] sm:$0xff]
        %v1127 = vld [vmem:[#allocation8 + $0x1c8] sm:$0xff]
        %v1128 = vld [vmem:[#allocation8 + $0x1d0] sm:$0xff]
        %v1129 = vld [vmem:[#allocation8 + $0x1d8] sm:$0xff]
        %v1130 = vld [vmem:[#allocation8 + $0x1e0] sm:$0xff]
        %v1131 = vld [vmem:[#allocation8 + $0x1e8] sm:$0xff]
        %v1132 = vld [vmem:[#allocation8 + $0x1f0] sm:$0xff]
        %v1133 = vld [vmem:[#allocation8 + $0x1f8] sm:$0xff]
        %v1134 = vld [vmem:[#allocation8 + $0x200] sm:$0xff]
        %v1135 = vld [vmem:[#allocation8 + $0x208] sm:$0xff]
        %v1136 = vld [vmem:[#allocation8 + $0x210] sm:$0xff]
        %v1137 = vld [vmem:[#allocation8 + $0x218] sm:$0xff]
        %v1138 = vld [vmem:[#allocation8 + $0x220] sm:$0xff]
        %v1139 = vld [vmem:[#allocation8 + $0x228] sm:$0xff]
        %v1140 = vld [vmem:[#allocation8 + $0x230] sm:$0xff]
        %v1141 = vld [vmem:[#allocation8 + $0x238] sm:$0xff]
        %v1142 = vld [vmem:[#allocation8 + $0x240] sm:$0xff]
        %v1143 = vld [vmem:[#allocation8 + $0x248] sm:$0xff]
        %v1144 = vld [vmem:[#allocation8 + $0x250] sm:$0xff]
        %v1145 = vld [vmem:[#allocation8 + $0x258] sm:$0xff]
        %v1146 = vld [vmem:[#allocation8 + $0x260] sm:$0xff]
        %v1147 = vld [vmem:[#allocation8 + $0x268] sm:$0xff]
        %v1148 = vld [vmem:[#allocation8 + $0x270] sm:$0xff]
        %v1149 = vld [vmem:[#allocation8 + $0x278] sm:$0xff]
        %v1150 = vld [vmem:[#allocation8 + $0x280] sm:$0xff]
        %v1151 = vld [vmem:[#allocation8 + $0x288] sm:$0xff]
        %v1152 = vld [vmem:[#allocation8 + $0x290] sm:$0xff]
        %v1153 = vld [vmem:[#allocation8 + $0x298] sm:$0xff]
        %v1154 = vld [vmem:[#allocation8 + $0x2a0] sm:$0xff]
        %v1155 = vld [vmem:[#allocation8 + $0x2a8] sm:$0xff]
        %v1156 = vld [vmem:[#allocation8 + $0x2b0] sm:$0xff]
        %v1157 = vld [vmem:[#allocation8 + $0x2b8] sm:$0xff]
        %v1158 = vld [vmem:[#allocation8 + $0x2c0] sm:$0xff]
        %v1159 = vld [vmem:[#allocation8 + $0x2c8] sm:$0xff]
        %v1160 = vld [vmem:[#allocation8 + $0x2d0] sm:$0xff]
        %v1161 = vld [vmem:[#allocation8 + $0x2d8] sm:$0xff]
        %v1162 = vld [vmem:[#allocation8 + $0x2e0] sm:$0xff]
        %v1163 = vld [vmem:[#allocation8 + $0x2e8] sm:$0xff]
        %v1164 = vld [vmem:[#allocation8 + $0x2f0] sm:$0xff]
        %v1165 = vld [vmem:[#allocation8 + $0x2f8] sm:$0xff]
        %v1166 = vld [vmem:[#allocation8 + $0x300] sm:$0xff]
        %v1167 = vld [vmem:[#allocation8 + $0x308] sm:$0xff]
        %v1168 = vld [vmem:[#allocation8 + $0x310] sm:$0xff]
        %v1169 = vld [vmem:[#allocation8 + $0x318] sm:$0xff]
        %v1170 = vld [vmem:[#allocation8 + $0x320] sm:$0xff]
        %v1171 = vld [vmem:[#allocation8 + $0x328] sm:$0xff]
        %v1172 = vld [vmem:[#allocation8 + $0x330] sm:$0xff]
        %v1173 = vld [vmem:[#allocation8 + $0x338] sm:$0xff]
        %v1174 = vld [vmem:[#allocation8 + $0x340] sm:$0xff]
        %v1175 = vld [vmem:[#allocation8 + $0x348] sm:$0xff]
        %v1176 = vld [vmem:[#allocation8 + $0x350] sm:$0xff]
        %v1177 = vld [vmem:[#allocation8 + $0x358] sm:$0xff]
        %v1178 = vld [vmem:[#allocation8 + $0x360] sm:$0xff]
        %v1179 = vld [vmem:[#allocation8 + $0x368] sm:$0xff]
        %v1180 = vld [vmem:[#allocation8 + $0x370] sm:$0xff]
        %v1181 = vld [vmem:[#allocation8 + $0x378] sm:$0xff]
        %v1182 = vld [vmem:[#allocation8 + $0x380] sm:$0xff]
        %v1183 = vld [vmem:[#allocation8 + $0x388] sm:$0xff]
        %v1184 = vld [vmem:[#allocation8 + $0x390] sm:$0xff]
        %v1185 = vld [vmem:[#allocation8 + $0x398] sm:$0xff]
        %v1186 = vld [vmem:[#allocation8 + $0x3a0] sm:$0xff]
        %v1187 = vld [vmem:[#allocation8 + $0x3a8] sm:$0xff]
        %v1188 = vld [vmem:[#allocation8 + $0x3b0] sm:$0xff]
        %v1189 = vld [vmem:[#allocation8 + $0x3b8] sm:$0xff]
        %v1190 = vld [vmem:[#allocation8 + $0x3c0] sm:$0xff]
        %v1191 = vld [vmem:[#allocation8 + $0x3c8] sm:$0xff]
        %v1192 = vld [vmem:[#allocation8 + $0x3d0] sm:$0xff]
        %v1193 = vld [vmem:[#allocation8 + $0x3d8] sm:$0xff]
        %v1194 = vld [vmem:[#allocation8 + $0x3e0] sm:$0xff]
        %v1195 = vld [vmem:[#allocation8 + $0x3e8] sm:$0xff]
        %v1196 = vld [vmem:[#allocation8 + $0x3f0] sm:$0xff]
        %v1197 = vld [vmem:[#allocation8 + $0x3f8] sm:$0xff]
        %s1198 = scalar_lea.vmem [#allocation5], 16
        %v1199 = vld [vmem:[%s1198] sm:$0xf]
        %v1200 = vld [vmem:[%s1198 + $0x4] sm:$0xf]
        %v1201 = vld [vmem:[%s1198 + $0x8] sm:$0xf]
        %v1202 = vld [vmem:[%s1198 + $0xc] sm:$0xf]
        %v1207 = vunpack.c.l.b16 %v1199
        %v1208 = vunpack.c.l.b16 %v1200
        %v1209 = vunpack.c.l.b16 %v1201
        %v1210 = vunpack.c.l.b16 %v1202
        %v1211 = vpack.c.b16 %v1208, %v1207
        %v1212 = vpack.c.b16 %v1210, %v1209
        %v1214 = vsel %vm949, %v1211, 0
        %v1217 = vsel %vm949, %v1212, 0
        %1219 = vmatprep.subr.bf16.mxu0 %v927
        %1220 = vmatpush1.bf16.msra.mxu0 %v926
        %1221 = vmatprep.subr.bf16.mxu0 %v931
        %1222 = vmatpush1.bf16.msra.mxu0 %v930
        %1223 = vmatprep.subr.bf16.mxu0 0
        %1224 = vmatpush1.bf16.msra.mxu0 0
        %1225 = vmatprep.subr.bf16.mxu0 0
        %1226 = vmatpush1.bf16.msra.mxu0 0
        %1227 = vmatprep.subr.bf16.mxu0 0
        %1228 = vmatpush1.bf16.msra.mxu0 0
        %1229 = vmatprep.subr.bf16.mxu0 0
        %1230 = vmatpush1.bf16.msra.mxu0 0
        %1231 = vmatprep.subr.bf16.mxu0 0
        %1232 = vmatpush1.bf16.msra.mxu0 0
        %1233 = vmatprep.subr.bf16.mxu0 0
        %1234 = vmatpush1.bf16.msra.mxu0 0
        %1235 = vmatprep.subr.bf16.mxu0 0
        %1236 = vmatpush1.bf16.msra.mxu0 0
        %1237 = vmatprep.subr.bf16.mxu0 0
        %1238 = vmatpush1.bf16.msra.mxu0 0
        %1239 = vmatprep.subr.bf16.mxu0 0
        %1240 = vmatpush1.bf16.msra.mxu0 0
        %1241 = vmatprep.subr.bf16.mxu0 0
        %1242 = vmatpush1.bf16.msra.mxu0 0
        %1243 = vmatprep.subr.bf16.mxu0 0
        %1244 = vmatpush1.bf16.msra.mxu0 0
        %1245 = vmatprep.subr.bf16.mxu0 0
        %1246 = vmatpush1.bf16.msra.mxu0 0
        %1247 = vmatprep.subr.bf16.mxu0 0
        %1248 = vmatpush1.bf16.msra.mxu0 0
        %1249 = vmatprep.subr.bf16.mxu0 0
        %1250 = vmatpush1.bf16.msra.mxu0 0
        %1251 = vmatprep.mubr.bf16.mxu0 0
        %1252 = vmatmul.mubr.bf16.gmra.mrb[0].mxu0 %v1214
        %v1253 = vpop.f32.mrb[0].mxu0
        %v1254 = vadd.f32 0.0, %v1253
        %v1255 = vpop.f32.mrb[0].mxu0
        %v1256 = vadd.f32 0.0, %v1255
        %v1257 = vpop.f32.mrb[0].mxu0
        %v1258 = vadd.f32 0.0, %v1257
        %v1259 = vpop.f32.mrb[0].mxu0
        %v1260 = vadd.f32 0.0, %v1259
        %1261 = vmatprep.mubr.bf16.mxu0 0
        %1262 = vmatmul.mubr.bf16.gmra.mrb[0].mxu0 %v1217
        %v1263 = vpop.f32.mrb[0].mxu0
        %v1264 = vadd.f32 0.0, %v1263
        %v1265 = vpop.f32.mrb[0].mxu0
        %v1266 = vadd.f32 0.0, %v1265
        %v1267 = vpop.f32.mrb[0].mxu0
        %v1268 = vadd.f32 0.0, %v1267
        %v1269 = vpop.f32.mrb[0].mxu0
        %v1270 = vadd.f32 0.0, %v1269
        %1271 = vdwg.mxu0
        %1272 = vmatprep.subr.bf16.mxu0 %v929
        %1273 = vmatpush1.bf16.msra.mxu0 %v928
        %1274 = vmatprep.subr.bf16.mxu0 %v933
        %1275 = vmatpush1.bf16.msra.mxu0 %v932
        %1276 = vmatprep.subr.bf16.mxu0 0
        %1277 = vmatpush1.bf16.msra.mxu0 0
        %1278 = vmatprep.subr.bf16.mxu0 0
        %1279 = vmatpush1.bf16.msra.mxu0 0
        %1280 = vmatprep.subr.bf16.mxu0 0
        %1281 = vmatpush1.bf16.msra.mxu0 0
        %1282 = vmatprep.subr.bf16.mxu0 0
        %1283 = vmatpush1.bf16.msra.mxu0 0
        %1284 = vmatprep.subr.bf16.mxu0 0
        %1285 = vmatpush1.bf16.msra.mxu0 0
        %1286 = vmatprep.subr.bf16.mxu0 0
        %1287 = vmatpush1.bf16.msra.mxu0 0
        %1288 = vmatprep.subr.bf16.mxu0 0
        %1289 = vmatpush1.bf16.msra.mxu0 0
        %1290 = vmatprep.subr.bf16.mxu0 0
        %1291 = vmatpush1.bf16.msra.mxu0 0
        %1292 = vmatprep.subr.bf16.mxu0 0
        %1293 = vmatpush1.bf16.msra.mxu0 0
        %1294 = vmatprep.subr.bf16.mxu0 0
        %1295 = vmatpush1.bf16.msra.mxu0 0
        %1296 = vmatprep.subr.bf16.mxu0 0
        %1297 = vmatpush1.bf16.msra.mxu0 0
        %1298 = vmatprep.subr.bf16.mxu0 0
        %1299 = vmatpush1.bf16.msra.mxu0 0
        %1300 = vmatprep.subr.bf16.mxu0 0
        %1301 = vmatpush1.bf16.msra.mxu0 0
        %1302 = vmatprep.subr.bf16.mxu0 0
        %1303 = vmatpush1.bf16.msra.mxu0 0
        %1304 = vmatprep.mubr.bf16.mxu0 0
        %1305 = vmatmul.mubr.bf16.gmra.mrb[0].mxu0 %v1214
        %v1306 = vpop.f32.mrb[0].mxu0
        %v1307 = vadd.f32 0.0, %v1306
        %v1308 = vpop.f32.mrb[0].mxu0
        %v1309 = vadd.f32 0.0, %v1308
        %v1310 = vpop.f32.mrb[0].mxu0
        %v1311 = vadd.f32 0.0, %v1310
        %v1312 = vpop.f32.mrb[0].mxu0
        %v1313 = vadd.f32 0.0, %v1312
        %1314 = vmatprep.mubr.bf16.mxu0 0
        %1315 = vmatmul.mubr.bf16.gmra.mrb[0].mxu0 %v1217
        %v1316 = vpop.f32.mrb[0].mxu0
        %v1317 = vadd.f32 0.0, %v1316
        %v1318 = vpop.f32.mrb[0].mxu0
        %v1319 = vadd.f32 0.0, %v1318
        %v1320 = vpop.f32.mrb[0].mxu0
        %v1321 = vadd.f32 0.0, %v1320
        %v1322 = vpop.f32.mrb[0].mxu0
        %v1323 = vadd.f32 0.0, %v1322
        %1324 = vdwg.mxu0
        %v1325 = vpack.c.bf16 %v1258, %v1254
        %v1326 = vpack.c.bf16 %v1260, %v1256
        %v1327 = vpack.c.bf16 %v1311, %v1307
        %v1328 = vpack.c.bf16 %v1313, %v1309
        %v1329 = vpack.c.bf16 %v1268, %v1264
        %v1330 = vpack.c.bf16 %v1270, %v1266
        %v1331 = vpack.c.bf16 %v1321, %v1317
        %v1332 = vpack.c.bf16 %v1323, %v1319
        %s1333 = scalar_lea.vmem [#allocation8], 1024
        %v1334 = vld [vmem:[%s1333] sm:$0xff]
        %v1335 = vld [vmem:[%s1333 + $0x8] sm:$0xff]
        %v1336 = vld [vmem:[%s1333 + $0x10] sm:$0xff]
        %v1337 = vld [vmem:[%s1333 + $0x18] sm:$0xff]
        %v1338 = vld [vmem:[%s1333 + $0x20] sm:$0xff]
        %v1339 = vld [vmem:[%s1333 + $0x28] sm:$0xff]
        %v1340 = vld [vmem:[%s1333 + $0x30] sm:$0xff]
        %v1341 = vld [vmem:[%s1333 + $0x38] sm:$0xff]
        %v1342 = vld [vmem:[%s1333 + $0x40] sm:$0xff]
        %v1343 = vld [vmem:[%s1333 + $0x48] sm:$0xff]
        %v1344 = vld [vmem:[%s1333 + $0x50] sm:$0xff]
        %v1345 = vld [vmem:[%s1333 + $0x58] sm:$0xff]
        %v1346 = vld [vmem:[%s1333 + $0x60] sm:$0xff]
        %v1347 = vld [vmem:[%s1333 + $0x68] sm:$0xff]
        %v1348 = vld [vmem:[%s1333 + $0x70] sm:$0xff]
        %v1349 = vld [vmem:[%s1333 + $0x78] sm:$0xff]
        %v1350 = vld [vmem:[%s1333 + $0x80] sm:$0xff]
        %v1351 = vld [vmem:[%s1333 + $0x88] sm:$0xff]
        %v1352 = vld [vmem:[%s1333 + $0x90] sm:$0xff]
        %v1353 = vld [vmem:[%s1333 + $0x98] sm:$0xff]
        %v1354 = vld [vmem:[%s1333 + $0xa0] sm:$0xff]
        %v1355 = vld [vmem:[%s1333 + $0xa8] sm:$0xff]
        %v1356 = vld [vmem:[%s1333 + $0xb0] sm:$0xff]
        %v1357 = vld [vmem:[%s1333 + $0xb8] sm:$0xff]
        %v1358 = vld [vmem:[%s1333 + $0xc0] sm:$0xff]
        %v1359 = vld [vmem:[%s1333 + $0xc8] sm:$0xff]
        %v1360 = vld [vmem:[%s1333 + $0xd0] sm:$0xff]
        %v1361 = vld [vmem:[%s1333 + $0xd8] sm:$0xff]
        %v1362 = vld [vmem:[%s1333 + $0xe0] sm:$0xff]
        %v1363 = vld [vmem:[%s1333 + $0xe8] sm:$0xff]
        %v1364 = vld [vmem:[%s1333 + $0xf0] sm:$0xff]
        %v1365 = vld [vmem:[%s1333 + $0xf8] sm:$0xff]
        %v1366 = vld [vmem:[%s1333 + $0x100] sm:$0xff]
        %v1367 = vld [vmem:[%s1333 + $0x108] sm:$0xff]
        %v1368 = vld [vmem:[%s1333 + $0x110] sm:$0xff]
        %v1369 = vld [vmem:[%s1333 + $0x118] sm:$0xff]
        %v1370 = vld [vmem:[%s1333 + $0x120] sm:$0xff]
        %v1371 = vld [vmem:[%s1333 + $0x128] sm:$0xff]
        %v1372 = vld [vmem:[%s1333 + $0x130] sm:$0xff]
        %v1373 = vld [vmem:[%s1333 + $0x138] sm:$0xff]
        %v1374 = vld [vmem:[%s1333 + $0x140] sm:$0xff]
        %v1375 = vld [vmem:[%s1333 + $0x148] sm:$0xff]
        %v1376 = vld [vmem:[%s1333 + $0x150] sm:$0xff]
        %v1377 = vld [vmem:[%s1333 + $0x158] sm:$0xff]
        %v1378 = vld [vmem:[%s1333 + $0x160] sm:$0xff]
        %v1379 = vld [vmem:[%s1333 + $0x168] sm:$0xff]
        %v1380 = vld [vmem:[%s1333 + $0x170] sm:$0xff]
        %v1381 = vld [vmem:[%s1333 + $0x178] sm:$0xff]
        %v1382 = vld [vmem:[%s1333 + $0x180] sm:$0xff]
        %v1383 = vld [vmem:[%s1333 + $0x188] sm:$0xff]
        %v1384 = vld [vmem:[%s1333 + $0x190] sm:$0xff]
        %v1385 = vld [vmem:[%s1333 + $0x198] sm:$0xff]
        %v1386 = vld [vmem:[%s1333 + $0x1a0] sm:$0xff]
        %v1387 = vld [vmem:[%s1333 + $0x1a8] sm:$0xff]
        %v1388 = vld [vmem:[%s1333 + $0x1b0] sm:$0xff]
        %v1389 = vld [vmem:[%s1333 + $0x1b8] sm:$0xff]
        %v1390 = vld [vmem:[%s1333 + $0x1c0] sm:$0xff]
        %v1391 = vld [vmem:[%s1333 + $0x1c8] sm:$0xff]
        %v1392 = vld [vmem:[%s1333 + $0x1d0] sm:$0xff]
        %v1393 = vld [vmem:[%s1333 + $0x1d8] sm:$0xff]
        %v1394 = vld [vmem:[%s1333 + $0x1e0] sm:$0xff]
        %v1395 = vld [vmem:[%s1333 + $0x1e8] sm:$0xff]
        %v1396 = vld [vmem:[%s1333 + $0x1f0] sm:$0xff]
        %v1397 = vld [vmem:[%s1333 + $0x1f8] sm:$0xff]
        %v1398 = vld [vmem:[%s1333 + $0x200] sm:$0xff]
        %v1399 = vld [vmem:[%s1333 + $0x208] sm:$0xff]
        %v1400 = vld [vmem:[%s1333 + $0x210] sm:$0xff]
        %v1401 = vld [vmem:[%s1333 + $0x218] sm:$0xff]
        %v1402 = vld [vmem:[%s1333 + $0x220] sm:$0xff]
        %v1403 = vld [vmem:[%s1333 + $0x228] sm:$0xff]
        %v1404 = vld [vmem:[%s1333 + $0x230] sm:$0xff]
        %v1405 = vld [vmem:[%s1333 + $0x238] sm:$0xff]
        %v1406 = vld [vmem:[%s1333 + $0x240] sm:$0xff]
        %v1407 = vld [vmem:[%s1333 + $0x248] sm:$0xff]
        %v1408 = vld [vmem:[%s1333 + $0x250] sm:$0xff]
        %v1409 = vld [vmem:[%s1333 + $0x258] sm:$0xff]
        %v1410 = vld [vmem:[%s1333 + $0x260] sm:$0xff]
        %v1411 = vld [vmem:[%s1333 + $0x268] sm:$0xff]
        %v1412 = vld [vmem:[%s1333 + $0x270] sm:$0xff]
        %v1413 = vld [vmem:[%s1333 + $0x278] sm:$0xff]
        %v1414 = vld [vmem:[%s1333 + $0x280] sm:$0xff]
        %v1415 = vld [vmem:[%s1333 + $0x288] sm:$0xff]
        %v1416 = vld [vmem:[%s1333 + $0x290] sm:$0xff]
        %v1417 = vld [vmem:[%s1333 + $0x298] sm:$0xff]
        %v1418 = vld [vmem:[%s1333 + $0x2a0] sm:$0xff]
        %v1419 = vld [vmem:[%s1333 + $0x2a8] sm:$0xff]
        %v1420 = vld [vmem:[%s1333 + $0x2b0] sm:$0xff]
        %v1421 = vld [vmem:[%s1333 + $0x2b8] sm:$0xff]
        %v1422 = vld [vmem:[%s1333 + $0x2c0] sm:$0xff]
        %v1423 = vld [vmem:[%s1333 + $0x2c8] sm:$0xff]
        %v1424 = vld [vmem:[%s1333 + $0x2d0] sm:$0xff]
        %v1425 = vld [vmem:[%s1333 + $0x2d8] sm:$0xff]
        %v1426 = vld [vmem:[%s1333 + $0x2e0] sm:$0xff]
        %v1427 = vld [vmem:[%s1333 + $0x2e8] sm:$0xff]
        %v1428 = vld [vmem:[%s1333 + $0x2f0] sm:$0xff]
        %v1429 = vld [vmem:[%s1333 + $0x2f8] sm:$0xff]
        %v1430 = vld [vmem:[%s1333 + $0x300] sm:$0xff]
        %v1431 = vld [vmem:[%s1333 + $0x308] sm:$0xff]
        %v1432 = vld [vmem:[%s1333 + $0x310] sm:$0xff]
        %v1433 = vld [vmem:[%s1333 + $0x318] sm:$0xff]
        %v1434 = vld [vmem:[%s1333 + $0x320] sm:$0xff]
        %v1435 = vld [vmem:[%s1333 + $0x328] sm:$0xff]
        %v1436 = vld [vmem:[%s1333 + $0x330] sm:$0xff]
        %v1437 = vld [vmem:[%s1333 + $0x338] sm:$0xff]
        %v1438 = vld [vmem:[%s1333 + $0x340] sm:$0xff]
        %v1439 = vld [vmem:[%s1333 + $0x348] sm:$0xff]
        %v1440 = vld [vmem:[%s1333 + $0x350] sm:$0xff]
        %v1441 = vld [vmem:[%s1333 + $0x358] sm:$0xff]
        %v1442 = vld [vmem:[%s1333 + $0x360] sm:$0xff]
        %v1443 = vld [vmem:[%s1333 + $0x368] sm:$0xff]
        %v1444 = vld [vmem:[%s1333 + $0x370] sm:$0xff]
        %v1445 = vld [vmem:[%s1333 + $0x378] sm:$0xff]
        %v1446 = vld [vmem:[%s1333 + $0x380] sm:$0xff]
        %v1447 = vld [vmem:[%s1333 + $0x388] sm:$0xff]
        %v1448 = vld [vmem:[%s1333 + $0x390] sm:$0xff]
        %v1449 = vld [vmem:[%s1333 + $0x398] sm:$0xff]
        %v1450 = vld [vmem:[%s1333 + $0x3a0] sm:$0xff]
        %v1451 = vld [vmem:[%s1333 + $0x3a8] sm:$0xff]
        %v1452 = vld [vmem:[%s1333 + $0x3b0] sm:$0xff]
        %v1453 = vld [vmem:[%s1333 + $0x3b8] sm:$0xff]
        %v1454 = vld [vmem:[%s1333 + $0x3c0] sm:$0xff]
        %v1455 = vld [vmem:[%s1333 + $0x3c8] sm:$0xff]
        %v1456 = vld [vmem:[%s1333 + $0x3d0] sm:$0xff]
        %v1457 = vld [vmem:[%s1333 + $0x3d8] sm:$0xff]
        %v1458 = vld [vmem:[%s1333 + $0x3e0] sm:$0xff]
        %v1459 = vld [vmem:[%s1333 + $0x3e8] sm:$0xff]
        %v1460 = vld [vmem:[%s1333 + $0x3f0] sm:$0xff]
        %v1461 = vld [vmem:[%s1333 + $0x3f8] sm:$0xff]
        %v1590 = vunpack.c.l.b16 %v1334
        %v1591 = vunpack.c.h.b16 %v1334
        %v1592 = vunpack.c.l.b16 %v1335
        %v1593 = vunpack.c.h.b16 %v1335
        %v1594 = vunpack.c.l.b16 %v1336
        %v1595 = vunpack.c.h.b16 %v1336
        %v1596 = vunpack.c.l.b16 %v1337
        %v1597 = vunpack.c.h.b16 %v1337
        %v1598 = vunpack.c.l.b16 %v1338
        %v1599 = vunpack.c.h.b16 %v1338
        %v1600 = vunpack.c.l.b16 %v1339
        %v1601 = vunpack.c.h.b16 %v1339
        %v1602 = vunpack.c.l.b16 %v1340
        %v1603 = vunpack.c.h.b16 %v1340
        %v1604 = vunpack.c.l.b16 %v1341
        %v1605 = vunpack.c.h.b16 %v1341
        %v1606 = vunpack.c.l.b16 %v1342
        %v1607 = vunpack.c.h.b16 %v1342
        %v1608 = vunpack.c.l.b16 %v1343
        %v1609 = vunpack.c.h.b16 %v1343
        %v1610 = vunpack.c.l.b16 %v1344
        %v1611 = vunpack.c.h.b16 %v1344
        %v1612 = vunpack.c.l.b16 %v1345
        %v1613 = vunpack.c.h.b16 %v1345
        %v1614 = vunpack.c.l.b16 %v1346
        %v1615 = vunpack.c.h.b16 %v1346
        %v1616 = vunpack.c.l.b16 %v1347
        %v1617 = vunpack.c.h.b16 %v1347
        %v1618 = vunpack.c.l.b16 %v1348
        %v1619 = vunpack.c.h.b16 %v1348
        %v1620 = vunpack.c.l.b16 %v1349
        %v1621 = vunpack.c.h.b16 %v1349
        %v1622 = vunpack.c.l.b16 %v1350
        %v1623 = vunpack.c.h.b16 %v1350
        %v1624 = vunpack.c.l.b16 %v1351
        %v1625 = vunpack.c.h.b16 %v1351
        %v1626 = vunpack.c.l.b16 %v1352
        %v1627 = vunpack.c.h.b16 %v1352
        %v1628 = vunpack.c.l.b16 %v1353
        %v1629 = vunpack.c.h.b16 %v1353
        %v1630 = vunpack.c.l.b16 %v1354
        %v1631 = vunpack.c.h.b16 %v1354
        %v1632 = vunpack.c.l.b16 %v1355
        %v1633 = vunpack.c.h.b16 %v1355
        %v1634 = vunpack.c.l.b16 %v1356
        %v1635 = vunpack.c.h.b16 %v1356
        %v1636 = vunpack.c.l.b16 %v1357
        %v1637 = vunpack.c.h.b16 %v1357
        %v1638 = vunpack.c.l.b16 %v1358
        %v1639 = vunpack.c.h.b16 %v1358
        %v1640 = vunpack.c.l.b16 %v1359
        %v1641 = vunpack.c.h.b16 %v1359
        %v1642 = vunpack.c.l.b16 %v1360
        %v1643 = vunpack.c.h.b16 %v1360
        %v1644 = vunpack.c.l.b16 %v1361
        %v1645 = vunpack.c.h.b16 %v1361
        %v1646 = vunpack.c.l.b16 %v1362
        %v1647 = vunpack.c.h.b16 %v1362
        %v1648 = vunpack.c.l.b16 %v1363
        %v1649 = vunpack.c.h.b16 %v1363
        %v1650 = vunpack.c.l.b16 %v1364
        %v1651 = vunpack.c.h.b16 %v1364
        %v1652 = vunpack.c.l.b16 %v1365
        %v1653 = vunpack.c.h.b16 %v1365
        %v1654 = vunpack.c.l.b16 %v1366
        %v1655 = vunpack.c.h.b16 %v1366
        %v1656 = vunpack.c.l.b16 %v1367
        %v1657 = vunpack.c.h.b16 %v1367
        %v1658 = vunpack.c.l.b16 %v1368
        %v1659 = vunpack.c.h.b16 %v1368
        %v1660 = vunpack.c.l.b16 %v1369
        %v1661 = vunpack.c.h.b16 %v1369
        %v1662 = vunpack.c.l.b16 %v1370
        %v1663 = vunpack.c.h.b16 %v1370
        %v1664 = vunpack.c.l.b16 %v1371
        %v1665 = vunpack.c.h.b16 %v1371
        %v1666 = vunpack.c.l.b16 %v1372
        %v1667 = vunpack.c.h.b16 %v1372
        %v1668 = vunpack.c.l.b16 %v1373
        %v1669 = vunpack.c.h.b16 %v1373
        %v1670 = vunpack.c.l.b16 %v1374
        %v1671 = vunpack.c.h.b16 %v1374
        %v1672 = vunpack.c.l.b16 %v1375
        %v1673 = vunpack.c.h.b16 %v1375
        %v1674 = vunpack.c.l.b16 %v1376
        %v1675 = vunpack.c.h.b16 %v1376
        %v1676 = vunpack.c.l.b16 %v1377
        %v1677 = vunpack.c.h.b16 %v1377
        %v1678 = vunpack.c.l.b16 %v1378
        %v1679 = vunpack.c.h.b16 %v1378
        %v1680 = vunpack.c.l.b16 %v1379
        %v1681 = vunpack.c.h.b16 %v1379
        %v1682 = vunpack.c.l.b16 %v1380
        %v1683 = vunpack.c.h.b16 %v1380
        %v1684 = vunpack.c.l.b16 %v1381
        %v1685 = vunpack.c.h.b16 %v1381
        %v1686 = vunpack.c.l.b16 %v1382
        %v1687 = vunpack.c.h.b16 %v1382
        %v1688 = vunpack.c.l.b16 %v1383
        %v1689 = vunpack.c.h.b16 %v1383
        %v1690 = vunpack.c.l.b16 %v1384
        %v1691 = vunpack.c.h.b16 %v1384
        %v1692 = vunpack.c.l.b16 %v1385
        %v1693 = vunpack.c.h.b16 %v1385
        %v1694 = vunpack.c.l.b16 %v1386
        %v1695 = vunpack.c.h.b16 %v1386
        %v1696 = vunpack.c.l.b16 %v1387
        %v1697 = vunpack.c.h.b16 %v1387
        %v1698 = vunpack.c.l.b16 %v1388
        %v1699 = vunpack.c.h.b16 %v1388
        %v1700 = vunpack.c.l.b16 %v1389
        %v1701 = vunpack.c.h.b16 %v1389
        %v1702 = vunpack.c.l.b16 %v1390
        %v1703 = vunpack.c.h.b16 %v1390
        %v1704 = vunpack.c.l.b16 %v1391
        %v1705 = vunpack.c.h.b16 %v1391
        %v1706 = vunpack.c.l.b16 %v1392
        %v1707 = vunpack.c.h.b16 %v1392
        %v1708 = vunpack.c.l.b16 %v1393
        %v1709 = vunpack.c.h.b16 %v1393
        %v1710 = vunpack.c.l.b16 %v1394
        %v1711 = vunpack.c.h.b16 %v1394
        %v1712 = vunpack.c.l.b16 %v1395
        %v1713 = vunpack.c.h.b16 %v1395
        %v1714 = vunpack.c.l.b16 %v1396
        %v1715 = vunpack.c.h.b16 %v1396
        %v1716 = vunpack.c.l.b16 %v1397
        %v1717 = vunpack.c.h.b16 %v1397
        %v1718 = vunpack.c.l.b16 %v1398
        %v1719 = vunpack.c.h.b16 %v1398
        %v1720 = vunpack.c.l.b16 %v1399
        %v1721 = vunpack.c.h.b16 %v1399
        %v1722 = vunpack.c.l.b16 %v1400
        %v1723 = vunpack.c.h.b16 %v1400
        %v1724 = vunpack.c.l.b16 %v1401
        %v1725 = vunpack.c.h.b16 %v1401
        %v1726 = vunpack.c.l.b16 %v1402
        %v1727 = vunpack.c.h.b16 %v1402
        %v1728 = vunpack.c.l.b16 %v1403
        %v1729 = vunpack.c.h.b16 %v1403
        %v1730 = vunpack.c.l.b16 %v1404
        %v1731 = vunpack.c.h.b16 %v1404
        %v1732 = vunpack.c.l.b16 %v1405
        %v1733 = vunpack.c.h.b16 %v1405
        %v1734 = vunpack.c.l.b16 %v1406
        %v1735 = vunpack.c.h.b16 %v1406
        %v1736 = vunpack.c.l.b16 %v1407
        %v1737 = vunpack.c.h.b16 %v1407
        %v1738 = vunpack.c.l.b16 %v1408
        %v1739 = vunpack.c.h.b16 %v1408
        %v1740 = vunpack.c.l.b16 %v1409
        %v1741 = vunpack.c.h.b16 %v1409
        %v1742 = vunpack.c.l.b16 %v1410
        %v1743 = vunpack.c.h.b16 %v1410
        %v1744 = vunpack.c.l.b16 %v1411
        %v1745 = vunpack.c.h.b16 %v1411
        %v1746 = vunpack.c.l.b16 %v1412
        %v1747 = vunpack.c.h.b16 %v1412
        %v1748 = vunpack.c.l.b16 %v1413
        %v1749 = vunpack.c.h.b16 %v1413
        %v1750 = vunpack.c.l.b16 %v1414
        %v1751 = vunpack.c.h.b16 %v1414
        %v1752 = vunpack.c.l.b16 %v1415
        %v1753 = vunpack.c.h.b16 %v1415
        %v1754 = vunpack.c.l.b16 %v1416
        %v1755 = vunpack.c.h.b16 %v1416
        %v1756 = vunpack.c.l.b16 %v1417
        %v1757 = vunpack.c.h.b16 %v1417
        %v1758 = vunpack.c.l.b16 %v1418
        %v1759 = vunpack.c.h.b16 %v1418
        %v1760 = vunpack.c.l.b16 %v1419
        %v1761 = vunpack.c.h.b16 %v1419
        %v1762 = vunpack.c.l.b16 %v1420
        %v1763 = vunpack.c.h.b16 %v1420
        %v1764 = vunpack.c.l.b16 %v1421
        %v1765 = vunpack.c.h.b16 %v1421
        %v1766 = vunpack.c.l.b16 %v1422
        %v1767 = vunpack.c.h.b16 %v1422
        %v1768 = vunpack.c.l.b16 %v1423
        %v1769 = vunpack.c.h.b16 %v1423
        %v1770 = vunpack.c.l.b16 %v1424
        %v1771 = vunpack.c.h.b16 %v1424
        %v1772 = vunpack.c.l.b16 %v1425
        %v1773 = vunpack.c.h.b16 %v1425
        %v1774 = vunpack.c.l.b16 %v1426
        %v1775 = vunpack.c.h.b16 %v1426
        %v1776 = vunpack.c.l.b16 %v1427
        %v1777 = vunpack.c.h.b16 %v1427
        %v1778 = vunpack.c.l.b16 %v1428
        %v1779 = vunpack.c.h.b16 %v1428
        %v1780 = vunpack.c.l.b16 %v1429
        %v1781 = vunpack.c.h.b16 %v1429
        %v1782 = vunpack.c.l.b16 %v1430
        %v1783 = vunpack.c.h.b16 %v1430
        %v1784 = vunpack.c.l.b16 %v1431
        %v1785 = vunpack.c.h.b16 %v1431
        %v1786 = vunpack.c.l.b16 %v1432
        %v1787 = vunpack.c.h.b16 %v1432
        %v1788 = vunpack.c.l.b16 %v1433
        %v1789 = vunpack.c.h.b16 %v1433
        %v1790 = vunpack.c.l.b16 %v1434
        %v1791 = vunpack.c.h.b16 %v1434
        %v1792 = vunpack.c.l.b16 %v1435
        %v1793 = vunpack.c.h.b16 %v1435
        %v1794 = vunpack.c.l.b16 %v1436
        %v1795 = vunpack.c.h.b16 %v1436
        %v1796 = vunpack.c.l.b16 %v1437
        %v1797 = vunpack.c.h.b16 %v1437
        %v1798 = vunpack.c.l.b16 %v1438
        %v1799 = vunpack.c.h.b16 %v1438
        %v1800 = vunpack.c.l.b16 %v1439
        %v1801 = vunpack.c.h.b16 %v1439
        %v1802 = vunpack.c.l.b16 %v1440
        %v1803 = vunpack.c.h.b16 %v1440
        %v1804 = vunpack.c.l.b16 %v1441
        %v1805 = vunpack.c.h.b16 %v1441
        %v1806 = vunpack.c.l.b16 %v1442
        %v1807 = vunpack.c.h.b16 %v1442
        %v1808 = vunpack.c.l.b16 %v1443
        %v1809 = vunpack.c.h.b16 %v1443
        %v1810 = vunpack.c.l.b16 %v1444
        %v1811 = vunpack.c.h.b16 %v1444
        %v1812 = vunpack.c.l.b16 %v1445
        %v1813 = vunpack.c.h.b16 %v1445
        %v1814 = vunpack.c.l.b16 %v1446
        %v1815 = vunpack.c.h.b16 %v1446
        %v1816 = vunpack.c.l.b16 %v1447
        %v1817 = vunpack.c.h.b16 %v1447
        %v1818 = vunpack.c.l.b16 %v1448
        %v1819 = vunpack.c.h.b16 %v1448
        %v1820 = vunpack.c.l.b16 %v1449
        %v1821 = vunpack.c.h.b16 %v1449
        %v1822 = vunpack.c.l.b16 %v1450
        %v1823 = vunpack.c.h.b16 %v1450
        %v1824 = vunpack.c.l.b16 %v1451
        %v1825 = vunpack.c.h.b16 %v1451
        %v1826 = vunpack.c.l.b16 %v1452
        %v1827 = vunpack.c.h.b16 %v1452
        %v1828 = vunpack.c.l.b16 %v1453
        %v1829 = vunpack.c.h.b16 %v1453
        %v1830 = vunpack.c.l.b16 %v1454
        %v1831 = vunpack.c.h.b16 %v1454
        %v1832 = vunpack.c.l.b16 %v1455
        %v1833 = vunpack.c.h.b16 %v1455
        %v1834 = vunpack.c.l.b16 %v1456
        %v1835 = vunpack.c.h.b16 %v1456
        %v1836 = vunpack.c.l.b16 %v1457
        %v1837 = vunpack.c.h.b16 %v1457
        %v1838 = vunpack.c.l.b16 %v1458
        %v1839 = vunpack.c.h.b16 %v1458
        %v1840 = vunpack.c.l.b16 %v1459
        %v1841 = vunpack.c.h.b16 %v1459
        %v1842 = vunpack.c.l.b16 %v1460
        %v1843 = vunpack.c.h.b16 %v1460
        %v1844 = vunpack.c.l.b16 %v1461
        %v1845 = vunpack.c.h.b16 %v1461
        %v1846 = vpack.c.b16 %v1594, %v1590
        %v1847 = vpack.c.b16 %v1595, %v1591
        %v1848 = vpack.c.b16 %v1596, %v1592
        %v1849 = vpack.c.b16 %v1597, %v1593
        %v1850 = vpack.c.b16 %v1602, %v1598
        %v1851 = vpack.c.b16 %v1603, %v1599
        %v1852 = vpack.c.b16 %v1604, %v1600
        %v1853 = vpack.c.b16 %v1605, %v1601
        %v1854 = vpack.c.b16 %v1610, %v1606
        %v1855 = vpack.c.b16 %v1611, %v1607
        %v1856 = vpack.c.b16 %v1612, %v1608
        %v1857 = vpack.c.b16 %v1613, %v1609
        %v1858 = vpack.c.b16 %v1618, %v1614
        %v1859 = vpack.c.b16 %v1619, %v1615
        %v1860 = vpack.c.b16 %v1620, %v1616
        %v1861 = vpack.c.b16 %v1621, %v1617
        %v1862 = vpack.c.b16 %v1626, %v1622
        %v1863 = vpack.c.b16 %v1627, %v1623
        %v1864 = vpack.c.b16 %v1628, %v1624
        %v1865 = vpack.c.b16 %v1629, %v1625
        %v1866 = vpack.c.b16 %v1634, %v1630
        %v1867 = vpack.c.b16 %v1635, %v1631
        %v1868 = vpack.c.b16 %v1636, %v1632
        %v1869 = vpack.c.b16 %v1637, %v1633
        %v1870 = vpack.c.b16 %v1642, %v1638
        %v1871 = vpack.c.b16 %v1643, %v1639
        %v1872 = vpack.c.b16 %v1644, %v1640
        %v1873 = vpack.c.b16 %v1645, %v1641
        %v1874 = vpack.c.b16 %v1650, %v1646
        %v1875 = vpack.c.b16 %v1651, %v1647
        %v1876 = vpack.c.b16 %v1652, %v1648
        %v1877 = vpack.c.b16 %v1653, %v1649
        %v1878 = vpack.c.b16 %v1658, %v1654
        %v1879 = vpack.c.b16 %v1659, %v1655
        %v1880 = vpack.c.b16 %v1660, %v1656
        %v1881 = vpack.c.b16 %v1661, %v1657
        %v1882 = vpack.c.b16 %v1666, %v1662
        %v1883 = vpack.c.b16 %v1667, %v1663
        %v1884 = vpack.c.b16 %v1668, %v1664
        %v1885 = vpack.c.b16 %v1669, %v1665
        %v1886 = vpack.c.b16 %v1674, %v1670
        %v1887 = vpack.c.b16 %v1675, %v1671
        %v1888 = vpack.c.b16 %v1676, %v1672
        %v1889 = vpack.c.b16 %v1677, %v1673
        %v1890 = vpack.c.b16 %v1682, %v1678
        %v1891 = vpack.c.b16 %v1683, %v1679
        %v1892 = vpack.c.b16 %v1684, %v1680
        %v1893 = vpack.c.b16 %v1685, %v1681
        %v1894 = vpack.c.b16 %v1690, %v1686
        %v1895 = vpack.c.b16 %v1691, %v1687
        %v1896 = vpack.c.b16 %v1692, %v1688
        %v1897 = vpack.c.b16 %v1693, %v1689
        %v1898 = vpack.c.b16 %v1698, %v1694
        %v1899 = vpack.c.b16 %v1699, %v1695
        %v1900 = vpack.c.b16 %v1700, %v1696
        %v1901 = vpack.c.b16 %v1701, %v1697
        %v1902 = vpack.c.b16 %v1706, %v1702
        %v1903 = vpack.c.b16 %v1707, %v1703
        %v1904 = vpack.c.b16 %v1708, %v1704
        %v1905 = vpack.c.b16 %v1709, %v1705
        %v1906 = vpack.c.b16 %v1714, %v1710
        %v1907 = vpack.c.b16 %v1715, %v1711
        %v1908 = vpack.c.b16 %v1716, %v1712
        %v1909 = vpack.c.b16 %v1717, %v1713
        %v1910 = vpack.c.b16 %v1722, %v1718
        %v1911 = vpack.c.b16 %v1723, %v1719
        %v1912 = vpack.c.b16 %v1724, %v1720
        %v1913 = vpack.c.b16 %v1725, %v1721
        %v1914 = vpack.c.b16 %v1730, %v1726
        %v1915 = vpack.c.b16 %v1731, %v1727
        %v1916 = vpack.c.b16 %v1732, %v1728
        %v1917 = vpack.c.b16 %v1733, %v1729
        %v1918 = vpack.c.b16 %v1738, %v1734
        %v1919 = vpack.c.b16 %v1739, %v1735
        %v1920 = vpack.c.b16 %v1740, %v1736
        %v1921 = vpack.c.b16 %v1741, %v1737
        %v1922 = vpack.c.b16 %v1746, %v1742
        %v1923 = vpack.c.b16 %v1747, %v1743
        %v1924 = vpack.c.b16 %v1748, %v1744
        %v1925 = vpack.c.b16 %v1749, %v1745
        %v1926 = vpack.c.b16 %v1754, %v1750
        %v1927 = vpack.c.b16 %v1755, %v1751
        %v1928 = vpack.c.b16 %v1756, %v1752
        %v1929 = vpack.c.b16 %v1757, %v1753
        %v1930 = vpack.c.b16 %v1762, %v1758
        %v1931 = vpack.c.b16 %v1763, %v1759
        %v1932 = vpack.c.b16 %v1764, %v1760
        %v1933 = vpack.c.b16 %v1765, %v1761
        %v1934 = vpack.c.b16 %v1770, %v1766
        %v1935 = vpack.c.b16 %v1771, %v1767
        %v1936 = vpack.c.b16 %v1772, %v1768
        %v1937 = vpack.c.b16 %v1773, %v1769
        %v1938 = vpack.c.b16 %v1778, %v1774
        %v1939 = vpack.c.b16 %v1779, %v1775
        %v1940 = vpack.c.b16 %v1780, %v1776
        %v1941 = vpack.c.b16 %v1781, %v1777
        %v1942 = vpack.c.b16 %v1786, %v1782
        %v1943 = vpack.c.b16 %v1787, %v1783
        %v1944 = vpack.c.b16 %v1788, %v1784
        %v1945 = vpack.c.b16 %v1789, %v1785
        %v1946 = vpack.c.b16 %v1794, %v1790
        %v1947 = vpack.c.b16 %v1795, %v1791
        %v1948 = vpack.c.b16 %v1796, %v1792
        %v1949 = vpack.c.b16 %v1797, %v1793
        %v1950 = vpack.c.b16 %v1802, %v1798
        %v1951 = vpack.c.b16 %v1803, %v1799
        %v1952 = vpack.c.b16 %v1804, %v1800
        %v1953 = vpack.c.b16 %v1805, %v1801
        %v1954 = vpack.c.b16 %v1810, %v1806
        %v1955 = vpack.c.b16 %v1811, %v1807
        %v1956 = vpack.c.b16 %v1812, %v1808
        %v1957 = vpack.c.b16 %v1813, %v1809
        %v1958 = vpack.c.b16 %v1818, %v1814
        %v1959 = vpack.c.b16 %v1819, %v1815
        %v1960 = vpack.c.b16 %v1820, %v1816
        %v1961 = vpack.c.b16 %v1821, %v1817
        %v1962 = vpack.c.b16 %v1826, %v1822
        %v1963 = vpack.c.b16 %v1827, %v1823
        %v1964 = vpack.c.b16 %v1828, %v1824
        %v1965 = vpack.c.b16 %v1829, %v1825
        %v1966 = vpack.c.b16 %v1834, %v1830
        %v1967 = vpack.c.b16 %v1835, %v1831
        %v1968 = vpack.c.b16 %v1836, %v1832
        %v1969 = vpack.c.b16 %v1837, %v1833
        %v1970 = vpack.c.b16 %v1842, %v1838
        %v1971 = vpack.c.b16 %v1843, %v1839
        %v1972 = vpack.c.b16 %v1844, %v1840
        %v1973 = vpack.c.b16 %v1845, %v1841
        %2102 = vmatprep.subr.bf16.mxu0 %v1847
        %2103 = vmatpush1.bf16.msra.mxu0 %v1846
        %2104 = vmatprep.subr.bf16.mxu0 %v1851
        %2105 = vmatpush1.bf16.msra.mxu0 %v1850
        %2106 = vmatprep.subr.bf16.mxu0 %v1855
        %2107 = vmatpush1.bf16.msra.mxu0 %v1854
        %2108 = vmatprep.subr.bf16.mxu0 %v1859
        %2109 = vmatpush1.bf16.msra.mxu0 %v1858
        %2110 = vmatprep.subr.bf16.mxu0 %v1863
        %2111 = vmatpush1.bf16.msra.mxu0 %v1862
        %2112 = vmatprep.subr.bf16.mxu0 %v1867
        %2113 = vmatpush1.bf16.msra.mxu0 %v1866
        %2114 = vmatprep.subr.bf16.mxu0 %v1871
        %2115 = vmatpush1.bf16.msra.mxu0 %v1870
        %2116 = vmatprep.subr.bf16.mxu0 %v1875
        %2117 = vmatpush1.bf16.msra.mxu0 %v1874
        %2118 = vmatprep.subr.bf16.mxu0 %v1879
        %2119 = vmatpush1.bf16.msra.mxu0 %v1878
        %2120 = vmatprep.subr.bf16.mxu0 %v1883
        %2121 = vmatpush1.bf16.msra.mxu0 %v1882
        %2122 = vmatprep.subr.bf16.mxu0 %v1887
        %2123 = vmatpush1.bf16.msra.mxu0 %v1886
        %2124 = vmatprep.subr.bf16.mxu0 %v1891
        %2125 = vmatpush1.bf16.msra.mxu0 %v1890
        %2126 = vmatprep.subr.bf16.mxu0 %v1895
        %2127 = vmatpush1.bf16.msra.mxu0 %v1894
        %2128 = vmatprep.subr.bf16.mxu0 %v1899
        %2129 = vmatpush1.bf16.msra.mxu0 %v1898
        %2130 = vmatprep.subr.bf16.mxu0 %v1903
        %2131 = vmatpush1.bf16.msra.mxu0 %v1902
        %2132 = vmatprep.subr.bf16.mxu0 %v1907
        %2133 = vmatpush1.bf16.msra.mxu0 %v1906
        %2134 = vmatprep.mubr.bf16.mxu0 %v1326
        %2135 = vmatmul.mubr.bf16.gmra.mrb[0].mxu0 %v1325
        %v2136 = vpop.f32.mrb[0].mxu0
        %v2137 = vadd.f32 0.0, %v2136
        %v2138 = vpop.f32.mrb[0].mxu0
        %v2139 = vadd.f32 0.0, %v2138
        %v2140 = vpop.f32.mrb[0].mxu0
        %v2141 = vadd.f32 0.0, %v2140
        %v2142 = vpop.f32.mrb[0].mxu0
        %v2143 = vadd.f32 0.0, %v2142
        %2144 = vmatprep.mubr.bf16.mxu0 %v1330
        %2145 = vmatmul.mubr.bf16.gmra.mrb[0].mxu0 %v1329
        %v2146 = vpop.f32.mrb[0].mxu0
        %v2147 = vadd.f32 0.0, %v2146
        %v2148 = vpop.f32.mrb[0].mxu0
        %v2149 = vadd.f32 0.0, %v2148
        %v2150 = vpop.f32.mrb[0].mxu0
        %v2151 = vadd.f32 0.0, %v2150
        %v2152 = vpop.f32.mrb[0].mxu0
        %v2153 = vadd.f32 0.0, %v2152
        %2154 = vdwg.mxu0
        %2155 = vmatprep.subr.bf16.mxu0 %v1911
        %2156 = vmatpush1.bf16.msra.mxu0 %v1910
        %2157 = vmatprep.subr.bf16.mxu0 %v1915
        %2158 = vmatpush1.bf16.msra.mxu0 %v1914
        %2159 = vmatprep.subr.bf16.mxu0 %v1919
        %2160 = vmatpush1.bf16.msra.mxu0 %v1918
        %2161 = vmatprep.subr.bf16.mxu0 %v1923
        %2162 = vmatpush1.bf16.msra.mxu0 %v1922
        %2163 = vmatprep.subr.bf16.mxu0 %v1927
        %2164 = vmatpush1.bf16.msra.mxu0 %v1926
        %2165 = vmatprep.subr.bf16.mxu0 %v1931
        %2166 = vmatpush1.bf16.msra.mxu0 %v1930
        %2167 = vmatprep.subr.bf16.mxu0 %v1935
        %2168 = vmatpush1.bf16.msra.mxu0 %v1934
        %2169 = vmatprep.subr.bf16.mxu0 %v1939
        %2170 = vmatpush1.bf16.msra.mxu0 %v1938
        %2171 = vmatprep.subr.bf16.mxu0 %v1943
        %2172 = vmatpush1.bf16.msra.mxu0 %v1942
        %2173 = vmatprep.subr.bf16.mxu0 %v1947
        %2174 = vmatpush1.bf16.msra.mxu0 %v1946
        %2175 = vmatprep.subr.bf16.mxu0 %v1951
        %2176 = vmatpush1.bf16.msra.mxu0 %v1950
        %2177 = vmatprep.subr.bf16.mxu0 %v1955
        %2178 = vmatpush1.bf16.msra.mxu0 %v1954
        %2179 = vmatprep.subr.bf16.mxu0 %v1959
        %2180 = vmatpush1.bf16.msra.mxu0 %v1958
        %2181 = vmatprep.subr.bf16.mxu0 %v1963
        %2182 = vmatpush1.bf16.msra.mxu0 %v1962
        %2183 = vmatprep.subr.bf16.mxu0 %v1967
        %2184 = vmatpush1.bf16.msra.mxu0 %v1966
        %2185 = vmatprep.subr.bf16.mxu0 %v1971
        %2186 = vmatpush1.bf16.msra.mxu0 %v1970
        %2187 = vmatprep.mubr.bf16.mxu0 %v1328
        %2188 = vmatmul.mubr.bf16.gmra.mrb[0].mxu0 %v1327
        %v2189 = vpop.f32.mrb[0].mxu0
        %v2190 = vadd.f32 %v2137, %v2189
        %v2191 = vpop.f32.mrb[0].mxu0
        %v2192 = vadd.f32 %v2139, %v2191
        %v2193 = vpop.f32.mrb[0].mxu0
        %v2194 = vadd.f32 %v2141, %v2193
        %v2195 = vpop.f32.mrb[0].mxu0
        %v2196 = vadd.f32 %v2143, %v2195
        %2197 = vmatprep.mubr.bf16.mxu0 %v1332
        %2198 = vmatmul.mubr.bf16.gmra.mrb[0].mxu0 %v1331
        %v2199 = vpop.f32.mrb[0].mxu0
        %v2200 = vadd.f32 %v2147, %v2199
        %v2201 = vpop.f32.mrb[0].mxu0
        %v2202 = vadd.f32 %v2149, %v2201
        %v2203 = vpop.f32.mrb[0].mxu0
        %v2204 = vadd.f32 %v2151, %v2203
        %v2205 = vpop.f32.mrb[0].mxu0
        %v2206 = vadd.f32 %v2153, %v2205
        %2207 = vdwg.mxu0
        %2208 = vmatprep.subr.bf16.mxu0 %v1849
        %2209 = vmatpush1.bf16.msra.mxu0 %v1848
        %2210 = vmatprep.subr.bf16.mxu0 %v1853
        %2211 = vmatpush1.bf16.msra.mxu0 %v1852
        %2212 = vmatprep.subr.bf16.mxu0 %v1857
        %2213 = vmatpush1.bf16.msra.mxu0 %v1856
        %2214 = vmatprep.subr.bf16.mxu0 %v1861
        %2215 = vmatpush1.bf16.msra.mxu0 %v1860
        %2216 = vmatprep.subr.bf16.mxu0 %v1865
        %2217 = vmatpush1.bf16.msra.mxu0 %v1864
        %2218 = vmatprep.subr.bf16.mxu0 %v1869
        %2219 = vmatpush1.bf16.msra.mxu0 %v1868
        %2220 = vmatprep.subr.bf16.mxu0 %v1873
        %2221 = vmatpush1.bf16.msra.mxu0 %v1872
        %2222 = vmatprep.subr.bf16.mxu0 %v1877
        %2223 = vmatpush1.bf16.msra.mxu0 %v1876
        %2224 = vmatprep.subr.bf16.mxu0 %v1881
        %2225 = vmatpush1.bf16.msra.mxu0 %v1880
        %2226 = vmatprep.subr.bf16.mxu0 %v1885
        %2227 = vmatpush1.bf16.msra.mxu0 %v1884
        %2228 = vmatprep.subr.bf16.mxu0 %v1889
        %2229 = vmatpush1.bf16.msra.mxu0 %v1888
        %2230 = vmatprep.subr.bf16.mxu0 %v1893
        %2231 = vmatpush1.bf16.msra.mxu0 %v1892
        %2232 = vmatprep.subr.bf16.mxu0 %v1897
        %2233 = vmatpush1.bf16.msra.mxu0 %v1896
        %2234 = vmatprep.subr.bf16.mxu0 %v1901
        %2235 = vmatpush1.bf16.msra.mxu0 %v1900
        %2236 = vmatprep.subr.bf16.mxu0 %v1905
        %2237 = vmatpush1.bf16.msra.mxu0 %v1904
        %2238 = vmatprep.subr.bf16.mxu0 %v1909
        %2239 = vmatpush1.bf16.msra.mxu0 %v1908
        %2240 = vmatprep.mubr.bf16.mxu0 %v1326
        %2241 = vmatmul.mubr.bf16.gmra.mrb[0].mxu0 %v1325
        %v2242 = vpop.f32.mrb[0].mxu0
        %v2243 = vadd.f32 0.0, %v2242
        %v2244 = vpop.f32.mrb[0].mxu0
        %v2245 = vadd.f32 0.0, %v2244
        %v2246 = vpop.f32.mrb[0].mxu0
        %v2247 = vadd.f32 0.0, %v2246
        %v2248 = vpop.f32.mrb[0].mxu0
        %v2249 = vadd.f32 0.0, %v2248
        %2250 = vmatprep.mubr.bf16.mxu0 %v1330
        %2251 = vmatmul.mubr.bf16.gmra.mrb[0].mxu0 %v1329
        %v2252 = vpop.f32.mrb[0].mxu0
        %v2253 = vadd.f32 0.0, %v2252
        %v2254 = vpop.f32.mrb[0].mxu0
        %v2255 = vadd.f32 0.0, %v2254
        %v2256 = vpop.f32.mrb[0].mxu0
        %v2257 = vadd.f32 0.0, %v2256
        %v2258 = vpop.f32.mrb[0].mxu0
        %v2259 = vadd.f32 0.0, %v2258
        %2260 = vdwg.mxu0
        %2261 = vmatprep.subr.bf16.mxu0 %v1913
        %2262 = vmatpush1.bf16.msra.mxu0 %v1912
        %2263 = vmatprep.subr.bf16.mxu0 %v1917
        %2264 = vmatpush1.bf16.msra.mxu0 %v1916
        %2265 = vmatprep.subr.bf16.mxu0 %v1921
        %2266 = vmatpush1.bf16.msra.mxu0 %v1920
        %2267 = vmatprep.subr.bf16.mxu0 %v1925
        %2268 = vmatpush1.bf16.msra.mxu0 %v1924
        %2269 = vmatprep.subr.bf16.mxu0 %v1929
        %2270 = vmatpush1.bf16.msra.mxu0 %v1928
        %2271 = vmatprep.subr.bf16.mxu0 %v1933
        %2272 = vmatpush1.bf16.msra.mxu0 %v1932
        %2273 = vmatprep.subr.bf16.mxu0 %v1937
        %2274 = vmatpush1.bf16.msra.mxu0 %v1936
        %2275 = vmatprep.subr.bf16.mxu0 %v1941
        %2276 = vmatpush1.bf16.msra.mxu0 %v1940
        %2277 = vmatprep.subr.bf16.mxu0 %v1945
        %2278 = vmatpush1.bf16.msra.mxu0 %v1944
        %2279 = vmatprep.subr.bf16.mxu0 %v1949
        %2280 = vmatpush1.bf16.msra.mxu0 %v1948
        %2281 = vmatprep.subr.bf16.mxu0 %v1953
        %2282 = vmatpush1.bf16.msra.mxu0 %v1952
        %2283 = vmatprep.subr.bf16.mxu0 %v1957
        %2284 = vmatpush1.bf16.msra.mxu0 %v1956
        %2285 = vmatprep.subr.bf16.mxu0 %v1961
        %2286 = vmatpush1.bf16.msra.mxu0 %v1960
        %2287 = vmatprep.subr.bf16.mxu0 %v1965
        %2288 = vmatpush1.bf16.msra.mxu0 %v1964
        %2289 = vmatprep.subr.bf16.mxu0 %v1969
        %2290 = vmatpush1.bf16.msra.mxu0 %v1968
        %2291 = vmatprep.subr.bf16.mxu0 %v1973
        %2292 = vmatpush1.bf16.msra.mxu0 %v1972
        %2293 = vmatprep.mubr.bf16.mxu0 %v1328
        %2294 = vmatmul.mubr.bf16.gmra.mrb[0].mxu0 %v1327
        %v2295 = vpop.f32.mrb[0].mxu0
        %v2296 = vadd.f32 %v2243, %v2295
        %v2297 = vpop.f32.mrb[0].mxu0
        %v2298 = vadd.f32 %v2245, %v2297
        %v2299 = vpop.f32.mrb[0].mxu0
        %v2300 = vadd.f32 %v2247, %v2299
        %v2301 = vpop.f32.mrb[0].mxu0
        %v2302 = vadd.f32 %v2249, %v2301
        %2303 = vmatprep.mubr.bf16.mxu0 %v1332
        %2304 = vmatmul.mubr.bf16.gmra.mrb[0].mxu0 %v1331
        %v2305 = vpop.f32.mrb[0].mxu0
        %v2306 = vadd.f32 %v2253, %v2305
        %v2307 = vpop.f32.mrb[0].mxu0
        %v2308 = vadd.f32 %v2255, %v2307
        %v2309 = vpop.f32.mrb[0].mxu0
        %v2310 = vadd.f32 %v2257, %v2309
        %v2311 = vpop.f32.mrb[0].mxu0
        %v2312 = vadd.f32 %v2259, %v2311
        %2313 = vdwg.mxu0
        %v2442 = vunpack.c.l.b16 %v1070
        %v2443 = vunpack.c.h.b16 %v1070
        %v2444 = vunpack.c.l.b16 %v1071
        %v2445 = vunpack.c.h.b16 %v1071
        %v2446 = vunpack.c.l.b16 %v1072
        %v2447 = vunpack.c.h.b16 %v1072
        %v2448 = vunpack.c.l.b16 %v1073
        %v2449 = vunpack.c.h.b16 %v1073
        %v2450 = vunpack.c.l.b16 %v1074
        %v2451 = vunpack.c.h.b16 %v1074
        %v2452 = vunpack.c.l.b16 %v1075
        %v2453 = vunpack.c.h.b16 %v1075
        %v2454 = vunpack.c.l.b16 %v1076
        %v2455 = vunpack.c.h.b16 %v1076
        %v2456 = vunpack.c.l.b16 %v1077
        %v2457 = vunpack.c.h.b16 %v1077
        %v2458 = vunpack.c.l.b16 %v1078
        %v2459 = vunpack.c.h.b16 %v1078
        %v2460 = vunpack.c.l.b16 %v1079
        %v2461 = vunpack.c.h.b16 %v1079
        %v2462 = vunpack.c.l.b16 %v1080
        %v2463 = vunpack.c.h.b16 %v1080
        %v2464 = vunpack.c.l.b16 %v1081
        %v2465 = vunpack.c.h.b16 %v1081
        %v2466 = vunpack.c.l.b16 %v1082
        %v2467 = vunpack.c.h.b16 %v1082
        %v2468 = vunpack.c.l.b16 %v1083
        %v2469 = vunpack.c.h.b16 %v1083
        %v2470 = vunpack.c.l.b16 %v1084
        %v2471 = vunpack.c.h.b16 %v1084
        %v2472 = vunpack.c.l.b16 %v1085
        %v2473 = vunpack.c.h.b16 %v1085
        %v2474 = vunpack.c.l.b16 %v1086
        %v2475 = vunpack.c.h.b16 %v1086
        %v2476 = vunpack.c.l.b16 %v1087
        %v2477 = vunpack.c.h.b16 %v1087
        %v2478 = vunpack.c.l.b16 %v1088
        %v2479 = vunpack.c.h.b16 %v1088
        %v2480 = vunpack.c.l.b16 %v1089
        %v2481 = vunpack.c.h.b16 %v1089
        %v2482 = vunpack.c.l.b16 %v1090
        %v2483 = vunpack.c.h.b16 %v1090
        %v2484 = vunpack.c.l.b16 %v1091
        %v2485 = vunpack.c.h.b16 %v1091
        %v2486 = vunpack.c.l.b16 %v1092
        %v2487 = vunpack.c.h.b16 %v1092
        %v2488 = vunpack.c.l.b16 %v1093
        %v2489 = vunpack.c.h.b16 %v1093
        %v2490 = vunpack.c.l.b16 %v1094
        %v2491 = vunpack.c.h.b16 %v1094
        %v2492 = vunpack.c.l.b16 %v1095
        %v2493 = vunpack.c.h.b16 %v1095
        %v2494 = vunpack.c.l.b16 %v1096
        %v2495 = vunpack.c.h.b16 %v1096
        %v2496 = vunpack.c.l.b16 %v1097
        %v2497 = vunpack.c.h.b16 %v1097
        %v2498 = vunpack.c.l.b16 %v1098
        %v2499 = vunpack.c.h.b16 %v1098
        %v2500 = vunpack.c.l.b16 %v1099
        %v2501 = vunpack.c.h.b16 %v1099
        %v2502 = vunpack.c.l.b16 %v1100
        %v2503 = vunpack.c.h.b16 %v1100
        %v2504 = vunpack.c.l.b16 %v1101
        %v2505 = vunpack.c.h.b16 %v1101
        %v2506 = vunpack.c.l.b16 %v1102
        %v2507 = vunpack.c.h.b16 %v1102
        %v2508 = vunpack.c.l.b16 %v1103
        %v2509 = vunpack.c.h.b16 %v1103
        %v2510 = vunpack.c.l.b16 %v1104
        %v2511 = vunpack.c.h.b16 %v1104
        %v2512 = vunpack.c.l.b16 %v1105
        %v2513 = vunpack.c.h.b16 %v1105
        %v2514 = vunpack.c.l.b16 %v1106
        %v2515 = vunpack.c.h.b16 %v1106
        %v2516 = vunpack.c.l.b16 %v1107
        %v2517 = vunpack.c.h.b16 %v1107
        %v2518 = vunpack.c.l.b16 %v1108
        %v2519 = vunpack.c.h.b16 %v1108
        %v2520 = vunpack.c.l.b16 %v1109
        %v2521 = vunpack.c.h.b16 %v1109
        %v2522 = vunpack.c.l.b16 %v1110
        %v2523 = vunpack.c.h.b16 %v1110
        %v2524 = vunpack.c.l.b16 %v1111
        %v2525 = vunpack.c.h.b16 %v1111
        %v2526 = vunpack.c.l.b16 %v1112
        %v2527 = vunpack.c.h.b16 %v1112
        %v2528 = vunpack.c.l.b16 %v1113
        %v2529 = vunpack.c.h.b16 %v1113
        %v2530 = vunpack.c.l.b16 %v1114
        %v2531 = vunpack.c.h.b16 %v1114
        %v2532 = vunpack.c.l.b16 %v1115
        %v2533 = vunpack.c.h.b16 %v1115
        %v2534 = vunpack.c.l.b16 %v1116
        %v2535 = vunpack.c.h.b16 %v1116
        %v2536 = vunpack.c.l.b16 %v1117
        %v2537 = vunpack.c.h.b16 %v1117
        %v2538 = vunpack.c.l.b16 %v1118
        %v2539 = vunpack.c.h.b16 %v1118
        %v2540 = vunpack.c.l.b16 %v1119
        %v2541 = vunpack.c.h.b16 %v1119
        %v2542 = vunpack.c.l.b16 %v1120
        %v2543 = vunpack.c.h.b16 %v1120
        %v2544 = vunpack.c.l.b16 %v1121
        %v2545 = vunpack.c.h.b16 %v1121
        %v2546 = vunpack.c.l.b16 %v1122
        %v2547 = vunpack.c.h.b16 %v1122
        %v2548 = vunpack.c.l.b16 %v1123
        %v2549 = vunpack.c.h.b16 %v1123
        %v2550 = vunpack.c.l.b16 %v1124
        %v2551 = vunpack.c.h.b16 %v1124
        %v2552 = vunpack.c.l.b16 %v1125
        %v2553 = vunpack.c.h.b16 %v1125
        %v2554 = vunpack.c.l.b16 %v1126
        %v2555 = vunpack.c.h.b16 %v1126
        %v2556 = vunpack.c.l.b16 %v1127
        %v2557 = vunpack.c.h.b16 %v1127
        %v2558 = vunpack.c.l.b16 %v1128
        %v2559 = vunpack.c.h.b16 %v1128
        %v2560 = vunpack.c.l.b16 %v1129
        %v2561 = vunpack.c.h.b16 %v1129
        %v2562 = vunpack.c.l.b16 %v1130
        %v2563 = vunpack.c.h.b16 %v1130
        %v2564 = vunpack.c.l.b16 %v1131
        %v2565 = vunpack.c.h.b16 %v1131
        %v2566 = vunpack.c.l.b16 %v1132
        %v2567 = vunpack.c.h.b16 %v1132
        %v2568 = vunpack.c.l.b16 %v1133
        %v2569 = vunpack.c.h.b16 %v1133
        %v2570 = vunpack.c.l.b16 %v1134
        %v2571 = vunpack.c.h.b16 %v1134
        %v2572 = vunpack.c.l.b16 %v1135
        %v2573 = vunpack.c.h.b16 %v1135
        %v2574 = vunpack.c.l.b16 %v1136
        %v2575 = vunpack.c.h.b16 %v1136
        %v2576 = vunpack.c.l.b16 %v1137
        %v2577 = vunpack.c.h.b16 %v1137
        %v2578 = vunpack.c.l.b16 %v1138
        %v2579 = vunpack.c.h.b16 %v1138
        %v2580 = vunpack.c.l.b16 %v1139
        %v2581 = vunpack.c.h.b16 %v1139
        %v2582 = vunpack.c.l.b16 %v1140
        %v2583 = vunpack.c.h.b16 %v1140
        %v2584 = vunpack.c.l.b16 %v1141
        %v2585 = vunpack.c.h.b16 %v1141
        %v2586 = vunpack.c.l.b16 %v1142
        %v2587 = vunpack.c.h.b16 %v1142
        %v2588 = vunpack.c.l.b16 %v1143
        %v2589 = vunpack.c.h.b16 %v1143
        %v2590 = vunpack.c.l.b16 %v1144
        %v2591 = vunpack.c.h.b16 %v1144
        %v2592 = vunpack.c.l.b16 %v1145
        %v2593 = vunpack.c.h.b16 %v1145
        %v2594 = vunpack.c.l.b16 %v1146
        %v2595 = vunpack.c.h.b16 %v1146
        %v2596 = vunpack.c.l.b16 %v1147
        %v2597 = vunpack.c.h.b16 %v1147
        %v2598 = vunpack.c.l.b16 %v1148
        %v2599 = vunpack.c.h.b16 %v1148
        %v2600 = vunpack.c.l.b16 %v1149
        %v2601 = vunpack.c.h.b16 %v1149
        %v2602 = vunpack.c.l.b16 %v1150
        %v2603 = vunpack.c.h.b16 %v1150
        %v2604 = vunpack.c.l.b16 %v1151
        %v2605 = vunpack.c.h.b16 %v1151
        %v2606 = vunpack.c.l.b16 %v1152
        %v2607 = vunpack.c.h.b16 %v1152
        %v2608 = vunpack.c.l.b16 %v1153
        %v2609 = vunpack.c.h.b16 %v1153
        %v2610 = vunpack.c.l.b16 %v1154
        %v2611 = vunpack.c.h.b16 %v1154
        %v2612 = vunpack.c.l.b16 %v1155
        %v2613 = vunpack.c.h.b16 %v1155
        %v2614 = vunpack.c.l.b16 %v1156
        %v2615 = vunpack.c.h.b16 %v1156
        %v2616 = vunpack.c.l.b16 %v1157
        %v2617 = vunpack.c.h.b16 %v1157
        %v2618 = vunpack.c.l.b16 %v1158
        %v2619 = vunpack.c.h.b16 %v1158
        %v2620 = vunpack.c.l.b16 %v1159
        %v2621 = vunpack.c.h.b16 %v1159
        %v2622 = vunpack.c.l.b16 %v1160
        %v2623 = vunpack.c.h.b16 %v1160
        %v2624 = vunpack.c.l.b16 %v1161
        %v2625 = vunpack.c.h.b16 %v1161
        %v2626 = vunpack.c.l.b16 %v1162
        %v2627 = vunpack.c.h.b16 %v1162
        %v2628 = vunpack.c.l.b16 %v1163
        %v2629 = vunpack.c.h.b16 %v1163
        %v2630 = vunpack.c.l.b16 %v1164
        %v2631 = vunpack.c.h.b16 %v1164
        %v2632 = vunpack.c.l.b16 %v1165
        %v2633 = vunpack.c.h.b16 %v1165
        %v2634 = vunpack.c.l.b16 %v1166
        %v2635 = vunpack.c.h.b16 %v1166
        %v2636 = vunpack.c.l.b16 %v1167
        %v2637 = vunpack.c.h.b16 %v1167
        %v2638 = vunpack.c.l.b16 %v1168
        %v2639 = vunpack.c.h.b16 %v1168
        %v2640 = vunpack.c.l.b16 %v1169
        %v2641 = vunpack.c.h.b16 %v1169
        %v2642 = vunpack.c.l.b16 %v1170
        %v2643 = vunpack.c.h.b16 %v1170
        %v2644 = vunpack.c.l.b16 %v1171
        %v2645 = vunpack.c.h.b16 %v1171
        %v2646 = vunpack.c.l.b16 %v1172
        %v2647 = vunpack.c.h.b16 %v1172
        %v2648 = vunpack.c.l.b16 %v1173
        %v2649 = vunpack.c.h.b16 %v1173
        %v2650 = vunpack.c.l.b16 %v1174
        %v2651 = vunpack.c.h.b16 %v1174
        %v2652 = vunpack.c.l.b16 %v1175
        %v2653 = vunpack.c.h.b16 %v1175
        %v2654 = vunpack.c.l.b16 %v1176
        %v2655 = vunpack.c.h.b16 %v1176
        %v2656 = vunpack.c.l.b16 %v1177
        %v2657 = vunpack.c.h.b16 %v1177
        %v2658 = vunpack.c.l.b16 %v1178
        %v2659 = vunpack.c.h.b16 %v1178
        %v2660 = vunpack.c.l.b16 %v1179
        %v2661 = vunpack.c.h.b16 %v1179
        %v2662 = vunpack.c.l.b16 %v1180
        %v2663 = vunpack.c.h.b16 %v1180
        %v2664 = vunpack.c.l.b16 %v1181
        %v2665 = vunpack.c.h.b16 %v1181
        %v2666 = vunpack.c.l.b16 %v1182
        %v2667 = vunpack.c.h.b16 %v1182
        %v2668 = vunpack.c.l.b16 %v1183
        %v2669 = vunpack.c.h.b16 %v1183
        %v2670 = vunpack.c.l.b16 %v1184
        %v2671 = vunpack.c.h.b16 %v1184
        %v2672 = vunpack.c.l.b16 %v1185
        %v2673 = vunpack.c.h.b16 %v1185
        %v2674 = vunpack.c.l.b16 %v1186
        %v2675 = vunpack.c.h.b16 %v1186
        %v2676 = vunpack.c.l.b16 %v1187
        %v2677 = vunpack.c.h.b16 %v1187
        %v2678 = vunpack.c.l.b16 %v1188
        %v2679 = vunpack.c.h.b16 %v1188
        %v2680 = vunpack.c.l.b16 %v1189
        %v2681 = vunpack.c.h.b16 %v1189
        %v2682 = vunpack.c.l.b16 %v1190
        %v2683 = vunpack.c.h.b16 %v1190
        %v2684 = vunpack.c.l.b16 %v1191
        %v2685 = vunpack.c.h.b16 %v1191
        %v2686 = vunpack.c.l.b16 %v1192
        %v2687 = vunpack.c.h.b16 %v1192
        %v2688 = vunpack.c.l.b16 %v1193
        %v2689 = vunpack.c.h.b16 %v1193
        %v2690 = vunpack.c.l.b16 %v1194
        %v2691 = vunpack.c.h.b16 %v1194
        %v2692 = vunpack.c.l.b16 %v1195
        %v2693 = vunpack.c.h.b16 %v1195
        %v2694 = vunpack.c.l.b16 %v1196
        %v2695 = vunpack.c.h.b16 %v1196
        %v2696 = vunpack.c.l.b16 %v1197
        %v2697 = vunpack.c.h.b16 %v1197
        %v2698 = vpack.c.b16 %v2446, %v2442
        %v2699 = vpack.c.b16 %v2447, %v2443
        %v2700 = vpack.c.b16 %v2448, %v2444
        %v2701 = vpack.c.b16 %v2449, %v2445
        %v2702 = vpack.c.b16 %v2454, %v2450
        %v2703 = vpack.c.b16 %v2455, %v2451
        %v2704 = vpack.c.b16 %v2456, %v2452
        %v2705 = vpack.c.b16 %v2457, %v2453
        %v2706 = vpack.c.b16 %v2462, %v2458
        %v2707 = vpack.c.b16 %v2463, %v2459
        %v2708 = vpack.c.b16 %v2464, %v2460
        %v2709 = vpack.c.b16 %v2465, %v2461
        %v2710 = vpack.c.b16 %v2470, %v2466
        %v2711 = vpack.c.b16 %v2471, %v2467
        %v2712 = vpack.c.b16 %v2472, %v2468
        %v2713 = vpack.c.b16 %v2473, %v2469
        %v2714 = vpack.c.b16 %v2478, %v2474
        %v2715 = vpack.c.b16 %v2479, %v2475
        %v2716 = vpack.c.b16 %v2480, %v2476
        %v2717 = vpack.c.b16 %v2481, %v2477
        %v2718 = vpack.c.b16 %v2486, %v2482
        %v2719 = vpack.c.b16 %v2487, %v2483
        %v2720 = vpack.c.b16 %v2488, %v2484
        %v2721 = vpack.c.b16 %v2489, %v2485
        %v2722 = vpack.c.b16 %v2494, %v2490
        %v2723 = vpack.c.b16 %v2495, %v2491
        %v2724 = vpack.c.b16 %v2496, %v2492
        %v2725 = vpack.c.b16 %v2497, %v2493
        %v2726 = vpack.c.b16 %v2502, %v2498
        %v2727 = vpack.c.b16 %v2503, %v2499
        %v2728 = vpack.c.b16 %v2504, %v2500
        %v2729 = vpack.c.b16 %v2505, %v2501
        %v2730 = vpack.c.b16 %v2510, %v2506
        %v2731 = vpack.c.b16 %v2511, %v2507
        %v2732 = vpack.c.b16 %v2512, %v2508
        %v2733 = vpack.c.b16 %v2513, %v2509
        %v2734 = vpack.c.b16 %v2518, %v2514
        %v2735 = vpack.c.b16 %v2519, %v2515
        %v2736 = vpack.c.b16 %v2520, %v2516
        %v2737 = vpack.c.b16 %v2521, %v2517
        %v2738 = vpack.c.b16 %v2526, %v2522
        %v2739 = vpack.c.b16 %v2527, %v2523
        %v2740 = vpack.c.b16 %v2528, %v2524
        %v2741 = vpack.c.b16 %v2529, %v2525
        %v2742 = vpack.c.b16 %v2534, %v2530
        %v2743 = vpack.c.b16 %v2535, %v2531
        %v2744 = vpack.c.b16 %v2536, %v2532
        %v2745 = vpack.c.b16 %v2537, %v2533
        %v2746 = vpack.c.b16 %v2542, %v2538
        %v2747 = vpack.c.b16 %v2543, %v2539
        %v2748 = vpack.c.b16 %v2544, %v2540
        %v2749 = vpack.c.b16 %v2545, %v2541
        %v2750 = vpack.c.b16 %v2550, %v2546
        %v2751 = vpack.c.b16 %v2551, %v2547
        %v2752 = vpack.c.b16 %v2552, %v2548
        %v2753 = vpack.c.b16 %v2553, %v2549
        %v2754 = vpack.c.b16 %v2558, %v2554
        %v2755 = vpack.c.b16 %v2559, %v2555
        %v2756 = vpack.c.b16 %v2560, %v2556
        %v2757 = vpack.c.b16 %v2561, %v2557
        %v2758 = vpack.c.b16 %v2566, %v2562
        %v2759 = vpack.c.b16 %v2567, %v2563
        %v2760 = vpack.c.b16 %v2568, %v2564
        %v2761 = vpack.c.b16 %v2569, %v2565
        %v2762 = vpack.c.b16 %v2574, %v2570
        %v2763 = vpack.c.b16 %v2575, %v2571
        %v2764 = vpack.c.b16 %v2576, %v2572
        %v2765 = vpack.c.b16 %v2577, %v2573
        %v2766 = vpack.c.b16 %v2582, %v2578
        %v2767 = vpack.c.b16 %v2583, %v2579
        %v2768 = vpack.c.b16 %v2584, %v2580
        %v2769 = vpack.c.b16 %v2585, %v2581
        %v2770 = vpack.c.b16 %v2590, %v2586
        %v2771 = vpack.c.b16 %v2591, %v2587
        %v2772 = vpack.c.b16 %v2592, %v2588
        %v2773 = vpack.c.b16 %v2593, %v2589
        %v2774 = vpack.c.b16 %v2598, %v2594
        %v2775 = vpack.c.b16 %v2599, %v2595
        %v2776 = vpack.c.b16 %v2600, %v2596
        %v2777 = vpack.c.b16 %v2601, %v2597
        %v2778 = vpack.c.b16 %v2606, %v2602
        %v2779 = vpack.c.b16 %v2607, %v2603
        %v2780 = vpack.c.b16 %v2608, %v2604
        %v2781 = vpack.c.b16 %v2609, %v2605
        %v2782 = vpack.c.b16 %v2614, %v2610
        %v2783 = vpack.c.b16 %v2615, %v2611
        %v2784 = vpack.c.b16 %v2616, %v2612
        %v2785 = vpack.c.b16 %v2617, %v2613
        %v2786 = vpack.c.b16 %v2622, %v2618
        %v2787 = vpack.c.b16 %v2623, %v2619
        %v2788 = vpack.c.b16 %v2624, %v2620
        %v2789 = vpack.c.b16 %v2625, %v2621
        %v2790 = vpack.c.b16 %v2630, %v2626
        %v2791 = vpack.c.b16 %v2631, %v2627
        %v2792 = vpack.c.b16 %v2632, %v2628
        %v2793 = vpack.c.b16 %v2633, %v2629
        %v2794 = vpack.c.b16 %v2638, %v2634
        %v2795 = vpack.c.b16 %v2639, %v2635
        %v2796 = vpack.c.b16 %v2640, %v2636
        %v2797 = vpack.c.b16 %v2641, %v2637
        %v2798 = vpack.c.b16 %v2646, %v2642
        %v2799 = vpack.c.b16 %v2647, %v2643
        %v2800 = vpack.c.b16 %v2648, %v2644
        %v2801 = vpack.c.b16 %v2649, %v2645
        %v2802 = vpack.c.b16 %v2654, %v2650
        %v2803 = vpack.c.b16 %v2655, %v2651
        %v2804 = vpack.c.b16 %v2656, %v2652
        %v2805 = vpack.c.b16 %v2657, %v2653
        %v2806 = vpack.c.b16 %v2662, %v2658
        %v2807 = vpack.c.b16 %v2663, %v2659
        %v2808 = vpack.c.b16 %v2664, %v2660
        %v2809 = vpack.c.b16 %v2665, %v2661
        %v2810 = vpack.c.b16 %v2670, %v2666
        %v2811 = vpack.c.b16 %v2671, %v2667
        %v2812 = vpack.c.b16 %v2672, %v2668
        %v2813 = vpack.c.b16 %v2673, %v2669
        %v2814 = vpack.c.b16 %v2678, %v2674
        %v2815 = vpack.c.b16 %v2679, %v2675
        %v2816 = vpack.c.b16 %v2680, %v2676
        %v2817 = vpack.c.b16 %v2681, %v2677
        %v2818 = vpack.c.b16 %v2686, %v2682
        %v2819 = vpack.c.b16 %v2687, %v2683
        %v2820 = vpack.c.b16 %v2688, %v2684
        %v2821 = vpack.c.b16 %v2689, %v2685
        %v2822 = vpack.c.b16 %v2694, %v2690
        %v2823 = vpack.c.b16 %v2695, %v2691
        %v2824 = vpack.c.b16 %v2696, %v2692
        %v2825 = vpack.c.b16 %v2697, %v2693
        %2954 = vmatprep.subr.bf16.mxu0 %v2699
        %2955 = vmatpush1.bf16.msra.mxu0 %v2698
        %2956 = vmatprep.subr.bf16.mxu0 %v2703
        %2957 = vmatpush1.bf16.msra.mxu0 %v2702
        %2958 = vmatprep.subr.bf16.mxu0 %v2707
        %2959 = vmatpush1.bf16.msra.mxu0 %v2706
        %2960 = vmatprep.subr.bf16.mxu0 %v2711
        %2961 = vmatpush1.bf16.msra.mxu0 %v2710
        %2962 = vmatprep.subr.bf16.mxu0 %v2715
        %2963 = vmatpush1.bf16.msra.mxu0 %v2714
        %2964 = vmatprep.subr.bf16.mxu0 %v2719
        %2965 = vmatpush1.bf16.msra.mxu0 %v2718
        %2966 = vmatprep.subr.bf16.mxu0 %v2723
        %2967 = vmatpush1.bf16.msra.mxu0 %v2722
        %2968 = vmatprep.subr.bf16.mxu0 %v2727
        %2969 = vmatpush1.bf16.msra.mxu0 %v2726
        %2970 = vmatprep.subr.bf16.mxu0 %v2731
        %2971 = vmatpush1.bf16.msra.mxu0 %v2730
        %2972 = vmatprep.subr.bf16.mxu0 %v2735
        %2973 = vmatpush1.bf16.msra.mxu0 %v2734
        %2974 = vmatprep.subr.bf16.mxu0 %v2739
        %2975 = vmatpush1.bf16.msra.mxu0 %v2738
        %2976 = vmatprep.subr.bf16.mxu0 %v2743
        %2977 = vmatpush1.bf16.msra.mxu0 %v2742
        %2978 = vmatprep.subr.bf16.mxu0 %v2747
        %2979 = vmatpush1.bf16.msra.mxu0 %v2746
        %2980 = vmatprep.subr.bf16.mxu0 %v2751
        %2981 = vmatpush1.bf16.msra.mxu0 %v2750
        %2982 = vmatprep.subr.bf16.mxu0 %v2755
        %2983 = vmatpush1.bf16.msra.mxu0 %v2754
        %2984 = vmatprep.subr.bf16.mxu0 %v2759
        %2985 = vmatpush1.bf16.msra.mxu0 %v2758
        %2986 = vmatprep.mubr.bf16.mxu0 %v1063
        %2987 = vmatmul.mubr.bf16.gmra.mrb[0].mxu0 %v1062
        %v2988 = vpop.f32.mrb[0].mxu0
        %v2989 = vadd.f32 %v2190, %v2988
        %v2990 = vpop.f32.mrb[0].mxu0
        %v2991 = vadd.f32 %v2192, %v2990
        %v2992 = vpop.f32.mrb[0].mxu0
        %v2993 = vadd.f32 %v2194, %v2992
        %v2994 = vpop.f32.mrb[0].mxu0
        %v2995 = vadd.f32 %v2196, %v2994
        %2996 = vmatprep.mubr.bf16.mxu0 %v1067
        %2997 = vmatmul.mubr.bf16.gmra.mrb[0].mxu0 %v1066
        %v2998 = vpop.f32.mrb[0].mxu0
        %v2999 = vadd.f32 %v2200, %v2998
        %v3000 = vpop.f32.mrb[0].mxu0
        %v3001 = vadd.f32 %v2202, %v3000
        %v3002 = vpop.f32.mrb[0].mxu0
        %v3003 = vadd.f32 %v2204, %v3002
        %v3004 = vpop.f32.mrb[0].mxu0
        %v3005 = vadd.f32 %v2206, %v3004
        %3006 = vdwg.mxu0
        %3007 = vmatprep.subr.bf16.mxu0 %v2763
        %3008 = vmatpush1.bf16.msra.mxu0 %v2762
        %3009 = vmatprep.subr.bf16.mxu0 %v2767
        %3010 = vmatpush1.bf16.msra.mxu0 %v2766
        %3011 = vmatprep.subr.bf16.mxu0 %v2771
        %3012 = vmatpush1.bf16.msra.mxu0 %v2770
        %3013 = vmatprep.subr.bf16.mxu0 %v2775
        %3014 = vmatpush1.bf16.msra.mxu0 %v2774
        %3015 = vmatprep.subr.bf16.mxu0 %v2779
        %3016 = vmatpush1.bf16.msra.mxu0 %v2778
        %3017 = vmatprep.subr.bf16.mxu0 %v2783
        %3018 = vmatpush1.bf16.msra.mxu0 %v2782
        %3019 = vmatprep.subr.bf16.mxu0 %v2787
        %3020 = vmatpush1.bf16.msra.mxu0 %v2786
        %3021 = vmatprep.subr.bf16.mxu0 %v2791
        %3022 = vmatpush1.bf16.msra.mxu0 %v2790
        %3023 = vmatprep.subr.bf16.mxu0 %v2795
        %3024 = vmatpush1.bf16.msra.mxu0 %v2794
        %3025 = vmatprep.subr.bf16.mxu0 %v2799
        %3026 = vmatpush1.bf16.msra.mxu0 %v2798
        %3027 = vmatprep.subr.bf16.mxu0 %v2803
        %3028 = vmatpush1.bf16.msra.mxu0 %v2802
        %3029 = vmatprep.subr.bf16.mxu0 %v2807
        %3030 = vmatpush1.bf16.msra.mxu0 %v2806
        %3031 = vmatprep.subr.bf16.mxu0 %v2811
        %3032 = vmatpush1.bf16.msra.mxu0 %v2810
        %3033 = vmatprep.subr.bf16.mxu0 %v2815
        %3034 = vmatpush1.bf16.msra.mxu0 %v2814
        %3035 = vmatprep.subr.bf16.mxu0 %v2819
        %3036 = vmatpush1.bf16.msra.mxu0 %v2818
        %3037 = vmatprep.subr.bf16.mxu0 %v2823
        %3038 = vmatpush1.bf16.msra.mxu0 %v2822
        %3039 = vmatprep.mubr.bf16.mxu0 %v1065
        %3040 = vmatmul.mubr.bf16.gmra.mrb[0].mxu0 %v1064
        %v3041 = vpop.f32.mrb[0].mxu0
        %v3042 = vadd.f32 %v2989, %v3041
        %v3043 = vpop.f32.mrb[0].mxu0
        %v3044 = vadd.f32 %v2991, %v3043
        %v3045 = vpop.f32.mrb[0].mxu0
        %v3046 = vadd.f32 %v2993, %v3045
        %v3047 = vpop.f32.mrb[0].mxu0
        %v3048 = vadd.f32 %v2995, %v3047
        %3049 = vmatprep.mubr.bf16.mxu0 %v1069
        %3050 = vmatmul.mubr.bf16.gmra.mrb[0].mxu0 %v1068
        %v3051 = vpop.f32.mrb[0].mxu0
        %v3052 = vadd.f32 %v2999, %v3051
        %v3053 = vpop.f32.mrb[0].mxu0
        %v3054 = vadd.f32 %v3001, %v3053
        %v3055 = vpop.f32.mrb[0].mxu0
        %v3056 = vadd.f32 %v3003, %v3055
        %v3057 = vpop.f32.mrb[0].mxu0
        %v3058 = vadd.f32 %v3005, %v3057
        %3059 = vdwg.mxu0
        %3060 = vmatprep.subr.bf16.mxu0 %v2701
        %3061 = vmatpush1.bf16.msra.mxu0 %v2700
        %3062 = vmatprep.subr.bf16.mxu0 %v2705
        %3063 = vmatpush1.bf16.msra.mxu0 %v2704
        %3064 = vmatprep.subr.bf16.mxu0 %v2709
        %3065 = vmatpush1.bf16.msra.mxu0 %v2708
        %3066 = vmatprep.subr.bf16.mxu0 %v2713
        %3067 = vmatpush1.bf16.msra.mxu0 %v2712
        %3068 = vmatprep.subr.bf16.mxu0 %v2717
        %3069 = vmatpush1.bf16.msra.mxu0 %v2716
        %3070 = vmatprep.subr.bf16.mxu0 %v2721
        %3071 = vmatpush1.bf16.msra.mxu0 %v2720
        %3072 = vmatprep.subr.bf16.mxu0 %v2725
        %3073 = vmatpush1.bf16.msra.mxu0 %v2724
        %3074 = vmatprep.subr.bf16.mxu0 %v2729
        %3075 = vmatpush1.bf16.msra.mxu0 %v2728
        %3076 = vmatprep.subr.bf16.mxu0 %v2733
        %3077 = vmatpush1.bf16.msra.mxu0 %v2732
        %3078 = vmatprep.subr.bf16.mxu0 %v2737
        %3079 = vmatpush1.bf16.msra.mxu0 %v2736
        %3080 = vmatprep.subr.bf16.mxu0 %v2741
        %3081 = vmatpush1.bf16.msra.mxu0 %v2740
        %3082 = vmatprep.subr.bf16.mxu0 %v2745
        %3083 = vmatpush1.bf16.msra.mxu0 %v2744
        %3084 = vmatprep.subr.bf16.mxu0 %v2749
        %3085 = vmatpush1.bf16.msra.mxu0 %v2748
        %3086 = vmatprep.subr.bf16.mxu0 %v2753
        %3087 = vmatpush1.bf16.msra.mxu0 %v2752
        %3088 = vmatprep.subr.bf16.mxu0 %v2757
        %3089 = vmatpush1.bf16.msra.mxu0 %v2756
        %3090 = vmatprep.subr.bf16.mxu0 %v2761
        %3091 = vmatpush1.bf16.msra.mxu0 %v2760
        %3092 = vmatprep.mubr.bf16.mxu0 %v1063
        %3093 = vmatmul.mubr.bf16.gmra.mrb[0].mxu0 %v1062
        %v3094 = vpop.f32.mrb[0].mxu0
        %v3095 = vadd.f32 %v2296, %v3094
        %v3096 = vpop.f32.mrb[0].mxu0
        %v3097 = vadd.f32 %v2298, %v3096
        %v3098 = vpop.f32.mrb[0].mxu0
        %v3099 = vadd.f32 %v2300, %v3098
        %v3100 = vpop.f32.mrb[0].mxu0
        %v3101 = vadd.f32 %v2302, %v3100
        %3102 = vmatprep.mubr.bf16.mxu0 %v1067
        %3103 = vmatmul.mubr.bf16.gmra.mrb[0].mxu0 %v1066
        %v3104 = vpop.f32.mrb[0].mxu0
        %v3105 = vadd.f32 %v2306, %v3104
        %v3106 = vpop.f32.mrb[0].mxu0
        %v3107 = vadd.f32 %v2308, %v3106
        %v3108 = vpop.f32.mrb[0].mxu0
        %v3109 = vadd.f32 %v2310, %v3108
        %v3110 = vpop.f32.mrb[0].mxu0
        %v3111 = vadd.f32 %v2312, %v3110
        %3112 = vdwg.mxu0
        %3113 = vmatprep.subr.bf16.mxu0 %v2765
        %3114 = vmatpush1.bf16.msra.mxu0 %v2764
        %3115 = vmatprep.subr.bf16.mxu0 %v2769
        %3116 = vmatpush1.bf16.msra.mxu0 %v2768
        %3117 = vmatprep.subr.bf16.mxu0 %v2773
        %3118 = vmatpush1.bf16.msra.mxu0 %v2772
        %3119 = vmatprep.subr.bf16.mxu0 %v2777
        %3120 = vmatpush1.bf16.msra.mxu0 %v2776
        %3121 = vmatprep.subr.bf16.mxu0 %v2781
        %3122 = vmatpush1.bf16.msra.mxu0 %v2780
        %3123 = vmatprep.subr.bf16.mxu0 %v2785
        %3124 = vmatpush1.bf16.msra.mxu0 %v2784
        %3125 = vmatprep.subr.bf16.mxu0 %v2789
        %3126 = vmatpush1.bf16.msra.mxu0 %v2788
        %3127 = vmatprep.subr.bf16.mxu0 %v2793
        %3128 = vmatpush1.bf16.msra.mxu0 %v2792
        %3129 = vmatprep.subr.bf16.mxu0 %v2797
        %3130 = vmatpush1.bf16.msra.mxu0 %v2796
        %3131 = vmatprep.subr.bf16.mxu0 %v2801
        %3132 = vmatpush1.bf16.msra.mxu0 %v2800
        %3133 = vmatprep.subr.bf16.mxu0 %v2805
        %3134 = vmatpush1.bf16.msra.mxu0 %v2804
        %3135 = vmatprep.subr.bf16.mxu0 %v2809
        %3136 = vmatpush1.bf16.msra.mxu0 %v2808
        %3137 = vmatprep.subr.bf16.mxu0 %v2813
        %3138 = vmatpush1.bf16.msra.mxu0 %v2812
        %3139 = vmatprep.subr.bf16.mxu0 %v2817
        %3140 = vmatpush1.bf16.msra.mxu0 %v2816
        %3141 = vmatprep.subr.bf16.mxu0 %v2821
        %3142 = vmatpush1.bf16.msra.mxu0 %v2820
        %3143 = vmatprep.subr.bf16.mxu0 %v2825
        %3144 = vmatpush1.bf16.msra.mxu0 %v2824
        %3145 = vmatprep.mubr.bf16.mxu0 %v1065
        %3146 = vmatmul.mubr.bf16.gmra.mrb[0].mxu0 %v1064
        %v3147 = vpop.f32.mrb[0].mxu0
        %v3148 = vadd.f32 %v3095, %v3147
        %v3149 = vpop.f32.mrb[0].mxu0
        %v3150 = vadd.f32 %v3097, %v3149
        %v3151 = vpop.f32.mrb[0].mxu0
        %v3152 = vadd.f32 %v3099, %v3151
        %v3153 = vpop.f32.mrb[0].mxu0
        %v3154 = vadd.f32 %v3101, %v3153
        %3155 = vmatprep.mubr.bf16.mxu0 %v1069
        %3156 = vmatmul.mubr.bf16.gmra.mrb[0].mxu0 %v1068
        %v3157 = vpop.f32.mrb[0].mxu0
        %v3158 = vadd.f32 %v3105, %v3157
        %v3159 = vpop.f32.mrb[0].mxu0
        %v3160 = vadd.f32 %v3107, %v3159
        %v3161 = vpop.f32.mrb[0].mxu0
        %v3162 = vadd.f32 %v3109, %v3161
        %v3163 = vpop.f32.mrb[0].mxu0
        %v3164 = vadd.f32 %v3111, %v3163
        %3165 = vdwg.mxu0
        %s3166 = scalar_lea.vmem [#allocation5], 32
        %v3167 = vld [vmem:[%s3166] sm:$0xf]
        %v3168 = vld [vmem:[%s3166 + $0x4] sm:$0xf]
        %v3169 = vld [vmem:[%s3166 + $0x8] sm:$0xf]
        %v3170 = vld [vmem:[%s3166 + $0xc] sm:$0xf]
        %v3175 = vunpack.c.l.b16 %v3167
        %v3176 = vunpack.c.l.b16 %v3168
        %v3177 = vunpack.c.l.b16 %v3169
        %v3178 = vunpack.c.l.b16 %v3170
        %v3179 = vpack.c.b16 %v3176, %v3175
        %v3180 = vpack.c.b16 %v3178, %v3177
        %v3182 = vsel %vm949, %v3179, 0
        %v3185 = vsel %vm949, %v3180, 0
        %3187 = vmatprep.subr.bf16.mxu0 %v927
        %3188 = vmatpush1.bf16.msra.mxu0 %v926
        %3189 = vmatprep.subr.bf16.mxu0 %v931
        %3190 = vmatpush1.bf16.msra.mxu0 %v930
        %3191 = vmatprep.subr.bf16.mxu0 0
        %3192 = vmatpush1.bf16.msra.mxu0 0
        %3193 = vmatprep.subr.bf16.mxu0 0
        %3194 = vmatpush1.bf16.msra.mxu0 0
        %3195 = vmatprep.subr.bf16.mxu0 0
        %3196 = vmatpush1.bf16.msra.mxu0 0
        %3197 = vmatprep.subr.bf16.mxu0 0
        %3198 = vmatpush1.bf16.msra.mxu0 0
        %3199 = vmatprep.subr.bf16.mxu0 0
        %3200 = vmatpush1.bf16.msra.mxu0 0
        %3201 = vmatprep.subr.bf16.mxu0 0
        %3202 = vmatpush1.bf16.msra.mxu0 0
        %3203 = vmatprep.subr.bf16.mxu0 0
        %3204 = vmatpush1.bf16.msra.mxu0 0
        %3205 = vmatprep.subr.bf16.mxu0 0
        %3206 = vmatpush1.bf16.msra.mxu0 0
        %3207 = vmatprep.subr.bf16.mxu0 0
        %3208 = vmatpush1.bf16.msra.mxu0 0
        %3209 = vmatprep.subr.bf16.mxu0 0
        %3210 = vmatpush1.bf16.msra.mxu0 0
        %3211 = vmatprep.subr.bf16.mxu0 0
        %3212 = vmatpush1.bf16.msra.mxu0 0
        %3213 = vmatprep.subr.bf16.mxu0 0
        %3214 = vmatpush1.bf16.msra.mxu0 0
        %3215 = vmatprep.subr.bf16.mxu0 0
        %3216 = vmatpush1.bf16.msra.mxu0 0
        %3217 = vmatprep.subr.bf16.mxu0 0
        %3218 = vmatpush1.bf16.msra.mxu0 0
        %3219 = vmatprep.mubr.bf16.mxu0 0
        %3220 = vmatmul.mubr.bf16.gmra.mrb[0].mxu0 %v3182
        %v3221 = vpop.f32.mrb[0].mxu0
        %v3222 = vadd.f32 0.0, %v3221
        %v3223 = vpop.f32.mrb[0].mxu0
        %v3224 = vadd.f32 0.0, %v3223
        %v3225 = vpop.f32.mrb[0].mxu0
        %v3226 = vadd.f32 0.0, %v3225
        %v3227 = vpop.f32.mrb[0].mxu0
        %v3228 = vadd.f32 0.0, %v3227
        %3229 = vmatprep.mubr.bf16.mxu0 0
        %3230 = vmatmul.mubr.bf16.gmra.mrb[0].mxu0 %v3185
        %v3231 = vpop.f32.mrb[0].mxu0
        %v3232 = vadd.f32 0.0, %v3231
        %v3233 = vpop.f32.mrb[0].mxu0
        %v3234 = vadd.f32 0.0, %v3233
        %v3235 = vpop.f32.mrb[0].mxu0
        %v3236 = vadd.f32 0.0, %v3235
        %v3237 = vpop.f32.mrb[0].mxu0
        %v3238 = vadd.f32 0.0, %v3237
        %3239 = vdwg.mxu0
        %3240 = vmatprep.subr.bf16.mxu0 %v929
        %3241 = vmatpush1.bf16.msra.mxu0 %v928
        %3242 = vmatprep.subr.bf16.mxu0 %v933
        %3243 = vmatpush1.bf16.msra.mxu0 %v932
        %3244 = vmatprep.subr.bf16.mxu0 0
        %3245 = vmatpush1.bf16.msra.mxu0 0
        %3246 = vmatprep.subr.bf16.mxu0 0
        %3247 = vmatpush1.bf16.msra.mxu0 0
        %3248 = vmatprep.subr.bf16.mxu0 0
        %3249 = vmatpush1.bf16.msra.mxu0 0
        %3250 = vmatprep.subr.bf16.mxu0 0
        %3251 = vmatpush1.bf16.msra.mxu0 0
        %3252 = vmatprep.subr.bf16.mxu0 0
        %3253 = vmatpush1.bf16.msra.mxu0 0
        %3254 = vmatprep.subr.bf16.mxu0 0
        %3255 = vmatpush1.bf16.msra.mxu0 0
        %3256 = vmatprep.subr.bf16.mxu0 0
        %3257 = vmatpush1.bf16.msra.mxu0 0
        %3258 = vmatprep.subr.bf16.mxu0 0
        %3259 = vmatpush1.bf16.msra.mxu0 0
        %3260 = vmatprep.subr.bf16.mxu0 0
        %3261 = vmatpush1.bf16.msra.mxu0 0
        %3262 = vmatprep.subr.bf16.mxu0 0
        %3263 = vmatpush1.bf16.msra.mxu0 0
        %3264 = vmatprep.subr.bf16.mxu0 0
        %3265 = vmatpush1.bf16.msra.mxu0 0
        %3266 = vmatprep.subr.bf16.mxu0 0
        %3267 = vmatpush1.bf16.msra.mxu0 0
        %3268 = vmatprep.subr.bf16.mxu0 0
        %3269 = vmatpush1.bf16.msra.mxu0 0
        %3270 = vmatprep.subr.bf16.mxu0 0
        %3271 = vmatpush1.bf16.msra.mxu0 0
        %3272 = vmatprep.mubr.bf16.mxu0 0
        %3273 = vmatmul.mubr.bf16.gmra.mrb[0].mxu0 %v3182
        %v3274 = vpop.f32.mrb[0].mxu0
        %v3275 = vadd.f32 0.0, %v3274
        %v3276 = vpop.f32.mrb[0].mxu0
        %v3277 = vadd.f32 0.0, %v3276
        %v3278 = vpop.f32.mrb[0].mxu0
        %v3279 = vadd.f32 0.0, %v3278
        %v3280 = vpop.f32.mrb[0].mxu0
        %v3281 = vadd.f32 0.0, %v3280
        %3282 = vmatprep.mubr.bf16.mxu0 0
        %3283 = vmatmul.mubr.bf16.gmra.mrb[0].mxu0 %v3185
        %v3284 = vpop.f32.mrb[0].mxu0
        %v3285 = vadd.f32 0.0, %v3284
        %v3286 = vpop.f32.mrb[0].mxu0
        %v3287 = vadd.f32 0.0, %v3286
        %v3288 = vpop.f32.mrb[0].mxu0
        %v3289 = vadd.f32 0.0, %v3288
        %v3290 = vpop.f32.mrb[0].mxu0
        %v3291 = vadd.f32 0.0, %v3290
        %3292 = vdwg.mxu0
        %v3293 = vpack.c.bf16 %v3226, %v3222
        %v3294 = vpack.c.bf16 %v3228, %v3224
        %v3295 = vpack.c.bf16 %v3279, %v3275
        %v3296 = vpack.c.bf16 %v3281, %v3277
        %v3297 = vpack.c.bf16 %v3236, %v3232
        %v3298 = vpack.c.bf16 %v3238, %v3234
        %v3299 = vpack.c.bf16 %v3289, %v3285
        %v3300 = vpack.c.bf16 %v3291, %v3287
        %s3301 = scalar_lea.vmem [#allocation8], 2048
        %v3302 = vld [vmem:[%s3301] sm:$0xff]
        %v3303 = vld [vmem:[%s3301 + $0x8] sm:$0xff]
        %v3304 = vld [vmem:[%s3301 + $0x10] sm:$0xff]
        %v3305 = vld [vmem:[%s3301 + $0x18] sm:$0xff]
        %v3306 = vld [vmem:[%s3301 + $0x20] sm:$0xff]
        %v3307 = vld [vmem:[%s3301 + $0x28] sm:$0xff]
        %v3308 = vld [vmem:[%s3301 + $0x30] sm:$0xff]
        %v3309 = vld [vmem:[%s3301 + $0x38] sm:$0xff]
        %v3310 = vld [vmem:[%s3301 + $0x40] sm:$0xff]
        %v3311 = vld [vmem:[%s3301 + $0x48] sm:$0xff]
        %v3312 = vld [vmem:[%s3301 + $0x50] sm:$0xff]
        %v3313 = vld [vmem:[%s3301 + $0x58] sm:$0xff]
        %v3314 = vld [vmem:[%s3301 + $0x60] sm:$0xff]
        %v3315 = vld [vmem:[%s3301 + $0x68] sm:$0xff]
        %v3316 = vld [vmem:[%s3301 + $0x70] sm:$0xff]
        %v3317 = vld [vmem:[%s3301 + $0x78] sm:$0xff]
        %v3318 = vld [vmem:[%s3301 + $0x80] sm:$0xff]
        %v3319 = vld [vmem:[%s3301 + $0x88] sm:$0xff]
        %v3320 = vld [vmem:[%s3301 + $0x90] sm:$0xff]
        %v3321 = vld [vmem:[%s3301 + $0x98] sm:$0xff]
        %v3322 = vld [vmem:[%s3301 + $0xa0] sm:$0xff]
        %v3323 = vld [vmem:[%s3301 + $0xa8] sm:$0xff]
        %v3324 = vld [vmem:[%s3301 + $0xb0] sm:$0xff]
        %v3325 = vld [vmem:[%s3301 + $0xb8] sm:$0xff]
        %v3326 = vld [vmem:[%s3301 + $0xc0] sm:$0xff]
        %v3327 = vld [vmem:[%s3301 + $0xc8] sm:$0xff]
        %v3328 = vld [vmem:[%s3301 + $0xd0] sm:$0xff]
        %v3329 = vld [vmem:[%s3301 + $0xd8] sm:$0xff]
        %v3330 = vld [vmem:[%s3301 + $0xe0] sm:$0xff]
        %v3331 = vld [vmem:[%s3301 + $0xe8] sm:$0xff]
        %v3332 = vld [vmem:[%s3301 + $0xf0] sm:$0xff]
        %v3333 = vld [vmem:[%s3301 + $0xf8] sm:$0xff]
        %v3334 = vld [vmem:[%s3301 + $0x100] sm:$0xff]
        %v3335 = vld [vmem:[%s3301 + $0x108] sm:$0xff]
        %v3336 = vld [vmem:[%s3301 + $0x110] sm:$0xff]
        %v3337 = vld [vmem:[%s3301 + $0x118] sm:$0xff]
        %v3338 = vld [vmem:[%s3301 + $0x120] sm:$0xff]
        %v3339 = vld [vmem:[%s3301 + $0x128] sm:$0xff]
        %v3340 = vld [vmem:[%s3301 + $0x130] sm:$0xff]
        %v3341 = vld [vmem:[%s3301 + $0x138] sm:$0xff]
        %v3342 = vld [vmem:[%s3301 + $0x140] sm:$0xff]
        %v3343 = vld [vmem:[%s3301 + $0x148] sm:$0xff]
        %v3344 = vld [vmem:[%s3301 + $0x150] sm:$0xff]
        %v3345 = vld [vmem:[%s3301 + $0x158] sm:$0xff]
        %v3346 = vld [vmem:[%s3301 + $0x160] sm:$0xff]
        %v3347 = vld [vmem:[%s3301 + $0x168] sm:$0xff]
        %v3348 = vld [vmem:[%s3301 + $0x170] sm:$0xff]
        %v3349 = vld [vmem:[%s3301 + $0x178] sm:$0xff]
        %v3350 = vld [vmem:[%s3301 + $0x180] sm:$0xff]
        %v3351 = vld [vmem:[%s3301 + $0x188] sm:$0xff]
        %v3352 = vld [vmem:[%s3301 + $0x190] sm:$0xff]
        %v3353 = vld [vmem:[%s3301 + $0x198] sm:$0xff]
        %v3354 = vld [vmem:[%s3301 + $0x1a0] sm:$0xff]
        %v3355 = vld [vmem:[%s3301 + $0x1a8] sm:$0xff]
        %v3356 = vld [vmem:[%s3301 + $0x1b0] sm:$0xff]
        %v3357 = vld [vmem:[%s3301 + $0x1b8] sm:$0xff]
        %v3358 = vld [vmem:[%s3301 + $0x1c0] sm:$0xff]
        %v3359 = vld [vmem:[%s3301 + $0x1c8] sm:$0xff]
        %v3360 = vld [vmem:[%s3301 + $0x1d0] sm:$0xff]
        %v3361 = vld [vmem:[%s3301 + $0x1d8] sm:$0xff]
        %v3362 = vld [vmem:[%s3301 + $0x1e0] sm:$0xff]
        %v3363 = vld [vmem:[%s3301 + $0x1e8] sm:$0xff]
        %v3364 = vld [vmem:[%s3301 + $0x1f0] sm:$0xff]
        %v3365 = vld [vmem:[%s3301 + $0x1f8] sm:$0xff]
        %v3366 = vld [vmem:[%s3301 + $0x200] sm:$0xff]
        %v3367 = vld [vmem:[%s3301 + $0x208] sm:$0xff]
        %v3368 = vld [vmem:[%s3301 + $0x210] sm:$0xff]
        %v3369 = vld [vmem:[%s3301 + $0x218] sm:$0xff]
        %v3370 = vld [vmem:[%s3301 + $0x220] sm:$0xff]
        %v3371 = vld [vmem:[%s3301 + $0x228] sm:$0xff]
        %v3372 = vld [vmem:[%s3301 + $0x230] sm:$0xff]
        %v3373 = vld [vmem:[%s3301 + $0x238] sm:$0xff]
        %v3374 = vld [vmem:[%s3301 + $0x240] sm:$0xff]
        %v3375 = vld [vmem:[%s3301 + $0x248] sm:$0xff]
        %v3376 = vld [vmem:[%s3301 + $0x250] sm:$0xff]
        %v3377 = vld [vmem:[%s3301 + $0x258] sm:$0xff]
        %v3378 = vld [vmem:[%s3301 + $0x260] sm:$0xff]
        %v3379 = vld [vmem:[%s3301 + $0x268] sm:$0xff]
        %v3380 = vld [vmem:[%s3301 + $0x270] sm:$0xff]
        %v3381 = vld [vmem:[%s3301 + $0x278] sm:$0xff]
        %v3382 = vld [vmem:[%s3301 + $0x280] sm:$0xff]
        %v3383 = vld [vmem:[%s3301 + $0x288] sm:$0xff]
        %v3384 = vld [vmem:[%s3301 + $0x290] sm:$0xff]
        %v3385 = vld [vmem:[%s3301 + $0x298] sm:$0xff]
        %v3386 = vld [vmem:[%s3301 + $0x2a0] sm:$0xff]
        %v3387 = vld [vmem:[%s3301 + $0x2a8] sm:$0xff]
        %v3388 = vld [vmem:[%s3301 + $0x2b0] sm:$0xff]
        %v3389 = vld [vmem:[%s3301 + $0x2b8] sm:$0xff]
        %v3390 = vld [vmem:[%s3301 + $0x2c0] sm:$0xff]
        %v3391 = vld [vmem:[%s3301 + $0x2c8] sm:$0xff]
        %v3392 = vld [vmem:[%s3301 + $0x2d0] sm:$0xff]
        %v3393 = vld [vmem:[%s3301 + $0x2d8] sm:$0xff]
        %v3394 = vld [vmem:[%s3301 + $0x2e0] sm:$0xff]
        %v3395 = vld [vmem:[%s3301 + $0x2e8] sm:$0xff]
        %v3396 = vld [vmem:[%s3301 + $0x2f0] sm:$0xff]
        %v3397 = vld [vmem:[%s3301 + $0x2f8] sm:$0xff]
        %v3398 = vld [vmem:[%s3301 + $0x300] sm:$0xff]
        %v3399 = vld [vmem:[%s3301 + $0x308] sm:$0xff]
        %v3400 = vld [vmem:[%s3301 + $0x310] sm:$0xff]
        %v3401 = vld [vmem:[%s3301 + $0x318] sm:$0xff]
        %v3402 = vld [vmem:[%s3301 + $0x320] sm:$0xff]
        %v3403 = vld [vmem:[%s3301 + $0x328] sm:$0xff]
        %v3404 = vld [vmem:[%s3301 + $0x330] sm:$0xff]
        %v3405 = vld [vmem:[%s3301 + $0x338] sm:$0xff]
        %v3406 = vld [vmem:[%s3301 + $0x340] sm:$0xff]
        %v3407 = vld [vmem:[%s3301 + $0x348] sm:$0xff]
        %v3408 = vld [vmem:[%s3301 + $0x350] sm:$0xff]
        %v3409 = vld [vmem:[%s3301 + $0x358] sm:$0xff]
        %v3410 = vld [vmem:[%s3301 + $0x360] sm:$0xff]
        %v3411 = vld [vmem:[%s3301 + $0x368] sm:$0xff]
        %v3412 = vld [vmem:[%s3301 + $0x370] sm:$0xff]
        %v3413 = vld [vmem:[%s3301 + $0x378] sm:$0xff]
        %v3414 = vld [vmem:[%s3301 + $0x380] sm:$0xff]
        %v3415 = vld [vmem:[%s3301 + $0x388] sm:$0xff]
        %v3416 = vld [vmem:[%s3301 + $0x390] sm:$0xff]
        %v3417 = vld [vmem:[%s3301 + $0x398] sm:$0xff]
        %v3418 = vld [vmem:[%s3301 + $0x3a0] sm:$0xff]
        %v3419 = vld [vmem:[%s3301 + $0x3a8] sm:$0xff]
        %v3420 = vld [vmem:[%s3301 + $0x3b0] sm:$0xff]
        %v3421 = vld [vmem:[%s3301 + $0x3b8] sm:$0xff]
        %v3422 = vld [vmem:[%s3301 + $0x3c0] sm:$0xff]
        %v3423 = vld [vmem:[%s3301 + $0x3c8] sm:$0xff]
        %v3424 = vld [vmem:[%s3301 + $0x3d0] sm:$0xff]
        %v3425 = vld [vmem:[%s3301 + $0x3d8] sm:$0xff]
        %v3426 = vld [vmem:[%s3301 + $0x3e0] sm:$0xff]
        %v3427 = vld [vmem:[%s3301 + $0x3e8] sm:$0xff]
        %v3428 = vld [vmem:[%s3301 + $0x3f0] sm:$0xff]
        %v3429 = vld [vmem:[%s3301 + $0x3f8] sm:$0xff]
        %v3558 = vunpack.c.l.b16 %v3302
        %v3559 = vunpack.c.h.b16 %v3302
        %v3560 = vunpack.c.l.b16 %v3303
        %v3561 = vunpack.c.h.b16 %v3303
        %v3562 = vunpack.c.l.b16 %v3304
        %v3563 = vunpack.c.h.b16 %v3304
        %v3564 = vunpack.c.l.b16 %v3305
        %v3565 = vunpack.c.h.b16 %v3305
        %v3566 = vunpack.c.l.b16 %v3306
        %v3567 = vunpack.c.h.b16 %v3306
        %v3568 = vunpack.c.l.b16 %v3307
        %v3569 = vunpack.c.h.b16 %v3307
        %v3570 = vunpack.c.l.b16 %v3308
        %v3571 = vunpack.c.h.b16 %v3308
        %v3572 = vunpack.c.l.b16 %v3309
        %v3573 = vunpack.c.h.b16 %v3309
        %v3574 = vunpack.c.l.b16 %v3310
        %v3575 = vunpack.c.h.b16 %v3310
        %v3576 = vunpack.c.l.b16 %v3311
        %v3577 = vunpack.c.h.b16 %v3311
        %v3578 = vunpack.c.l.b16 %v3312
        %v3579 = vunpack.c.h.b16 %v3312
        %v3580 = vunpack.c.l.b16 %v3313
        %v3581 = vunpack.c.h.b16 %v3313
        %v3582 = vunpack.c.l.b16 %v3314
        %v3583 = vunpack.c.h.b16 %v3314
        %v3584 = vunpack.c.l.b16 %v3315
        %v3585 = vunpack.c.h.b16 %v3315
        %v3586 = vunpack.c.l.b16 %v3316
        %v3587 = vunpack.c.h.b16 %v3316
        %v3588 = vunpack.c.l.b16 %v3317
        %v3589 = vunpack.c.h.b16 %v3317
        %v3590 = vunpack.c.l.b16 %v3318
        %v3591 = vunpack.c.h.b16 %v3318
        %v3592 = vunpack.c.l.b16 %v3319
        %v3593 = vunpack.c.h.b16 %v3319
        %v3594 = vunpack.c.l.b16 %v3320
        %v3595 = vunpack.c.h.b16 %v3320
        %v3596 = vunpack.c.l.b16 %v3321
        %v3597 = vunpack.c.h.b16 %v3321
        %v3598 = vunpack.c.l.b16 %v3322
        %v3599 = vunpack.c.h.b16 %v3322
        %v3600 = vunpack.c.l.b16 %v3323
        %v3601 = vunpack.c.h.b16 %v3323
        %v3602 = vunpack.c.l.b16 %v3324
        %v3603 = vunpack.c.h.b16 %v3324
        %v3604 = vunpack.c.l.b16 %v3325
        %v3605 = vunpack.c.h.b16 %v3325
        %v3606 = vunpack.c.l.b16 %v3326
        %v3607 = vunpack.c.h.b16 %v3326
        %v3608 = vunpack.c.l.b16 %v3327
        %v3609 = vunpack.c.h.b16 %v3327
        %v3610 = vunpack.c.l.b16 %v3328
        %v3611 = vunpack.c.h.b16 %v3328
        %v3612 = vunpack.c.l.b16 %v3329
        %v3613 = vunpack.c.h.b16 %v3329
        %v3614 = vunpack.c.l.b16 %v3330
        %v3615 = vunpack.c.h.b16 %v3330
        %v3616 = vunpack.c.l.b16 %v3331
        %v3617 = vunpack.c.h.b16 %v3331
        %v3618 = vunpack.c.l.b16 %v3332
        %v3619 = vunpack.c.h.b16 %v3332
        %v3620 = vunpack.c.l.b16 %v3333
        %v3621 = vunpack.c.h.b16 %v3333
        %v3622 = vunpack.c.l.b16 %v3334
        %v3623 = vunpack.c.h.b16 %v3334
        %v3624 = vunpack.c.l.b16 %v3335
        %v3625 = vunpack.c.h.b16 %v3335
        %v3626 = vunpack.c.l.b16 %v3336
        %v3627 = vunpack.c.h.b16 %v3336
        %v3628 = vunpack.c.l.b16 %v3337
        %v3629 = vunpack.c.h.b16 %v3337
        %v3630 = vunpack.c.l.b16 %v3338
        %v3631 = vunpack.c.h.b16 %v3338
        %v3632 = vunpack.c.l.b16 %v3339
        %v3633 = vunpack.c.h.b16 %v3339
        %v3634 = vunpack.c.l.b16 %v3340
        %v3635 = vunpack.c.h.b16 %v3340
        %v3636 = vunpack.c.l.b16 %v3341
        %v3637 = vunpack.c.h.b16 %v3341
        %v3638 = vunpack.c.l.b16 %v3342
        %v3639 = vunpack.c.h.b16 %v3342
        %v3640 = vunpack.c.l.b16 %v3343
        %v3641 = vunpack.c.h.b16 %v3343
        %v3642 = vunpack.c.l.b16 %v3344
        %v3643 = vunpack.c.h.b16 %v3344
        %v3644 = vunpack.c.l.b16 %v3345
        %v3645 = vunpack.c.h.b16 %v3345
        %v3646 = vunpack.c.l.b16 %v3346
        %v3647 = vunpack.c.h.b16 %v3346
        %v3648 = vunpack.c.l.b16 %v3347
        %v3649 = vunpack.c.h.b16 %v3347
        %v3650 = vunpack.c.l.b16 %v3348
        %v3651 = vunpack.c.h.b16 %v3348
        %v3652 = vunpack.c.l.b16 %v3349
        %v3653 = vunpack.c.h.b16 %v3349
        %v3654 = vunpack.c.l.b16 %v3350
        %v3655 = vunpack.c.h.b16 %v3350
        %v3656 = vunpack.c.l.b16 %v3351
        %v3657 = vunpack.c.h.b16 %v3351
        %v3658 = vunpack.c.l.b16 %v3352
        %v3659 = vunpack.c.h.b16 %v3352
        %v3660 = vunpack.c.l.b16 %v3353
        %v3661 = vunpack.c.h.b16 %v3353
        %v3662 = vunpack.c.l.b16 %v3354
        %v3663 = vunpack.c.h.b16 %v3354
        %v3664 = vunpack.c.l.b16 %v3355
        %v3665 = vunpack.c.h.b16 %v3355
        %v3666 = vunpack.c.l.b16 %v3356
        %v3667 = vunpack.c.h.b16 %v3356
        %v3668 = vunpack.c.l.b16 %v3357
        %v3669 = vunpack.c.h.b16 %v3357
        %v3670 = vunpack.c.l.b16 %v3358
        %v3671 = vunpack.c.h.b16 %v3358
        %v3672 = vunpack.c.l.b16 %v3359
        %v3673 = vunpack.c.h.b16 %v3359
        %v3674 = vunpack.c.l.b16 %v3360
        %v3675 = vunpack.c.h.b16 %v3360
        %v3676 = vunpack.c.l.b16 %v3361
        %v3677 = vunpack.c.h.b16 %v3361
        %v3678 = vunpack.c.l.b16 %v3362
        %v3679 = vunpack.c.h.b16 %v3362
        %v3680 = vunpack.c.l.b16 %v3363
        %v3681 = vunpack.c.h.b16 %v3363
        %v3682 = vunpack.c.l.b16 %v3364
        %v3683 = vunpack.c.h.b16 %v3364
        %v3684 = vunpack.c.l.b16 %v3365
        %v3685 = vunpack.c.h.b16 %v3365
        %v3686 = vunpack.c.l.b16 %v3366
        %v3687 = vunpack.c.h.b16 %v3366
        %v3688 = vunpack.c.l.b16 %v3367
        %v3689 = vunpack.c.h.b16 %v3367
        %v3690 = vunpack.c.l.b16 %v3368
        %v3691 = vunpack.c.h.b16 %v3368
        %v3692 = vunpack.c.l.b16 %v3369
        %v3693 = vunpack.c.h.b16 %v3369
        %v3694 = vunpack.c.l.b16 %v3370
        %v3695 = vunpack.c.h.b16 %v3370
        %v3696 = vunpack.c.l.b16 %v3371
        %v3697 = vunpack.c.h.b16 %v3371
        %v3698 = vunpack.c.l.b16 %v3372
        %v3699 = vunpack.c.h.b16 %v3372
        %v3700 = vunpack.c.l.b16 %v3373
        %v3701 = vunpack.c.h.b16 %v3373
        %v3702 = vunpack.c.l.b16 %v3374
        %v3703 = vunpack.c.h.b16 %v3374
        %v3704 = vunpack.c.l.b16 %v3375
        %v3705 = vunpack.c.h.b16 %v3375
        %v3706 = vunpack.c.l.b16 %v3376
        %v3707 = vunpack.c.h.b16 %v3376
        %v3708 = vunpack.c.l.b16 %v3377
        %v3709 = vunpack.c.h.b16 %v3377
        %v3710 = vunpack.c.l.b16 %v3378
        %v3711 = vunpack.c.h.b16 %v3378
        %v3712 = vunpack.c.l.b16 %v3379
        %v3713 = vunpack.c.h.b16 %v3379
        %v3714 = vunpack.c.l.b16 %v3380
        %v3715 = vunpack.c.h.b16 %v3380
        %v3716 = vunpack.c.l.b16 %v3381
        %v3717 = vunpack.c.h.b16 %v3381
        %v3718 = vunpack.c.l.b16 %v3382
        %v3719 = vunpack.c.h.b16 %v3382
        %v3720 = vunpack.c.l.b16 %v3383
        %v3721 = vunpack.c.h.b16 %v3383
        %v3722 = vunpack.c.l.b16 %v3384
        %v3723 = vunpack.c.h.b16 %v3384
        %v3724 = vunpack.c.l.b16 %v3385
        %v3725 = vunpack.c.h.b16 %v3385
        %v3726 = vunpack.c.l.b16 %v3386
        %v3727 = vunpack.c.h.b16 %v3386
        %v3728 = vunpack.c.l.b16 %v3387
        %v3729 = vunpack.c.h.b16 %v3387
        %v3730 = vunpack.c.l.b16 %v3388
        %v3731 = vunpack.c.h.b16 %v3388
        %v3732 = vunpack.c.l.b16 %v3389
        %v3733 = vunpack.c.h.b16 %v3389
        %v3734 = vunpack.c.l.b16 %v3390
        %v3735 = vunpack.c.h.b16 %v3390
        %v3736 = vunpack.c.l.b16 %v3391
        %v3737 = vunpack.c.h.b16 %v3391
        %v3738 = vunpack.c.l.b16 %v3392
        %v3739 = vunpack.c.h.b16 %v3392
        %v3740 = vunpack.c.l.b16 %v3393
        %v3741 = vunpack.c.h.b16 %v3393
        %v3742 = vunpack.c.l.b16 %v3394
        %v3743 = vunpack.c.h.b16 %v3394
        %v3744 = vunpack.c.l.b16 %v3395
        %v3745 = vunpack.c.h.b16 %v3395
        %v3746 = vunpack.c.l.b16 %v3396
        %v3747 = vunpack.c.h.b16 %v3396
        %v3748 = vunpack.c.l.b16 %v3397
        %v3749 = vunpack.c.h.b16 %v3397
        %v3750 = vunpack.c.l.b16 %v3398
        %v3751 = vunpack.c.h.b16 %v3398
        %v3752 = vunpack.c.l.b16 %v3399
        %v3753 = vunpack.c.h.b16 %v3399
        %v3754 = vunpack.c.l.b16 %v3400
        %v3755 = vunpack.c.h.b16 %v3400
        %v3756 = vunpack.c.l.b16 %v3401
        %v3757 = vunpack.c.h.b16 %v3401
        %v3758 = vunpack.c.l.b16 %v3402
        %v3759 = vunpack.c.h.b16 %v3402
        %v3760 = vunpack.c.l.b16 %v3403
        %v3761 = vunpack.c.h.b16 %v3403
        %v3762 = vunpack.c.l.b16 %v3404
        %v3763 = vunpack.c.h.b16 %v3404
        %v3764 = vunpack.c.l.b16 %v3405
        %v3765 = vunpack.c.h.b16 %v3405
        %v3766 = vunpack.c.l.b16 %v3406
        %v3767 = vunpack.c.h.b16 %v3406
        %v3768 = vunpack.c.l.b16 %v3407
        %v3769 = vunpack.c.h.b16 %v3407
        %v3770 = vunpack.c.l.b16 %v3408
        %v3771 = vunpack.c.h.b16 %v3408
        %v3772 = vunpack.c.l.b16 %v3409
        %v3773 = vunpack.c.h.b16 %v3409
        %v3774 = vunpack.c.l.b16 %v3410
        %v3775 = vunpack.c.h.b16 %v3410
        %v3776 = vunpack.c.l.b16 %v3411
        %v3777 = vunpack.c.h.b16 %v3411
        %v3778 = vunpack.c.l.b16 %v3412
        %v3779 = vunpack.c.h.b16 %v3412
        %v3780 = vunpack.c.l.b16 %v3413
        %v3781 = vunpack.c.h.b16 %v3413
        %v3782 = vunpack.c.l.b16 %v3414
        %v3783 = vunpack.c.h.b16 %v3414
        %v3784 = vunpack.c.l.b16 %v3415
        %v3785 = vunpack.c.h.b16 %v3415
        %v3786 = vunpack.c.l.b16 %v3416
        %v3787 = vunpack.c.h.b16 %v3416
        %v3788 = vunpack.c.l.b16 %v3417
        %v3789 = vunpack.c.h.b16 %v3417
        %v3790 = vunpack.c.l.b16 %v3418
        %v3791 = vunpack.c.h.b16 %v3418
        %v3792 = vunpack.c.l.b16 %v3419
        %v3793 = vunpack.c.h.b16 %v3419
        %v3794 = vunpack.c.l.b16 %v3420
        %v3795 = vunpack.c.h.b16 %v3420
        %v3796 = vunpack.c.l.b16 %v3421
        %v3797 = vunpack.c.h.b16 %v3421
        %v3798 = vunpack.c.l.b16 %v3422
        %v3799 = vunpack.c.h.b16 %v3422
        %v3800 = vunpack.c.l.b16 %v3423
        %v3801 = vunpack.c.h.b16 %v3423
        %v3802 = vunpack.c.l.b16 %v3424
        %v3803 = vunpack.c.h.b16 %v3424
        %v3804 = vunpack.c.l.b16 %v3425
        %v3805 = vunpack.c.h.b16 %v3425
        %v3806 = vunpack.c.l.b16 %v3426
        %v3807 = vunpack.c.h.b16 %v3426
        %v3808 = vunpack.c.l.b16 %v3427
        %v3809 = vunpack.c.h.b16 %v3427
        %v3810 = vunpack.c.l.b16 %v3428
        %v3811 = vunpack.c.h.b16 %v3428
        %v3812 = vunpack.c.l.b16 %v3429
        %v3813 = vunpack.c.h.b16 %v3429
        %v3814 = vpack.c.b16 %v3562, %v3558
        %v3815 = vpack.c.b16 %v3563, %v3559
        %v3816 = vpack.c.b16 %v3564, %v3560
        %v3817 = vpack.c.b16 %v3565, %v3561
        %v3818 = vpack.c.b16 %v3570, %v3566
        %v3819 = vpack.c.b16 %v3571, %v3567
        %v3820 = vpack.c.b16 %v3572, %v3568
        %v3821 = vpack.c.b16 %v3573, %v3569
        %v3822 = vpack.c.b16 %v3578, %v3574
        %v3823 = vpack.c.b16 %v3579, %v3575
        %v3824 = vpack.c.b16 %v3580, %v3576
        %v3825 = vpack.c.b16 %v3581, %v3577
        %v3826 = vpack.c.b16 %v3586, %v3582
        %v3827 = vpack.c.b16 %v3587, %v3583
        %v3828 = vpack.c.b16 %v3588, %v3584
        %v3829 = vpack.c.b16 %v3589, %v3585
        %v3830 = vpack.c.b16 %v3594, %v3590
        %v3831 = vpack.c.b16 %v3595, %v3591
        %v3832 = vpack.c.b16 %v3596, %v3592
        %v3833 = vpack.c.b16 %v3597, %v3593
        %v3834 = vpack.c.b16 %v3602, %v3598
        %v3835 = vpack.c.b16 %v3603, %v3599
        %v3836 = vpack.c.b16 %v3604, %v3600
        %v3837 = vpack.c.b16 %v3605, %v3601
        %v3838 = vpack.c.b16 %v3610, %v3606
        %v3839 = vpack.c.b16 %v3611, %v3607
        %v3840 = vpack.c.b16 %v3612, %v3608
        %v3841 = vpack.c.b16 %v3613, %v3609
        %v3842 = vpack.c.b16 %v3618, %v3614
        %v3843 = vpack.c.b16 %v3619, %v3615
        %v3844 = vpack.c.b16 %v3620, %v3616
        %v3845 = vpack.c.b16 %v3621, %v3617
        %v3846 = vpack.c.b16 %v3626, %v3622
        %v3847 = vpack.c.b16 %v3627, %v3623
        %v3848 = vpack.c.b16 %v3628, %v3624
        %v3849 = vpack.c.b16 %v3629, %v3625
        %v3850 = vpack.c.b16 %v3634, %v3630
        %v3851 = vpack.c.b16 %v3635, %v3631
        %v3852 = vpack.c.b16 %v3636, %v3632
        %v3853 = vpack.c.b16 %v3637, %v3633
        %v3854 = vpack.c.b16 %v3642, %v3638
        %v3855 = vpack.c.b16 %v3643, %v3639
        %v3856 = vpack.c.b16 %v3644, %v3640
        %v3857 = vpack.c.b16 %v3645, %v3641
        %v3858 = vpack.c.b16 %v3650, %v3646
        %v3859 = vpack.c.b16 %v3651, %v3647
        %v3860 = vpack.c.b16 %v3652, %v3648
        %v3861 = vpack.c.b16 %v3653, %v3649
        %v3862 = vpack.c.b16 %v3658, %v3654
        %v3863 = vpack.c.b16 %v3659, %v3655
        %v3864 = vpack.c.b16 %v3660, %v3656
        %v3865 = vpack.c.b16 %v3661, %v3657
        %v3866 = vpack.c.b16 %v3666, %v3662
        %v3867 = vpack.c.b16 %v3667, %v3663
        %v3868 = vpack.c.b16 %v3668, %v3664
        %v3869 = vpack.c.b16 %v3669, %v3665
        %v3870 = vpack.c.b16 %v3674, %v3670
        %v3871 = vpack.c.b16 %v3675, %v3671
        %v3872 = vpack.c.b16 %v3676, %v3672
        %v3873 = vpack.c.b16 %v3677, %v3673
        %v3874 = vpack.c.b16 %v3682, %v3678
        %v3875 = vpack.c.b16 %v3683, %v3679
        %v3876 = vpack.c.b16 %v3684, %v3680
        %v3877 = vpack.c.b16 %v3685, %v3681
        %v3878 = vpack.c.b16 %v3690, %v3686
        %v3879 = vpack.c.b16 %v3691, %v3687
        %v3880 = vpack.c.b16 %v3692, %v3688
        %v3881 = vpack.c.b16 %v3693, %v3689
        %v3882 = vpack.c.b16 %v3698, %v3694
        %v3883 = vpack.c.b16 %v3699, %v3695
        %v3884 = vpack.c.b16 %v3700, %v3696
        %v3885 = vpack.c.b16 %v3701, %v3697
        %v3886 = vpack.c.b16 %v3706, %v3702
        %v3887 = vpack.c.b16 %v3707, %v3703
        %v3888 = vpack.c.b16 %v3708, %v3704
        %v3889 = vpack.c.b16 %v3709, %v3705
        %v3890 = vpack.c.b16 %v3714, %v3710
        %v3891 = vpack.c.b16 %v3715, %v3711
        %v3892 = vpack.c.b16 %v3716, %v3712
        %v3893 = vpack.c.b16 %v3717, %v3713
        %v3894 = vpack.c.b16 %v3722, %v3718
        %v3895 = vpack.c.b16 %v3723, %v3719
        %v3896 = vpack.c.b16 %v3724, %v3720
        %v3897 = vpack.c.b16 %v3725, %v3721
        %v3898 = vpack.c.b16 %v3730, %v3726
        %v3899 = vpack.c.b16 %v3731, %v3727
        %v3900 = vpack.c.b16 %v3732, %v3728
        %v3901 = vpack.c.b16 %v3733, %v3729
        %v3902 = vpack.c.b16 %v3738, %v3734
        %v3903 = vpack.c.b16 %v3739, %v3735
        %v3904 = vpack.c.b16 %v3740, %v3736
        %v3905 = vpack.c.b16 %v3741, %v3737
        %v3906 = vpack.c.b16 %v3746, %v3742
        %v3907 = vpack.c.b16 %v3747, %v3743
        %v3908 = vpack.c.b16 %v3748, %v3744
        %v3909 = vpack.c.b16 %v3749, %v3745
        %v3910 = vpack.c.b16 %v3754, %v3750
        %v3911 = vpack.c.b16 %v3755, %v3751
        %v3912 = vpack.c.b16 %v3756, %v3752
        %v3913 = vpack.c.b16 %v3757, %v3753
        %v3914 = vpack.c.b16 %v3762, %v3758
        %v3915 = vpack.c.b16 %v3763, %v3759
        %v3916 = vpack.c.b16 %v3764, %v3760
        %v3917 = vpack.c.b16 %v3765, %v3761
        %v3918 = vpack.c.b16 %v3770, %v3766
        %v3919 = vpack.c.b16 %v3771, %v3767
        %v3920 = vpack.c.b16 %v3772, %v3768
        %v3921 = vpack.c.b16 %v3773, %v3769
        %v3922 = vpack.c.b16 %v3778, %v3774
        %v3923 = vpack.c.b16 %v3779, %v3775
        %v3924 = vpack.c.b16 %v3780, %v3776
        %v3925 = vpack.c.b16 %v3781, %v3777
        %v3926 = vpack.c.b16 %v3786, %v3782
        %v3927 = vpack.c.b16 %v3787, %v3783
        %v3928 = vpack.c.b16 %v3788, %v3784
        %v3929 = vpack.c.b16 %v3789, %v3785
        %v3930 = vpack.c.b16 %v3794, %v3790
        %v3931 = vpack.c.b16 %v3795, %v3791
        %v3932 = vpack.c.b16 %v3796, %v3792
        %v3933 = vpack.c.b16 %v3797, %v3793
        %v3934 = vpack.c.b16 %v3802, %v3798
        %v3935 = vpack.c.b16 %v3803, %v3799
        %v3936 = vpack.c.b16 %v3804, %v3800
        %v3937 = vpack.c.b16 %v3805, %v3801
        %v3938 = vpack.c.b16 %v3810, %v3806
        %v3939 = vpack.c.b16 %v3811, %v3807
        %v3940 = vpack.c.b16 %v3812, %v3808
        %v3941 = vpack.c.b16 %v3813, %v3809
        %4070 = vmatprep.subr.bf16.mxu0 %v3815
        %4071 = vmatpush1.bf16.msra.mxu0 %v3814
        %4072 = vmatprep.subr.bf16.mxu0 %v3819
        %4073 = vmatpush1.bf16.msra.mxu0 %v3818
        %4074 = vmatprep.subr.bf16.mxu0 %v3823
        %4075 = vmatpush1.bf16.msra.mxu0 %v3822
        %4076 = vmatprep.subr.bf16.mxu0 %v3827
        %4077 = vmatpush1.bf16.msra.mxu0 %v3826
        %4078 = vmatprep.subr.bf16.mxu0 %v3831
        %4079 = vmatpush1.bf16.msra.mxu0 %v3830
        %4080 = vmatprep.subr.bf16.mxu0 %v3835
        %4081 = vmatpush1.bf16.msra.mxu0 %v3834
        %4082 = vmatprep.subr.bf16.mxu0 %v3839
        %4083 = vmatpush1.bf16.msra.mxu0 %v3838
        %4084 = vmatprep.subr.bf16.mxu0 %v3843
        %4085 = vmatpush1.bf16.msra.mxu0 %v3842
        %4086 = vmatprep.subr.bf16.mxu0 %v3847
        %4087 = vmatpush1.bf16.msra.mxu0 %v3846
        %4088 = vmatprep.subr.bf16.mxu0 %v3851
        %4089 = vmatpush1.bf16.msra.mxu0 %v3850
        %4090 = vmatprep.subr.bf16.mxu0 %v3855
        %4091 = vmatpush1.bf16.msra.mxu0 %v3854
        %4092 = vmatprep.subr.bf16.mxu0 %v3859
        %4093 = vmatpush1.bf16.msra.mxu0 %v3858
        %4094 = vmatprep.subr.bf16.mxu0 %v3863
        %4095 = vmatpush1.bf16.msra.mxu0 %v3862
        %4096 = vmatprep.subr.bf16.mxu0 %v3867
        %4097 = vmatpush1.bf16.msra.mxu0 %v3866
        %4098 = vmatprep.subr.bf16.mxu0 %v3871
        %4099 = vmatpush1.bf16.msra.mxu0 %v3870
        %4100 = vmatprep.subr.bf16.mxu0 %v3875
        %4101 = vmatpush1.bf16.msra.mxu0 %v3874
        %4102 = vmatprep.mubr.bf16.mxu0 %v3294
        %4103 = vmatmul.mubr.bf16.gmra.mrb[0].mxu0 %v3293
        %v4104 = vpop.f32.mrb[0].mxu0
        %v4105 = vadd.f32 0.0, %v4104
        %v4106 = vpop.f32.mrb[0].mxu0
        %v4107 = vadd.f32 0.0, %v4106
        %v4108 = vpop.f32.mrb[0].mxu0
        %v4109 = vadd.f32 0.0, %v4108
        %v4110 = vpop.f32.mrb[0].mxu0
        %v4111 = vadd.f32 0.0, %v4110
        %4112 = vmatprep.mubr.bf16.mxu0 %v3298
        %4113 = vmatmul.mubr.bf16.gmra.mrb[0].mxu0 %v3297
        %v4114 = vpop.f32.mrb[0].mxu0
        %v4115 = vadd.f32 0.0, %v4114
        %v4116 = vpop.f32.mrb[0].mxu0
        %v4117 = vadd.f32 0.0, %v4116
        %v4118 = vpop.f32.mrb[0].mxu0
        %v4119 = vadd.f32 0.0, %v4118
        %v4120 = vpop.f32.mrb[0].mxu0
        %v4121 = vadd.f32 0.0, %v4120
        %4122 = vdwg.mxu0
        %4123 = vmatprep.subr.bf16.mxu0 %v3879
        %4124 = vmatpush1.bf16.msra.mxu0 %v3878
        %4125 = vmatprep.subr.bf16.mxu0 %v3883
        %4126 = vmatpush1.bf16.msra.mxu0 %v3882
        %4127 = vmatprep.subr.bf16.mxu0 %v3887
        %4128 = vmatpush1.bf16.msra.mxu0 %v3886
        %4129 = vmatprep.subr.bf16.mxu0 %v3891
        %4130 = vmatpush1.bf16.msra.mxu0 %v3890
        %4131 = vmatprep.subr.bf16.mxu0 %v3895
        %4132 = vmatpush1.bf16.msra.mxu0 %v3894
        %4133 = vmatprep.subr.bf16.mxu0 %v3899
        %4134 = vmatpush1.bf16.msra.mxu0 %v3898
        %4135 = vmatprep.subr.bf16.mxu0 %v3903
        %4136 = vmatpush1.bf16.msra.mxu0 %v3902
        %4137 = vmatprep.subr.bf16.mxu0 %v3907
        %4138 = vmatpush1.bf16.msra.mxu0 %v3906
        %4139 = vmatprep.subr.bf16.mxu0 %v3911
        %4140 = vmatpush1.bf16.msra.mxu0 %v3910
        %4141 = vmatprep.subr.bf16.mxu0 %v3915
        %4142 = vmatpush1.bf16.msra.mxu0 %v3914
        %4143 = vmatprep.subr.bf16.mxu0 %v3919
        %4144 = vmatpush1.bf16.msra.mxu0 %v3918
        %4145 = vmatprep.subr.bf16.mxu0 %v3923
        %4146 = vmatpush1.bf16.msra.mxu0 %v3922
        %4147 = vmatprep.subr.bf16.mxu0 %v3927
        %4148 = vmatpush1.bf16.msra.mxu0 %v3926
        %4149 = vmatprep.subr.bf16.mxu0 %v3931
        %4150 = vmatpush1.bf16.msra.mxu0 %v3930
        %4151 = vmatprep.subr.bf16.mxu0 %v3935
        %4152 = vmatpush1.bf16.msra.mxu0 %v3934
        %4153 = vmatprep.subr.bf16.mxu0 %v3939
        %4154 = vmatpush1.bf16.msra.mxu0 %v3938
        %4155 = vmatprep.mubr.bf16.mxu0 %v3296
        %4156 = vmatmul.mubr.bf16.gmra.mrb[0].mxu0 %v3295
        %v4157 = vpop.f32.mrb[0].mxu0
        %v4158 = vadd.f32 %v4105, %v4157
        %v4159 = vpop.f32.mrb[0].mxu0
        %v4160 = vadd.f32 %v4107, %v4159
        %v4161 = vpop.f32.mrb[0].mxu0
        %v4162 = vadd.f32 %v4109, %v4161
        %v4163 = vpop.f32.mrb[0].mxu0
        %v4164 = vadd.f32 %v4111, %v4163
        %4165 = vmatprep.mubr.bf16.mxu0 %v3300
        %4166 = vmatmul.mubr.bf16.gmra.mrb[0].mxu0 %v3299
        %v4167 = vpop.f32.mrb[0].mxu0
        %v4168 = vadd.f32 %v4115, %v4167
        %v4169 = vpop.f32.mrb[0].mxu0
        %v4170 = vadd.f32 %v4117, %v4169
        %v4171 = vpop.f32.mrb[0].mxu0
        %v4172 = vadd.f32 %v4119, %v4171
        %v4173 = vpop.f32.mrb[0].mxu0
        %v4174 = vadd.f32 %v4121, %v4173
        %4175 = vdwg.mxu0
        %4176 = vmatprep.subr.bf16.mxu0 %v3817
        %4177 = vmatpush1.bf16.msra.mxu0 %v3816
        %4178 = vmatprep.subr.bf16.mxu0 %v3821
        %4179 = vmatpush1.bf16.msra.mxu0 %v3820
        %4180 = vmatprep.subr.bf16.mxu0 %v3825
        %4181 = vmatpush1.bf16.msra.mxu0 %v3824
        %4182 = vmatprep.subr.bf16.mxu0 %v3829
        %4183 = vmatpush1.bf16.msra.mxu0 %v3828
        %4184 = vmatprep.subr.bf16.mxu0 %v3833
        %4185 = vmatpush1.bf16.msra.mxu0 %v3832
        %4186 = vmatprep.subr.bf16.mxu0 %v3837
        %4187 = vmatpush1.bf16.msra.mxu0 %v3836
        %4188 = vmatprep.subr.bf16.mxu0 %v3841
        %4189 = vmatpush1.bf16.msra.mxu0 %v3840
        %4190 = vmatprep.subr.bf16.mxu0 %v3845
        %4191 = vmatpush1.bf16.msra.mxu0 %v3844
        %4192 = vmatprep.subr.bf16.mxu0 %v3849
        %4193 = vmatpush1.bf16.msra.mxu0 %v3848
        %4194 = vmatprep.subr.bf16.mxu0 %v3853
        %4195 = vmatpush1.bf16.msra.mxu0 %v3852
        %4196 = vmatprep.subr.bf16.mxu0 %v3857
        %4197 = vmatpush1.bf16.msra.mxu0 %v3856
        %4198 = vmatprep.subr.bf16.mxu0 %v3861
        %4199 = vmatpush1.bf16.msra.mxu0 %v3860
        %4200 = vmatprep.subr.bf16.mxu0 %v3865
        %4201 = vmatpush1.bf16.msra.mxu0 %v3864
        %4202 = vmatprep.subr.bf16.mxu0 %v3869
        %4203 = vmatpush1.bf16.msra.mxu0 %v3868
        %4204 = vmatprep.subr.bf16.mxu0 %v3873
        %4205 = vmatpush1.bf16.msra.mxu0 %v3872
        %4206 = vmatprep.subr.bf16.mxu0 %v3877
        %4207 = vmatpush1.bf16.msra.mxu0 %v3876
        %4208 = vmatprep.mubr.bf16.mxu0 %v3294
        %4209 = vmatmul.mubr.bf16.gmra.mrb[0].mxu0 %v3293
        %v4210 = vpop.f32.mrb[0].mxu0
        %v4211 = vadd.f32 0.0, %v4210
        %v4212 = vpop.f32.mrb[0].mxu0
        %v4213 = vadd.f32 0.0, %v4212
        %v4214 = vpop.f32.mrb[0].mxu0
        %v4215 = vadd.f32 0.0, %v4214
        %v4216 = vpop.f32.mrb[0].mxu0
        %v4217 = vadd.f32 0.0, %v4216
        %4218 = vmatprep.mubr.bf16.mxu0 %v3298
        %4219 = vmatmul.mubr.bf16.gmra.mrb[0].mxu0 %v3297
        %v4220 = vpop.f32.mrb[0].mxu0
        %v4221 = vadd.f32 0.0, %v4220
        %v4222 = vpop.f32.mrb[0].mxu0
        %v4223 = vadd.f32 0.0, %v4222
        %v4224 = vpop.f32.mrb[0].mxu0
        %v4225 = vadd.f32 0.0, %v4224
        %v4226 = vpop.f32.mrb[0].mxu0
        %v4227 = vadd.f32 0.0, %v4226
        %4228 = vdwg.mxu0
        %4229 = vmatprep.subr.bf16.mxu0 %v3881
        %4230 = vmatpush1.bf16.msra.mxu0 %v3880
        %4231 = vmatprep.subr.bf16.mxu0 %v3885
        %4232 = vmatpush1.bf16.msra.mxu0 %v3884
        %4233 = vmatprep.subr.bf16.mxu0 %v3889
        %4234 = vmatpush1.bf16.msra.mxu0 %v3888
        %4235 = vmatprep.subr.bf16.mxu0 %v3893
        %4236 = vmatpush1.bf16.msra.mxu0 %v3892
        %4237 = vmatprep.subr.bf16.mxu0 %v3897
        %4238 = vmatpush1.bf16.msra.mxu0 %v3896
        %4239 = vmatprep.subr.bf16.mxu0 %v3901
        %4240 = vmatpush1.bf16.msra.mxu0 %v3900
        %4241 = vmatprep.subr.bf16.mxu0 %v3905
        %4242 = vmatpush1.bf16.msra.mxu0 %v3904
        %4243 = vmatprep.subr.bf16.mxu0 %v3909
        %4244 = vmatpush1.bf16.msra.mxu0 %v3908
        %4245 = vmatprep.subr.bf16.mxu0 %v3913
        %4246 = vmatpush1.bf16.msra.mxu0 %v3912
        %4247 = vmatprep.subr.bf16.mxu0 %v3917
        %4248 = vmatpush1.bf16.msra.mxu0 %v3916
        %4249 = vmatprep.subr.bf16.mxu0 %v3921
        %4250 = vmatpush1.bf16.msra.mxu0 %v3920
        %4251 = vmatprep.subr.bf16.mxu0 %v3925
        %4252 = vmatpush1.bf16.msra.mxu0 %v3924
        %4253 = vmatprep.subr.bf16.mxu0 %v3929
        %4254 = vmatpush1.bf16.msra.mxu0 %v3928
        %4255 = vmatprep.subr.bf16.mxu0 %v3933
        %4256 = vmatpush1.bf16.msra.mxu0 %v3932
        %4257 = vmatprep.subr.bf16.mxu0 %v3937
        %4258 = vmatpush1.bf16.msra.mxu0 %v3936
        %4259 = vmatprep.subr.bf16.mxu0 %v3941
        %4260 = vmatpush1.bf16.msra.mxu0 %v3940
        %4261 = vmatprep.mubr.bf16.mxu0 %v3296
        %4262 = vmatmul.mubr.bf16.gmra.mrb[0].mxu0 %v3295
        %v4263 = vpop.f32.mrb[0].mxu0
        %v4264 = vadd.f32 %v4211, %v4263
        %v4265 = vpop.f32.mrb[0].mxu0
        %v4266 = vadd.f32 %v4213, %v4265
        %v4267 = vpop.f32.mrb[0].mxu0
        %v4268 = vadd.f32 %v4215, %v4267
        %v4269 = vpop.f32.mrb[0].mxu0
        %v4270 = vadd.f32 %v4217, %v4269
        %4271 = vmatprep.mubr.bf16.mxu0 %v3300
        %4272 = vmatmul.mubr.bf16.gmra.mrb[0].mxu0 %v3299
        %v4273 = vpop.f32.mrb[0].mxu0
        %v4274 = vadd.f32 %v4221, %v4273
        %v4275 = vpop.f32.mrb[0].mxu0
        %v4276 = vadd.f32 %v4223, %v4275
        %v4277 = vpop.f32.mrb[0].mxu0
        %v4278 = vadd.f32 %v4225, %v4277
        %v4279 = vpop.f32.mrb[0].mxu0
        %v4280 = vadd.f32 %v4227, %v4279
        %4281 = vdwg.mxu0
        %v4282 = vadd.f32 %v3042, %v4158
        %v4283 = vadd.f32 %v3044, %v4160
        %v4284 = vadd.f32 %v3148, %v4264
        %v4285 = vadd.f32 %v3150, %v4266
        %v4286 = vadd.f32 %v3046, %v4162
        %v4287 = vadd.f32 %v3048, %v4164
        %v4288 = vadd.f32 %v3152, %v4268
        %v4289 = vadd.f32 %v3154, %v4270
        %v4290 = vadd.f32 %v3052, %v4168
        %v4291 = vadd.f32 %v3054, %v4170
        %v4292 = vadd.f32 %v3158, %v4274
        %v4293 = vadd.f32 %v3160, %v4276
        %v4294 = vadd.f32 %v3056, %v4172
        %v4295 = vadd.f32 %v3058, %v4174
        %v4296 = vadd.f32 %v3162, %v4278
        %v4297 = vadd.f32 %v3164, %v4280
        %v4299 = vlaneseq
        %v4300 = vshrl.u32 %v4299, 7
        %v4301 = vsub.s32 0, %v4300
        %v4302 = vrot.slane %v934, %v4301
        %v4303 = vlaneseq
        %v4304 = vshrl.u32 %v4303, 7
        %v4305 = vsub.s32 1, %v4304
        %v4306 = vrot.slane %v934, %v4305
        %v4307 = vlaneseq
        %v4308 = vshrl.u32 %v4307, 7
        %v4309 = vsub.s32 2, %v4308
        %v4310 = vrot.slane %v934, %v4309
        %v4311 = vlaneseq
        %v4312 = vshrl.u32 %v4311, 7
        %v4313 = vsub.s32 3, %v4312
        %v4314 = vrot.slane %v934, %v4313
        %v4319 = vadd.f32 %v4282, %v4302
        %v4320 = vadd.f32 %v4283, %v4306
        %v4321 = vadd.f32 %v4284, %v4310
        %v4322 = vadd.f32 %v4285, %v4314
        %v4323 = vadd.f32 %v4286, %v4302
        %v4324 = vadd.f32 %v4287, %v4306
        %v4325 = vadd.f32 %v4288, %v4310
        %v4326 = vadd.f32 %v4289, %v4314
        %v4327 = vadd.f32 %v4290, %v4302
        %v4328 = vadd.f32 %v4291, %v4306
        %v4329 = vadd.f32 %v4292, %v4310
        %v4330 = vadd.f32 %v4293, %v4314
        %v4331 = vadd.f32 %v4294, %v4302
        %v4332 = vadd.f32 %v4295, %v4306
        %v4333 = vadd.f32 %v4296, %v4310
        %v4334 = vadd.f32 %v4297, %v4314
        %v4335 = vmax.f32 %v4319, 0.0
        %v4336 = vmax.f32 %v4320, 0.0
        %v4337 = vmax.f32 %v4321, 0.0
        %v4338 = vmax.f32 %v4322, 0.0
        %v4339 = vmax.f32 %v4323, 0.0
        %v4340 = vmax.f32 %v4324, 0.0
        %v4341 = vmax.f32 %v4325, 0.0
        %v4342 = vmax.f32 %v4326, 0.0
        %v4343 = vmax.f32 %v4327, 0.0
        %v4344 = vmax.f32 %v4328, 0.0
        %v4345 = vmax.f32 %v4329, 0.0
        %v4346 = vmax.f32 %v4330, 0.0
        %v4347 = vmax.f32 %v4331, 0.0
        %v4348 = vmax.f32 %v4332, 0.0
        %v4349 = vmax.f32 %v4333, 0.0
        %v4350 = vmax.f32 %v4334, 0.0
        %v4351 = vpack.c.bf16 %v4339, %v4335
        %v4352 = vpack.c.bf16 %v4340, %v4336
        %v4353 = vpack.c.bf16 %v4341, %v4337
        %v4354 = vpack.c.bf16 %v4342, %v4338
        %v4355 = vpack.c.bf16 %v4347, %v4343
        %v4356 = vpack.c.bf16 %v4348, %v4344
        %v4357 = vpack.c.bf16 %v4349, %v4345
        %v4358 = vpack.c.bf16 %v4350, %v4346
        %v4359 = vld [vmem:[#allocation10] sm:$0xff]
        %v4360 = vld [vmem:[#allocation10 + $0x8] sm:$0xff]
        %v4361 = vld [vmem:[#allocation10 + $0x10] sm:$0xff]
        %v4362 = vld [vmem:[#allocation10 + $0x18] sm:$0xff]
        %v4363 = vld [vmem:[#allocation10 + $0x20] sm:$0xff]
        %v4364 = vld [vmem:[#allocation10 + $0x28] sm:$0xff]
        %v4365 = vld [vmem:[#allocation10 + $0x30] sm:$0xff]
        %v4366 = vld [vmem:[#allocation10 + $0x38] sm:$0xff]
        %v4367 = vld [vmem:[#allocation10 + $0x40] sm:$0xff]
        %v4368 = vld [vmem:[#allocation10 + $0x48] sm:$0xff]
        %v4369 = vld [vmem:[#allocation10 + $0x50] sm:$0xff]
        %v4370 = vld [vmem:[#allocation10 + $0x58] sm:$0xff]
        %v4371 = vld [vmem:[#allocation10 + $0x60] sm:$0xff]
        %v4372 = vld [vmem:[#allocation10 + $0x68] sm:$0xff]
        %v4373 = vld [vmem:[#allocation10 + $0x70] sm:$0xff]
        %v4374 = vld [vmem:[#allocation10 + $0x78] sm:$0xff]
        %v4375 = vld [vmem:[#allocation10 + $0x80] sm:$0xff]
        %v4376 = vld [vmem:[#allocation10 + $0x88] sm:$0xff]
        %v4377 = vld [vmem:[#allocation10 + $0x90] sm:$0xff]
        %v4378 = vld [vmem:[#allocation10 + $0x98] sm:$0xff]
        %v4379 = vld [vmem:[#allocation10 + $0xa0] sm:$0xff]
        %v4380 = vld [vmem:[#allocation10 + $0xa8] sm:$0xff]
        %v4381 = vld [vmem:[#allocation10 + $0xb0] sm:$0xff]
        %v4382 = vld [vmem:[#allocation10 + $0xb8] sm:$0xff]
        %v4383 = vld [vmem:[#allocation10 + $0xc0] sm:$0xff]
        %v4384 = vld [vmem:[#allocation10 + $0xc8] sm:$0xff]
        %v4385 = vld [vmem:[#allocation10 + $0xd0] sm:$0xff]
        %v4386 = vld [vmem:[#allocation10 + $0xd8] sm:$0xff]
        %v4387 = vld [vmem:[#allocation10 + $0xe0] sm:$0xff]
        %v4388 = vld [vmem:[#allocation10 + $0xe8] sm:$0xff]
        %v4389 = vld [vmem:[#allocation10 + $0xf0] sm:$0xff]
        %v4390 = vld [vmem:[#allocation10 + $0xf8] sm:$0xff]
        %v4391 = vld [vmem:[#allocation10 + $0x100] sm:$0xff]
        %v4392 = vld [vmem:[#allocation10 + $0x108] sm:$0xff]
        %v4393 = vld [vmem:[#allocation10 + $0x110] sm:$0xff]
        %v4394 = vld [vmem:[#allocation10 + $0x118] sm:$0xff]
        %v4395 = vld [vmem:[#allocation10 + $0x120] sm:$0xff]
        %v4396 = vld [vmem:[#allocation10 + $0x128] sm:$0xff]
        %v4397 = vld [vmem:[#allocation10 + $0x130] sm:$0xff]
        %v4398 = vld [vmem:[#allocation10 + $0x138] sm:$0xff]
        %v4399 = vld [vmem:[#allocation10 + $0x140] sm:$0xff]
        %v4400 = vld [vmem:[#allocation10 + $0x148] sm:$0xff]
        %v4401 = vld [vmem:[#allocation10 + $0x150] sm:$0xff]
        %v4402 = vld [vmem:[#allocation10 + $0x158] sm:$0xff]
        %v4403 = vld [vmem:[#allocation10 + $0x160] sm:$0xff]
        %v4404 = vld [vmem:[#allocation10 + $0x168] sm:$0xff]
        %v4405 = vld [vmem:[#allocation10 + $0x170] sm:$0xff]
        %v4406 = vld [vmem:[#allocation10 + $0x178] sm:$0xff]
        %v4407 = vld [vmem:[#allocation10 + $0x180] sm:$0xff]
        %v4408 = vld [vmem:[#allocation10 + $0x188] sm:$0xff]
        %v4409 = vld [vmem:[#allocation10 + $0x190] sm:$0xff]
        %v4410 = vld [vmem:[#allocation10 + $0x198] sm:$0xff]
        %v4411 = vld [vmem:[#allocation10 + $0x1a0] sm:$0xff]
        %v4412 = vld [vmem:[#allocation10 + $0x1a8] sm:$0xff]
        %v4413 = vld [vmem:[#allocation10 + $0x1b0] sm:$0xff]
        %v4414 = vld [vmem:[#allocation10 + $0x1b8] sm:$0xff]
        %v4415 = vld [vmem:[#allocation10 + $0x1c0] sm:$0xff]
        %v4416 = vld [vmem:[#allocation10 + $0x1c8] sm:$0xff]
        %v4417 = vld [vmem:[#allocation10 + $0x1d0] sm:$0xff]
        %v4418 = vld [vmem:[#allocation10 + $0x1d8] sm:$0xff]
        %v4419 = vld [vmem:[#allocation10 + $0x1e0] sm:$0xff]
        %v4420 = vld [vmem:[#allocation10 + $0x1e8] sm:$0xff]
        %v4421 = vld [vmem:[#allocation10 + $0x1f0] sm:$0xff]
        %v4422 = vld [vmem:[#allocation10 + $0x1f8] sm:$0xff]
        %v4423 = vld [vmem:[#allocation10 + $0x200] sm:$0xff]
        %v4424 = vld [vmem:[#allocation10 + $0x208] sm:$0xff]
        %v4425 = vld [vmem:[#allocation10 + $0x210] sm:$0xff]
        %v4426 = vld [vmem:[#allocation10 + $0x218] sm:$0xff]
        %v4427 = vld [vmem:[#allocation10 + $0x220] sm:$0xff]
        %v4428 = vld [vmem:[#allocation10 + $0x228] sm:$0xff]
        %v4429 = vld [vmem:[#allocation10 + $0x230] sm:$0xff]
        %v4430 = vld [vmem:[#allocation10 + $0x238] sm:$0xff]
        %v4431 = vld [vmem:[#allocation10 + $0x240] sm:$0xff]
        %v4432 = vld [vmem:[#allocation10 + $0x248] sm:$0xff]
        %v4433 = vld [vmem:[#allocation10 + $0x250] sm:$0xff]
        %v4434 = vld [vmem:[#allocation10 + $0x258] sm:$0xff]
        %v4435 = vld [vmem:[#allocation10 + $0x260] sm:$0xff]
        %v4436 = vld [vmem:[#allocation10 + $0x268] sm:$0xff]
        %v4437 = vld [vmem:[#allocation10 + $0x270] sm:$0xff]
        %v4438 = vld [vmem:[#allocation10 + $0x278] sm:$0xff]
        %v4439 = vld [vmem:[#allocation10 + $0x280] sm:$0xff]
        %v4440 = vld [vmem:[#allocation10 + $0x288] sm:$0xff]
        %v4441 = vld [vmem:[#allocation10 + $0x290] sm:$0xff]
        %v4442 = vld [vmem:[#allocation10 + $0x298] sm:$0xff]
        %v4443 = vld [vmem:[#allocation10 + $0x2a0] sm:$0xff]
        %v4444 = vld [vmem:[#allocation10 + $0x2a8] sm:$0xff]
        %v4445 = vld [vmem:[#allocation10 + $0x2b0] sm:$0xff]
        %v4446 = vld [vmem:[#allocation10 + $0x2b8] sm:$0xff]
        %v4447 = vld [vmem:[#allocation10 + $0x2c0] sm:$0xff]
        %v4448 = vld [vmem:[#allocation10 + $0x2c8] sm:$0xff]
        %v4449 = vld [vmem:[#allocation10 + $0x2d0] sm:$0xff]
        %v4450 = vld [vmem:[#allocation10 + $0x2d8] sm:$0xff]
        %v4451 = vld [vmem:[#allocation10 + $0x2e0] sm:$0xff]
        %v4452 = vld [vmem:[#allocation10 + $0x2e8] sm:$0xff]
        %v4453 = vld [vmem:[#allocation10 + $0x2f0] sm:$0xff]
        %v4454 = vld [vmem:[#allocation10 + $0x2f8] sm:$0xff]
        %v4455 = vld [vmem:[#allocation10 + $0x300] sm:$0xff]
        %v4456 = vld [vmem:[#allocation10 + $0x308] sm:$0xff]
        %v4457 = vld [vmem:[#allocation10 + $0x310] sm:$0xff]
        %v4458 = vld [vmem:[#allocation10 + $0x318] sm:$0xff]
        %v4459 = vld [vmem:[#allocation10 + $0x320] sm:$0xff]
        %v4460 = vld [vmem:[#allocation10 + $0x328] sm:$0xff]
        %v4461 = vld [vmem:[#allocation10 + $0x330] sm:$0xff]
        %v4462 = vld [vmem:[#allocation10 + $0x338] sm:$0xff]
        %v4463 = vld [vmem:[#allocation10 + $0x340] sm:$0xff]
        %v4464 = vld [vmem:[#allocation10 + $0x348] sm:$0xff]
        %v4465 = vld [vmem:[#allocation10 + $0x350] sm:$0xff]
        %v4466 = vld [vmem:[#allocation10 + $0x358] sm:$0xff]
        %v4467 = vld [vmem:[#allocation10 + $0x360] sm:$0xff]
        %v4468 = vld [vmem:[#allocation10 + $0x368] sm:$0xff]
        %v4469 = vld [vmem:[#allocation10 + $0x370] sm:$0xff]
        %v4470 = vld [vmem:[#allocation10 + $0x378] sm:$0xff]
        %v4471 = vld [vmem:[#allocation10 + $0x380] sm:$0xff]
        %v4472 = vld [vmem:[#allocation10 + $0x388] sm:$0xff]
        %v4473 = vld [vmem:[#allocation10 + $0x390] sm:$0xff]
        %v4474 = vld [vmem:[#allocation10 + $0x398] sm:$0xff]
        %v4475 = vld [vmem:[#allocation10 + $0x3a0] sm:$0xff]
        %v4476 = vld [vmem:[#allocation10 + $0x3a8] sm:$0xff]
        %v4477 = vld [vmem:[#allocation10 + $0x3b0] sm:$0xff]
        %v4478 = vld [vmem:[#allocation10 + $0x3b8] sm:$0xff]
        %v4479 = vld [vmem:[#allocation10 + $0x3c0] sm:$0xff]
        %v4480 = vld [vmem:[#allocation10 + $0x3c8] sm:$0xff]
        %v4481 = vld [vmem:[#allocation10 + $0x3d0] sm:$0xff]
        %v4482 = vld [vmem:[#allocation10 + $0x3d8] sm:$0xff]
        %v4483 = vld [vmem:[#allocation10 + $0x3e0] sm:$0xff]
        %v4484 = vld [vmem:[#allocation10 + $0x3e8] sm:$0xff]
        %v4485 = vld [vmem:[#allocation10 + $0x3f0] sm:$0xff]
        %v4486 = vld [vmem:[#allocation10 + $0x3f8] sm:$0xff]
        %4487 = vmatprep.subr.bf16.mxu0 %v395
        %4488 = vmatpush1.bf16.msra.mxu0 %v394
        %4489 = vmatprep.subr.bf16.mxu0 %v397
        %4490 = vmatpush1.bf16.msra.mxu0 %v396
        %4491 = vmatprep.subr.bf16.mxu0 0
        %4492 = vmatpush1.bf16.msra.mxu0 0
        %4493 = vmatprep.subr.bf16.mxu0 0
        %4494 = vmatpush1.bf16.msra.mxu0 0
        %4495 = vmatprep.subr.bf16.mxu0 0
        %4496 = vmatpush1.bf16.msra.mxu0 0
        %4497 = vmatprep.subr.bf16.mxu0 0
        %4498 = vmatpush1.bf16.msra.mxu0 0
        %4499 = vmatprep.subr.bf16.mxu0 0
        %4500 = vmatpush1.bf16.msra.mxu0 0
        %4501 = vmatprep.subr.bf16.mxu0 0
        %4502 = vmatpush1.bf16.msra.mxu0 0
        %4503 = vmatprep.subr.bf16.mxu0 0
        %4504 = vmatpush1.bf16.msra.mxu0 0
        %4505 = vmatprep.subr.bf16.mxu0 0
        %4506 = vmatpush1.bf16.msra.mxu0 0
        %4507 = vmatprep.subr.bf16.mxu0 0
        %4508 = vmatpush1.bf16.msra.mxu0 0
        %4509 = vmatprep.subr.bf16.mxu0 0
        %4510 = vmatpush1.bf16.msra.mxu0 0
        %4511 = vmatprep.subr.bf16.mxu0 0
        %4512 = vmatpush1.bf16.msra.mxu0 0
        %4513 = vmatprep.subr.bf16.mxu0 0
        %4514 = vmatpush1.bf16.msra.mxu0 0
        %4515 = vmatprep.subr.bf16.mxu0 0
        %4516 = vmatpush1.bf16.msra.mxu0 0
        %4517 = vmatprep.subr.bf16.mxu0 0
        %4518 = vmatpush1.bf16.msra.mxu0 0
        %4519 = vmatprep.mubr.bf16.mxu0 0
        %4520 = vmatmul.mubr.bf16.gmra.mrb[0].mxu0 %v1214
        %v4521 = vpop.f32.mrb[0].mxu0
        %v4522 = vadd.f32 0.0, %v4521
        %v4523 = vpop.f32.mrb[0].mxu0
        %v4524 = vadd.f32 0.0, %v4523
        %v4525 = vpop.f32.mrb[0].mxu0
        %v4526 = vadd.f32 0.0, %v4525
        %v4527 = vpop.f32.mrb[0].mxu0
        %v4528 = vadd.f32 0.0, %v4527
        %4529 = vmatprep.mubr.bf16.mxu0 0
        %4530 = vmatmul.mubr.bf16.gmra.mrb[0].mxu0 %v1217
        %v4531 = vpop.f32.mrb[0].mxu0
        %v4532 = vadd.f32 0.0, %v4531
        %v4533 = vpop.f32.mrb[0].mxu0
        %v4534 = vadd.f32 0.0, %v4533
        %v4535 = vpop.f32.mrb[0].mxu0
        %v4536 = vadd.f32 0.0, %v4535
        %v4537 = vpop.f32.mrb[0].mxu0
        %v4538 = vadd.f32 0.0, %v4537
        %4539 = vdwg.mxu0
        %v4540 = vpack.c.bf16 %v4526, %v4522
        %v4541 = vpack.c.bf16 %v4528, %v4524
        %v4542 = vpack.c.bf16 %v4536, %v4532
        %v4543 = vpack.c.bf16 %v4538, %v4534
        %v4544 = vld [vmem:[#allocation11] sm:$0xff]
        %v4545 = vld [vmem:[#allocation11 + $0x8] sm:$0xff]
        %v4546 = vld [vmem:[#allocation11 + $0x10] sm:$0xff]
        %v4547 = vld [vmem:[#allocation11 + $0x18] sm:$0xff]
        %v4548 = vld [vmem:[#allocation11 + $0x20] sm:$0xff]
        %v4549 = vld [vmem:[#allocation11 + $0x28] sm:$0xff]
        %v4550 = vld [vmem:[#allocation11 + $0x30] sm:$0xff]
        %v4551 = vld [vmem:[#allocation11 + $0x38] sm:$0xff]
        %v4552 = vld [vmem:[#allocation11 + $0x40] sm:$0xff]
        %v4553 = vld [vmem:[#allocation11 + $0x48] sm:$0xff]
        %v4554 = vld [vmem:[#allocation11 + $0x50] sm:$0xff]
        %v4555 = vld [vmem:[#allocation11 + $0x58] sm:$0xff]
        %v4556 = vld [vmem:[#allocation11 + $0x60] sm:$0xff]
        %v4557 = vld [vmem:[#allocation11 + $0x68] sm:$0xff]
        %v4558 = vld [vmem:[#allocation11 + $0x70] sm:$0xff]
        %v4559 = vld [vmem:[#allocation11 + $0x78] sm:$0xff]
        %v4560 = vld [vmem:[#allocation11 + $0x80] sm:$0xff]
        %v4561 = vld [vmem:[#allocation11 + $0x88] sm:$0xff]
        %v4562 = vld [vmem:[#allocation11 + $0x90] sm:$0xff]
        %v4563 = vld [vmem:[#allocation11 + $0x98] sm:$0xff]
        %v4564 = vld [vmem:[#allocation11 + $0xa0] sm:$0xff]
        %v4565 = vld [vmem:[#allocation11 + $0xa8] sm:$0xff]
        %v4566 = vld [vmem:[#allocation11 + $0xb0] sm:$0xff]
        %v4567 = vld [vmem:[#allocation11 + $0xb8] sm:$0xff]
        %v4568 = vld [vmem:[#allocation11 + $0xc0] sm:$0xff]
        %v4569 = vld [vmem:[#allocation11 + $0xc8] sm:$0xff]
        %v4570 = vld [vmem:[#allocation11 + $0xd0] sm:$0xff]
        %v4571 = vld [vmem:[#allocation11 + $0xd8] sm:$0xff]
        %v4572 = vld [vmem:[#allocation11 + $0xe0] sm:$0xff]
        %v4573 = vld [vmem:[#allocation11 + $0xe8] sm:$0xff]
        %v4574 = vld [vmem:[#allocation11 + $0xf0] sm:$0xff]
        %v4575 = vld [vmem:[#allocation11 + $0xf8] sm:$0xff]
        %v4576 = vld [vmem:[#allocation11 + $0x100] sm:$0xff]
        %v4577 = vld [vmem:[#allocation11 + $0x108] sm:$0xff]
        %v4578 = vld [vmem:[#allocation11 + $0x110] sm:$0xff]
        %v4579 = vld [vmem:[#allocation11 + $0x118] sm:$0xff]
        %v4580 = vld [vmem:[#allocation11 + $0x120] sm:$0xff]
        %v4581 = vld [vmem:[#allocation11 + $0x128] sm:$0xff]
        %v4582 = vld [vmem:[#allocation11 + $0x130] sm:$0xff]
        %v4583 = vld [vmem:[#allocation11 + $0x138] sm:$0xff]
        %v4584 = vld [vmem:[#allocation11 + $0x140] sm:$0xff]
        %v4585 = vld [vmem:[#allocation11 + $0x148] sm:$0xff]
        %v4586 = vld [vmem:[#allocation11 + $0x150] sm:$0xff]
        %v4587 = vld [vmem:[#allocation11 + $0x158] sm:$0xff]
        %v4588 = vld [vmem:[#allocation11 + $0x160] sm:$0xff]
        %v4589 = vld [vmem:[#allocation11 + $0x168] sm:$0xff]
        %v4590 = vld [vmem:[#allocation11 + $0x170] sm:$0xff]
        %v4591 = vld [vmem:[#allocation11 + $0x178] sm:$0xff]
        %v4592 = vld [vmem:[#allocation11 + $0x180] sm:$0xff]
        %v4593 = vld [vmem:[#allocation11 + $0x188] sm:$0xff]
        %v4594 = vld [vmem:[#allocation11 + $0x190] sm:$0xff]
        %v4595 = vld [vmem:[#allocation11 + $0x198] sm:$0xff]
        %v4596 = vld [vmem:[#allocation11 + $0x1a0] sm:$0xff]
        %v4597 = vld [vmem:[#allocation11 + $0x1a8] sm:$0xff]
        %v4598 = vld [vmem:[#allocation11 + $0x1b0] sm:$0xff]
        %v4599 = vld [vmem:[#allocation11 + $0x1b8] sm:$0xff]
        %v4600 = vld [vmem:[#allocation11 + $0x1c0] sm:$0xff]
        %v4601 = vld [vmem:[#allocation11 + $0x1c8] sm:$0xff]
        %v4602 = vld [vmem:[#allocation11 + $0x1d0] sm:$0xff]
        %v4603 = vld [vmem:[#allocation11 + $0x1d8] sm:$0xff]
        %v4604 = vld [vmem:[#allocation11 + $0x1e0] sm:$0xff]
        %v4605 = vld [vmem:[#allocation11 + $0x1e8] sm:$0xff]
        %v4606 = vld [vmem:[#allocation11 + $0x1f0] sm:$0xff]
        %v4607 = vld [vmem:[#allocation11 + $0x1f8] sm:$0xff]
        %v4672 = vunpack.c.l.b16 %v4544
        %v4673 = vunpack.c.h.b16 %v4544
        %v4674 = vunpack.c.l.b16 %v4545
        %v4675 = vunpack.c.h.b16 %v4545
        %v4676 = vunpack.c.l.b16 %v4546
        %v4677 = vunpack.c.h.b16 %v4546
        %v4678 = vunpack.c.l.b16 %v4547
        %v4679 = vunpack.c.h.b16 %v4547
        %v4680 = vunpack.c.l.b16 %v4548
        %v4681 = vunpack.c.h.b16 %v4548
        %v4682 = vunpack.c.l.b16 %v4549
        %v4683 = vunpack.c.h.b16 %v4549
        %v4684 = vunpack.c.l.b16 %v4550
        %v4685 = vunpack.c.h.b16 %v4550
        %v4686 = vunpack.c.l.b16 %v4551
        %v4687 = vunpack.c.h.b16 %v4551
        %v4688 = vunpack.c.l.b16 %v4552
        %v4689 = vunpack.c.h.b16 %v4552
        %v4690 = vunpack.c.l.b16 %v4553
        %v4691 = vunpack.c.h.b16 %v4553
        %v4692 = vunpack.c.l.b16 %v4554
        %v4693 = vunpack.c.h.b16 %v4554
        %v4694 = vunpack.c.l.b16 %v4555
        %v4695 = vunpack.c.h.b16 %v4555
        %v4696 = vunpack.c.l.b16 %v4556
        %v4697 = vunpack.c.h.b16 %v4556
        %v4698 = vunpack.c.l.b16 %v4557
        %v4699 = vunpack.c.h.b16 %v4557
        %v4700 = vunpack.c.l.b16 %v4558
        %v4701 = vunpack.c.h.b16 %v4558
        %v4702 = vunpack.c.l.b16 %v4559
        %v4703 = vunpack.c.h.b16 %v4559
        %v4704 = vunpack.c.l.b16 %v4560
        %v4705 = vunpack.c.h.b16 %v4560
        %v4706 = vunpack.c.l.b16 %v4561
        %v4707 = vunpack.c.h.b16 %v4561
        %v4708 = vunpack.c.l.b16 %v4562
        %v4709 = vunpack.c.h.b16 %v4562
        %v4710 = vunpack.c.l.b16 %v4563
        %v4711 = vunpack.c.h.b16 %v4563
        %v4712 = vunpack.c.l.b16 %v4564
        %v4713 = vunpack.c.h.b16 %v4564
        %v4714 = vunpack.c.l.b16 %v4565
        %v4715 = vunpack.c.h.b16 %v4565
        %v4716 = vunpack.c.l.b16 %v4566
        %v4717 = vunpack.c.h.b16 %v4566
        %v4718 = vunpack.c.l.b16 %v4567
        %v4719 = vunpack.c.h.b16 %v4567
        %v4720 = vunpack.c.l.b16 %v4568
        %v4721 = vunpack.c.h.b16 %v4568
        %v4722 = vunpack.c.l.b16 %v4569
        %v4723 = vunpack.c.h.b16 %v4569
        %v4724 = vunpack.c.l.b16 %v4570
        %v4725 = vunpack.c.h.b16 %v4570
        %v4726 = vunpack.c.l.b16 %v4571
        %v4727 = vunpack.c.h.b16 %v4571
        %v4728 = vunpack.c.l.b16 %v4572
        %v4729 = vunpack.c.h.b16 %v4572
        %v4730 = vunpack.c.l.b16 %v4573
        %v4731 = vunpack.c.h.b16 %v4573
        %v4732 = vunpack.c.l.b16 %v4574
        %v4733 = vunpack.c.h.b16 %v4574
        %v4734 = vunpack.c.l.b16 %v4575
        %v4735 = vunpack.c.h.b16 %v4575
        %v4736 = vunpack.c.l.b16 %v4576
        %v4737 = vunpack.c.h.b16 %v4576
        %v4738 = vunpack.c.l.b16 %v4577
        %v4739 = vunpack.c.h.b16 %v4577
        %v4740 = vunpack.c.l.b16 %v4578
        %v4741 = vunpack.c.h.b16 %v4578
        %v4742 = vunpack.c.l.b16 %v4579
        %v4743 = vunpack.c.h.b16 %v4579
        %v4744 = vunpack.c.l.b16 %v4580
        %v4745 = vunpack.c.h.b16 %v4580
        %v4746 = vunpack.c.l.b16 %v4581
        %v4747 = vunpack.c.h.b16 %v4581
        %v4748 = vunpack.c.l.b16 %v4582
        %v4749 = vunpack.c.h.b16 %v4582
        %v4750 = vunpack.c.l.b16 %v4583
        %v4751 = vunpack.c.h.b16 %v4583
        %v4752 = vunpack.c.l.b16 %v4584
        %v4753 = vunpack.c.h.b16 %v4584
        %v4754 = vunpack.c.l.b16 %v4585
        %v4755 = vunpack.c.h.b16 %v4585
        %v4756 = vunpack.c.l.b16 %v4586
        %v4757 = vunpack.c.h.b16 %v4586
        %v4758 = vunpack.c.l.b16 %v4587
        %v4759 = vunpack.c.h.b16 %v4587
        %v4760 = vunpack.c.l.b16 %v4588
        %v4761 = vunpack.c.h.b16 %v4588
        %v4762 = vunpack.c.l.b16 %v4589
        %v4763 = vunpack.c.h.b16 %v4589
        %v4764 = vunpack.c.l.b16 %v4590
        %v4765 = vunpack.c.h.b16 %v4590
        %v4766 = vunpack.c.l.b16 %v4591
        %v4767 = vunpack.c.h.b16 %v4591
        %v4768 = vunpack.c.l.b16 %v4592
        %v4769 = vunpack.c.h.b16 %v4592
        %v4770 = vunpack.c.l.b16 %v4593
        %v4771 = vunpack.c.h.b16 %v4593
        %v4772 = vunpack.c.l.b16 %v4594
        %v4773 = vunpack.c.h.b16 %v4594
        %v4774 = vunpack.c.l.b16 %v4595
        %v4775 = vunpack.c.h.b16 %v4595
        %v4776 = vunpack.c.l.b16 %v4596
        %v4777 = vunpack.c.h.b16 %v4596
        %v4778 = vunpack.c.l.b16 %v4597
        %v4779 = vunpack.c.h.b16 %v4597
        %v4780 = vunpack.c.l.b16 %v4598
        %v4781 = vunpack.c.h.b16 %v4598
        %v4782 = vunpack.c.l.b16 %v4599
        %v4783 = vunpack.c.h.b16 %v4599
        %v4784 = vunpack.c.l.b16 %v4600
        %v4785 = vunpack.c.h.b16 %v4600
        %v4786 = vunpack.c.l.b16 %v4601
        %v4787 = vunpack.c.h.b16 %v4601
        %v4788 = vunpack.c.l.b16 %v4602
        %v4789 = vunpack.c.h.b16 %v4602
        %v4790 = vunpack.c.l.b16 %v4603
        %v4791 = vunpack.c.h.b16 %v4603
        %v4792 = vunpack.c.l.b16 %v4604
        %v4793 = vunpack.c.h.b16 %v4604
        %v4794 = vunpack.c.l.b16 %v4605
        %v4795 = vunpack.c.h.b16 %v4605
        %v4796 = vunpack.c.l.b16 %v4606
        %v4797 = vunpack.c.h.b16 %v4606
        %v4798 = vunpack.c.l.b16 %v4607
        %v4799 = vunpack.c.h.b16 %v4607
        %v4800 = vpack.c.b16 %v4676, %v4672
        %v4801 = vpack.c.b16 %v4677, %v4673
        %v4802 = vpack.c.b16 %v4678, %v4674
        %v4803 = vpack.c.b16 %v4679, %v4675
        %v4804 = vpack.c.b16 %v4684, %v4680
        %v4805 = vpack.c.b16 %v4685, %v4681
        %v4806 = vpack.c.b16 %v4686, %v4682
        %v4807 = vpack.c.b16 %v4687, %v4683
        %v4808 = vpack.c.b16 %v4692, %v4688
        %v4809 = vpack.c.b16 %v4693, %v4689
        %v4810 = vpack.c.b16 %v4694, %v4690
        %v4811 = vpack.c.b16 %v4695, %v4691
        %v4812 = vpack.c.b16 %v4700, %v4696
        %v4813 = vpack.c.b16 %v4701, %v4697
        %v4814 = vpack.c.b16 %v4702, %v4698
        %v4815 = vpack.c.b16 %v4703, %v4699
        %v4816 = vpack.c.b16 %v4708, %v4704
        %v4817 = vpack.c.b16 %v4709, %v4705
        %v4818 = vpack.c.b16 %v4710, %v4706
        %v4819 = vpack.c.b16 %v4711, %v4707
        %v4820 = vpack.c.b16 %v4716, %v4712
        %v4821 = vpack.c.b16 %v4717, %v4713
        %v4822 = vpack.c.b16 %v4718, %v4714
        %v4823 = vpack.c.b16 %v4719, %v4715
        %v4824 = vpack.c.b16 %v4724, %v4720
        %v4825 = vpack.c.b16 %v4725, %v4721
        %v4826 = vpack.c.b16 %v4726, %v4722
        %v4827 = vpack.c.b16 %v4727, %v4723
        %v4828 = vpack.c.b16 %v4732, %v4728
        %v4829 = vpack.c.b16 %v4733, %v4729
        %v4830 = vpack.c.b16 %v4734, %v4730
        %v4831 = vpack.c.b16 %v4735, %v4731
        %v4832 = vpack.c.b16 %v4740, %v4736
        %v4833 = vpack.c.b16 %v4741, %v4737
        %v4834 = vpack.c.b16 %v4742, %v4738
        %v4835 = vpack.c.b16 %v4743, %v4739
        %v4836 = vpack.c.b16 %v4748, %v4744
        %v4837 = vpack.c.b16 %v4749, %v4745
        %v4838 = vpack.c.b16 %v4750, %v4746
        %v4839 = vpack.c.b16 %v4751, %v4747
        %v4840 = vpack.c.b16 %v4756, %v4752
        %v4841 = vpack.c.b16 %v4757, %v4753
        %v4842 = vpack.c.b16 %v4758, %v4754
        %v4843 = vpack.c.b16 %v4759, %v4755
        %v4844 = vpack.c.b16 %v4764, %v4760
        %v4845 = vpack.c.b16 %v4765, %v4761
        %v4846 = vpack.c.b16 %v4766, %v4762
        %v4847 = vpack.c.b16 %v4767, %v4763
        %v4848 = vpack.c.b16 %v4772, %v4768
        %v4849 = vpack.c.b16 %v4773, %v4769
        %v4850 = vpack.c.b16 %v4774, %v4770
        %v4851 = vpack.c.b16 %v4775, %v4771
        %v4852 = vpack.c.b16 %v4780, %v4776
        %v4853 = vpack.c.b16 %v4781, %v4777
        %v4854 = vpack.c.b16 %v4782, %v4778
        %v4855 = vpack.c.b16 %v4783, %v4779
        %v4856 = vpack.c.b16 %v4788, %v4784
        %v4857 = vpack.c.b16 %v4789, %v4785
        %v4858 = vpack.c.b16 %v4790, %v4786
        %v4859 = vpack.c.b16 %v4791, %v4787
        %v4860 = vpack.c.b16 %v4796, %v4792
        %v4861 = vpack.c.b16 %v4797, %v4793
        %v4862 = vpack.c.b16 %v4798, %v4794
        %v4863 = vpack.c.b16 %v4799, %v4795
        %4928 = vmatprep.subr.bf16.mxu0 %v4801
        %4929 = vmatpush1.bf16.msra.mxu0 %v4800
        %4930 = vmatprep.subr.bf16.mxu0 %v4805
        %4931 = vmatpush1.bf16.msra.mxu0 %v4804
        %4932 = vmatprep.subr.bf16.mxu0 %v4809
        %4933 = vmatpush1.bf16.msra.mxu0 %v4808
        %4934 = vmatprep.subr.bf16.mxu0 %v4813
        %4935 = vmatpush1.bf16.msra.mxu0 %v4812
        %4936 = vmatprep.subr.bf16.mxu0 %v4817
        %4937 = vmatpush1.bf16.msra.mxu0 %v4816
        %4938 = vmatprep.subr.bf16.mxu0 %v4821
        %4939 = vmatpush1.bf16.msra.mxu0 %v4820
        %4940 = vmatprep.subr.bf16.mxu0 %v4825
        %4941 = vmatpush1.bf16.msra.mxu0 %v4824
        %4942 = vmatprep.subr.bf16.mxu0 %v4829
        %4943 = vmatpush1.bf16.msra.mxu0 %v4828
        %4944 = vmatprep.subr.bf16.mxu0 %v4833
        %4945 = vmatpush1.bf16.msra.mxu0 %v4832
        %4946 = vmatprep.subr.bf16.mxu0 %v4837
        %4947 = vmatpush1.bf16.msra.mxu0 %v4836
        %4948 = vmatprep.subr.bf16.mxu0 %v4841
        %4949 = vmatpush1.bf16.msra.mxu0 %v4840
        %4950 = vmatprep.subr.bf16.mxu0 %v4845
        %4951 = vmatpush1.bf16.msra.mxu0 %v4844
        %4952 = vmatprep.subr.bf16.mxu0 %v4849
        %4953 = vmatpush1.bf16.msra.mxu0 %v4848
        %4954 = vmatprep.subr.bf16.mxu0 %v4853
        %4955 = vmatpush1.bf16.msra.mxu0 %v4852
        %4956 = vmatprep.subr.bf16.mxu0 %v4857
        %4957 = vmatpush1.bf16.msra.mxu0 %v4856
        %4958 = vmatprep.subr.bf16.mxu0 %v4861
        %4959 = vmatpush1.bf16.msra.mxu0 %v4860
        %4960 = vmatprep.mubr.bf16.mxu0 %v4541
        %4961 = vmatmul.mubr.bf16.gmra.mrb[0].mxu0 %v4540
        %v4962 = vpop.f32.mrb[0].mxu0
        %v4963 = vadd.f32 0.0, %v4962
        %v4964 = vpop.f32.mrb[0].mxu0
        %v4965 = vadd.f32 0.0, %v4964
        %v4966 = vpop.f32.mrb[0].mxu0
        %v4967 = vadd.f32 0.0, %v4966
        %v4968 = vpop.f32.mrb[0].mxu0
        %v4969 = vadd.f32 0.0, %v4968
        %4970 = vmatprep.mubr.bf16.mxu0 %v4543
        %4971 = vmatmul.mubr.bf16.gmra.mrb[0].mxu0 %v4542
        %v4972 = vpop.f32.mrb[0].mxu0
        %v4973 = vadd.f32 0.0, %v4972
        %v4974 = vpop.f32.mrb[0].mxu0
        %v4975 = vadd.f32 0.0, %v4974
        %v4976 = vpop.f32.mrb[0].mxu0
        %v4977 = vadd.f32 0.0, %v4976
        %v4978 = vpop.f32.mrb[0].mxu0
        %v4979 = vadd.f32 0.0, %v4978
        %4980 = vdwg.mxu0
        %4981 = vmatprep.subr.bf16.mxu0 %v4803
        %4982 = vmatpush1.bf16.msra.mxu0 %v4802
        %4983 = vmatprep.subr.bf16.mxu0 %v4807
        %4984 = vmatpush1.bf16.msra.mxu0 %v4806
        %4985 = vmatprep.subr.bf16.mxu0 %v4811
        %4986 = vmatpush1.bf16.msra.mxu0 %v4810
        %4987 = vmatprep.subr.bf16.mxu0 %v4815
        %4988 = vmatpush1.bf16.msra.mxu0 %v4814
        %4989 = vmatprep.subr.bf16.mxu0 %v4819
        %4990 = vmatpush1.bf16.msra.mxu0 %v4818
        %4991 = vmatprep.subr.bf16.mxu0 %v4823
        %4992 = vmatpush1.bf16.msra.mxu0 %v4822
        %4993 = vmatprep.subr.bf16.mxu0 %v4827
        %4994 = vmatpush1.bf16.msra.mxu0 %v4826
        %4995 = vmatprep.subr.bf16.mxu0 %v4831
        %4996 = vmatpush1.bf16.msra.mxu0 %v4830
        %4997 = vmatprep.subr.bf16.mxu0 %v4835
        %4998 = vmatpush1.bf16.msra.mxu0 %v4834
        %4999 = vmatprep.subr.bf16.mxu0 %v4839
        %5000 = vmatpush1.bf16.msra.mxu0 %v4838
        %5001 = vmatprep.subr.bf16.mxu0 %v4843
        %5002 = vmatpush1.bf16.msra.mxu0 %v4842
        %5003 = vmatprep.subr.bf16.mxu0 %v4847
        %5004 = vmatpush1.bf16.msra.mxu0 %v4846
        %5005 = vmatprep.subr.bf16.mxu0 %v4851
        %5006 = vmatpush1.bf16.msra.mxu0 %v4850
        %5007 = vmatprep.subr.bf16.mxu0 %v4855
        %5008 = vmatpush1.bf16.msra.mxu0 %v4854
        %5009 = vmatprep.subr.bf16.mxu0 %v4859
        %5010 = vmatpush1.bf16.msra.mxu0 %v4858
        %5011 = vmatprep.subr.bf16.mxu0 %v4863
        %5012 = vmatpush1.bf16.msra.mxu0 %v4862
        %5013 = vmatprep.mubr.bf16.mxu0 %v4541
        %5014 = vmatmul.mubr.bf16.gmra.mrb[0].mxu0 %v4540
        %v5015 = vpop.f32.mrb[0].mxu0
        %v5016 = vadd.f32 0.0, %v5015
        %v5017 = vpop.f32.mrb[0].mxu0
        %v5018 = vadd.f32 0.0, %v5017
        %v5019 = vpop.f32.mrb[0].mxu0
        %v5020 = vadd.f32 0.0, %v5019
        %v5021 = vpop.f32.mrb[0].mxu0
        %v5022 = vadd.f32 0.0, %v5021
        %5023 = vmatprep.mubr.bf16.mxu0 %v4543
        %5024 = vmatmul.mubr.bf16.gmra.mrb[0].mxu0 %v4542
        %v5025 = vpop.f32.mrb[0].mxu0
        %v5026 = vadd.f32 0.0, %v5025
        %v5027 = vpop.f32.mrb[0].mxu0
        %v5028 = vadd.f32 0.0, %v5027
        %v5029 = vpop.f32.mrb[0].mxu0
        %v5030 = vadd.f32 0.0, %v5029
        %v5031 = vpop.f32.mrb[0].mxu0
        %v5032 = vadd.f32 0.0, %v5031
        %5033 = vdwg.mxu0
        %v5034 = vld [vmem:[#allocation13 + $0x8] sm:$0xf]
        %v5163 = vunpack.c.l.b16 %v4359
        %v5164 = vunpack.c.h.b16 %v4359
        %v5165 = vunpack.c.l.b16 %v4360
        %v5166 = vunpack.c.h.b16 %v4360
        %v5167 = vunpack.c.l.b16 %v4361
        %v5168 = vunpack.c.h.b16 %v4361
        %v5169 = vunpack.c.l.b16 %v4362
        %v5170 = vunpack.c.h.b16 %v4362
        %v5171 = vunpack.c.l.b16 %v4363
        %v5172 = vunpack.c.h.b16 %v4363
        %v5173 = vunpack.c.l.b16 %v4364
        %v5174 = vunpack.c.h.b16 %v4364
        %v5175 = vunpack.c.l.b16 %v4365
        %v5176 = vunpack.c.h.b16 %v4365
        %v5177 = vunpack.c.l.b16 %v4366
        %v5178 = vunpack.c.h.b16 %v4366
        %v5179 = vunpack.c.l.b16 %v4367
        %v5180 = vunpack.c.h.b16 %v4367
        %v5181 = vunpack.c.l.b16 %v4368
        %v5182 = vunpack.c.h.b16 %v4368
        %v5183 = vunpack.c.l.b16 %v4369
        %v5184 = vunpack.c.h.b16 %v4369
        %v5185 = vunpack.c.l.b16 %v4370
        %v5186 = vunpack.c.h.b16 %v4370
        %v5187 = vunpack.c.l.b16 %v4371
        %v5188 = vunpack.c.h.b16 %v4371
        %v5189 = vunpack.c.l.b16 %v4372
        %v5190 = vunpack.c.h.b16 %v4372
        %v5191 = vunpack.c.l.b16 %v4373
        %v5192 = vunpack.c.h.b16 %v4373
        %v5193 = vunpack.c.l.b16 %v4374
        %v5194 = vunpack.c.h.b16 %v4374
        %v5195 = vunpack.c.l.b16 %v4375
        %v5196 = vunpack.c.h.b16 %v4375
        %v5197 = vunpack.c.l.b16 %v4376
        %v5198 = vunpack.c.h.b16 %v4376
        %v5199 = vunpack.c.l.b16 %v4377
        %v5200 = vunpack.c.h.b16 %v4377
        %v5201 = vunpack.c.l.b16 %v4378
        %v5202 = vunpack.c.h.b16 %v4378
        %v5203 = vunpack.c.l.b16 %v4379
        %v5204 = vunpack.c.h.b16 %v4379
        %v5205 = vunpack.c.l.b16 %v4380
        %v5206 = vunpack.c.h.b16 %v4380
        %v5207 = vunpack.c.l.b16 %v4381
        %v5208 = vunpack.c.h.b16 %v4381
        %v5209 = vunpack.c.l.b16 %v4382
        %v5210 = vunpack.c.h.b16 %v4382
        %v5211 = vunpack.c.l.b16 %v4383
        %v5212 = vunpack.c.h.b16 %v4383
        %v5213 = vunpack.c.l.b16 %v4384
        %v5214 = vunpack.c.h.b16 %v4384
        %v5215 = vunpack.c.l.b16 %v4385
        %v5216 = vunpack.c.h.b16 %v4385
        %v5217 = vunpack.c.l.b16 %v4386
        %v5218 = vunpack.c.h.b16 %v4386
        %v5219 = vunpack.c.l.b16 %v4387
        %v5220 = vunpack.c.h.b16 %v4387
        %v5221 = vunpack.c.l.b16 %v4388
        %v5222 = vunpack.c.h.b16 %v4388
        %v5223 = vunpack.c.l.b16 %v4389
        %v5224 = vunpack.c.h.b16 %v4389
        %v5225 = vunpack.c.l.b16 %v4390
        %v5226 = vunpack.c.h.b16 %v4390
        %v5227 = vunpack.c.l.b16 %v4391
        %v5228 = vunpack.c.h.b16 %v4391
        %v5229 = vunpack.c.l.b16 %v4392
        %v5230 = vunpack.c.h.b16 %v4392
        %v5231 = vunpack.c.l.b16 %v4393
        %v5232 = vunpack.c.h.b16 %v4393
        %v5233 = vunpack.c.l.b16 %v4394
        %v5234 = vunpack.c.h.b16 %v4394
        %v5235 = vunpack.c.l.b16 %v4395
        %v5236 = vunpack.c.h.b16 %v4395
        %v5237 = vunpack.c.l.b16 %v4396
        %v5238 = vunpack.c.h.b16 %v4396
        %v5239 = vunpack.c.l.b16 %v4397
        %v5240 = vunpack.c.h.b16 %v4397
        %v5241 = vunpack.c.l.b16 %v4398
        %v5242 = vunpack.c.h.b16 %v4398
        %v5243 = vunpack.c.l.b16 %v4399
        %v5244 = vunpack.c.h.b16 %v4399
        %v5245 = vunpack.c.l.b16 %v4400
        %v5246 = vunpack.c.h.b16 %v4400
        %v5247 = vunpack.c.l.b16 %v4401
        %v5248 = vunpack.c.h.b16 %v4401
        %v5249 = vunpack.c.l.b16 %v4402
        %v5250 = vunpack.c.h.b16 %v4402
        %v5251 = vunpack.c.l.b16 %v4403
        %v5252 = vunpack.c.h.b16 %v4403
        %v5253 = vunpack.c.l.b16 %v4404
        %v5254 = vunpack.c.h.b16 %v4404
        %v5255 = vunpack.c.l.b16 %v4405
        %v5256 = vunpack.c.h.b16 %v4405
        %v5257 = vunpack.c.l.b16 %v4406
        %v5258 = vunpack.c.h.b16 %v4406
        %v5259 = vunpack.c.l.b16 %v4407
        %v5260 = vunpack.c.h.b16 %v4407
        %v5261 = vunpack.c.l.b16 %v4408
        %v5262 = vunpack.c.h.b16 %v4408
        %v5263 = vunpack.c.l.b16 %v4409
        %v5264 = vunpack.c.h.b16 %v4409
        %v5265 = vunpack.c.l.b16 %v4410
        %v5266 = vunpack.c.h.b16 %v4410
        %v5267 = vunpack.c.l.b16 %v4411
        %v5268 = vunpack.c.h.b16 %v4411
        %v5269 = vunpack.c.l.b16 %v4412
        %v5270 = vunpack.c.h.b16 %v4412
        %v5271 = vunpack.c.l.b16 %v4413
        %v5272 = vunpack.c.h.b16 %v4413
        %v5273 = vunpack.c.l.b16 %v4414
        %v5274 = vunpack.c.h.b16 %v4414
        %v5275 = vunpack.c.l.b16 %v4415
        %v5276 = vunpack.c.h.b16 %v4415
        %v5277 = vunpack.c.l.b16 %v4416
        %v5278 = vunpack.c.h.b16 %v4416
        %v5279 = vunpack.c.l.b16 %v4417
        %v5280 = vunpack.c.h.b16 %v4417
        %v5281 = vunpack.c.l.b16 %v4418
        %v5282 = vunpack.c.h.b16 %v4418
        %v5283 = vunpack.c.l.b16 %v4419
        %v5284 = vunpack.c.h.b16 %v4419
        %v5285 = vunpack.c.l.b16 %v4420
        %v5286 = vunpack.c.h.b16 %v4420
        %v5287 = vunpack.c.l.b16 %v4421
        %v5288 = vunpack.c.h.b16 %v4421
        %v5289 = vunpack.c.l.b16 %v4422
        %v5290 = vunpack.c.h.b16 %v4422
        %v5291 = vunpack.c.l.b16 %v4423
        %v5292 = vunpack.c.h.b16 %v4423
        %v5293 = vunpack.c.l.b16 %v4424
        %v5294 = vunpack.c.h.b16 %v4424
        %v5295 = vunpack.c.l.b16 %v4425
        %v5296 = vunpack.c.h.b16 %v4425
        %v5297 = vunpack.c.l.b16 %v4426
        %v5298 = vunpack.c.h.b16 %v4426
        %v5299 = vunpack.c.l.b16 %v4427
        %v5300 = vunpack.c.h.b16 %v4427
        %v5301 = vunpack.c.l.b16 %v4428
        %v5302 = vunpack.c.h.b16 %v4428
        %v5303 = vunpack.c.l.b16 %v4429
        %v5304 = vunpack.c.h.b16 %v4429
        %v5305 = vunpack.c.l.b16 %v4430
        %v5306 = vunpack.c.h.b16 %v4430
        %v5307 = vunpack.c.l.b16 %v4431
        %v5308 = vunpack.c.h.b16 %v4431
        %v5309 = vunpack.c.l.b16 %v4432
        %v5310 = vunpack.c.h.b16 %v4432
        %v5311 = vunpack.c.l.b16 %v4433
        %v5312 = vunpack.c.h.b16 %v4433
        %v5313 = vunpack.c.l.b16 %v4434
        %v5314 = vunpack.c.h.b16 %v4434
        %v5315 = vunpack.c.l.b16 %v4435
        %v5316 = vunpack.c.h.b16 %v4435
        %v5317 = vunpack.c.l.b16 %v4436
        %v5318 = vunpack.c.h.b16 %v4436
        %v5319 = vunpack.c.l.b16 %v4437
        %v5320 = vunpack.c.h.b16 %v4437
        %v5321 = vunpack.c.l.b16 %v4438
        %v5322 = vunpack.c.h.b16 %v4438
        %v5323 = vunpack.c.l.b16 %v4439
        %v5324 = vunpack.c.h.b16 %v4439
        %v5325 = vunpack.c.l.b16 %v4440
        %v5326 = vunpack.c.h.b16 %v4440
        %v5327 = vunpack.c.l.b16 %v4441
        %v5328 = vunpack.c.h.b16 %v4441
        %v5329 = vunpack.c.l.b16 %v4442
        %v5330 = vunpack.c.h.b16 %v4442
        %v5331 = vunpack.c.l.b16 %v4443
        %v5332 = vunpack.c.h.b16 %v4443
        %v5333 = vunpack.c.l.b16 %v4444
        %v5334 = vunpack.c.h.b16 %v4444
        %v5335 = vunpack.c.l.b16 %v4445
        %v5336 = vunpack.c.h.b16 %v4445
        %v5337 = vunpack.c.l.b16 %v4446
        %v5338 = vunpack.c.h.b16 %v4446
        %v5339 = vunpack.c.l.b16 %v4447
        %v5340 = vunpack.c.h.b16 %v4447
        %v5341 = vunpack.c.l.b16 %v4448
        %v5342 = vunpack.c.h.b16 %v4448
        %v5343 = vunpack.c.l.b16 %v4449
        %v5344 = vunpack.c.h.b16 %v4449
        %v5345 = vunpack.c.l.b16 %v4450
        %v5346 = vunpack.c.h.b16 %v4450
        %v5347 = vunpack.c.l.b16 %v4451
        %v5348 = vunpack.c.h.b16 %v4451
        %v5349 = vunpack.c.l.b16 %v4452
        %v5350 = vunpack.c.h.b16 %v4452
        %v5351 = vunpack.c.l.b16 %v4453
        %v5352 = vunpack.c.h.b16 %v4453
        %v5353 = vunpack.c.l.b16 %v4454
        %v5354 = vunpack.c.h.b16 %v4454
        %v5355 = vunpack.c.l.b16 %v4455
        %v5356 = vunpack.c.h.b16 %v4455
        %v5357 = vunpack.c.l.b16 %v4456
        %v5358 = vunpack.c.h.b16 %v4456
        %v5359 = vunpack.c.l.b16 %v4457
        %v5360 = vunpack.c.h.b16 %v4457
        %v5361 = vunpack.c.l.b16 %v4458
        %v5362 = vunpack.c.h.b16 %v4458
        %v5363 = vunpack.c.l.b16 %v4459
        %v5364 = vunpack.c.h.b16 %v4459
        %v5365 = vunpack.c.l.b16 %v4460
        %v5366 = vunpack.c.h.b16 %v4460
        %v5367 = vunpack.c.l.b16 %v4461
        %v5368 = vunpack.c.h.b16 %v4461
        %v5369 = vunpack.c.l.b16 %v4462
        %v5370 = vunpack.c.h.b16 %v4462
        %v5371 = vunpack.c.l.b16 %v4463
        %v5372 = vunpack.c.h.b16 %v4463
        %v5373 = vunpack.c.l.b16 %v4464
        %v5374 = vunpack.c.h.b16 %v4464
        %v5375 = vunpack.c.l.b16 %v4465
        %v5376 = vunpack.c.h.b16 %v4465
        %v5377 = vunpack.c.l.b16 %v4466
        %v5378 = vunpack.c.h.b16 %v4466
        %v5379 = vunpack.c.l.b16 %v4467
        %v5380 = vunpack.c.h.b16 %v4467
        %v5381 = vunpack.c.l.b16 %v4468
        %v5382 = vunpack.c.h.b16 %v4468
        %v5383 = vunpack.c.l.b16 %v4469
        %v5384 = vunpack.c.h.b16 %v4469
        %v5385 = vunpack.c.l.b16 %v4470
        %v5386 = vunpack.c.h.b16 %v4470
        %v5387 = vunpack.c.l.b16 %v4471
        %v5388 = vunpack.c.h.b16 %v4471
        %v5389 = vunpack.c.l.b16 %v4472
        %v5390 = vunpack.c.h.b16 %v4472
        %v5391 = vunpack.c.l.b16 %v4473
        %v5392 = vunpack.c.h.b16 %v4473
        %v5393 = vunpack.c.l.b16 %v4474
        %v5394 = vunpack.c.h.b16 %v4474
        %v5395 = vunpack.c.l.b16 %v4475
        %v5396 = vunpack.c.h.b16 %v4475
        %v5397 = vunpack.c.l.b16 %v4476
        %v5398 = vunpack.c.h.b16 %v4476
        %v5399 = vunpack.c.l.b16 %v4477
        %v5400 = vunpack.c.h.b16 %v4477
        %v5401 = vunpack.c.l.b16 %v4478
        %v5402 = vunpack.c.h.b16 %v4478
        %v5403 = vunpack.c.l.b16 %v4479
        %v5404 = vunpack.c.h.b16 %v4479
        %v5405 = vunpack.c.l.b16 %v4480
        %v5406 = vunpack.c.h.b16 %v4480
        %v5407 = vunpack.c.l.b16 %v4481
        %v5408 = vunpack.c.h.b16 %v4481
        %v5409 = vunpack.c.l.b16 %v4482
        %v5410 = vunpack.c.h.b16 %v4482
        %v5411 = vunpack.c.l.b16 %v4483
        %v5412 = vunpack.c.h.b16 %v4483
        %v5413 = vunpack.c.l.b16 %v4484
        %v5414 = vunpack.c.h.b16 %v4484
        %v5415 = vunpack.c.l.b16 %v4485
        %v5416 = vunpack.c.h.b16 %v4485
        %v5417 = vunpack.c.l.b16 %v4486
        %v5418 = vunpack.c.h.b16 %v4486
        %v5419 = vpack.c.b16 %v5167, %v5163
        %v5420 = vpack.c.b16 %v5168, %v5164
        %v5421 = vpack.c.b16 %v5169, %v5165
        %v5422 = vpack.c.b16 %v5170, %v5166
        %v5423 = vpack.c.b16 %v5175, %v5171
        %v5424 = vpack.c.b16 %v5176, %v5172
        %v5425 = vpack.c.b16 %v5177, %v5173
        %v5426 = vpack.c.b16 %v5178, %v5174
        %v5427 = vpack.c.b16 %v5183, %v5179
        %v5428 = vpack.c.b16 %v5184, %v5180
        %v5429 = vpack.c.b16 %v5185, %v5181
        %v5430 = vpack.c.b16 %v5186, %v5182
        %v5431 = vpack.c.b16 %v5191, %v5187
        %v5432 = vpack.c.b16 %v5192, %v5188
        %v5433 = vpack.c.b16 %v5193, %v5189
        %v5434 = vpack.c.b16 %v5194, %v5190
        %v5435 = vpack.c.b16 %v5199, %v5195
        %v5436 = vpack.c.b16 %v5200, %v5196
        %v5437 = vpack.c.b16 %v5201, %v5197
        %v5438 = vpack.c.b16 %v5202, %v5198
        %v5439 = vpack.c.b16 %v5207, %v5203
        %v5440 = vpack.c.b16 %v5208, %v5204
        %v5441 = vpack.c.b16 %v5209, %v5205
        %v5442 = vpack.c.b16 %v5210, %v5206
        %v5443 = vpack.c.b16 %v5215, %v5211
        %v5444 = vpack.c.b16 %v5216, %v5212
        %v5445 = vpack.c.b16 %v5217, %v5213
        %v5446 = vpack.c.b16 %v5218, %v5214
        %v5447 = vpack.c.b16 %v5223, %v5219
        %v5448 = vpack.c.b16 %v5224, %v5220
        %v5449 = vpack.c.b16 %v5225, %v5221
        %v5450 = vpack.c.b16 %v5226, %v5222
        %v5451 = vpack.c.b16 %v5231, %v5227
        %v5452 = vpack.c.b16 %v5232, %v5228
        %v5453 = vpack.c.b16 %v5233, %v5229
        %v5454 = vpack.c.b16 %v5234, %v5230
        %v5455 = vpack.c.b16 %v5239, %v5235
        %v5456 = vpack.c.b16 %v5240, %v5236
        %v5457 = vpack.c.b16 %v5241, %v5237
        %v5458 = vpack.c.b16 %v5242, %v5238
        %v5459 = vpack.c.b16 %v5247, %v5243
        %v5460 = vpack.c.b16 %v5248, %v5244
        %v5461 = vpack.c.b16 %v5249, %v5245
        %v5462 = vpack.c.b16 %v5250, %v5246
        %v5463 = vpack.c.b16 %v5255, %v5251
        %v5464 = vpack.c.b16 %v5256, %v5252
        %v5465 = vpack.c.b16 %v5257, %v5253
        %v5466 = vpack.c.b16 %v5258, %v5254
        %v5467 = vpack.c.b16 %v5263, %v5259
        %v5468 = vpack.c.b16 %v5264, %v5260
        %v5469 = vpack.c.b16 %v5265, %v5261
        %v5470 = vpack.c.b16 %v5266, %v5262
        %v5471 = vpack.c.b16 %v5271, %v5267
        %v5472 = vpack.c.b16 %v5272, %v5268
        %v5473 = vpack.c.b16 %v5273, %v5269
        %v5474 = vpack.c.b16 %v5274, %v5270
        %v5475 = vpack.c.b16 %v5279, %v5275
        %v5476 = vpack.c.b16 %v5280, %v5276
        %v5477 = vpack.c.b16 %v5281, %v5277
        %v5478 = vpack.c.b16 %v5282, %v5278
        %v5479 = vpack.c.b16 %v5287, %v5283
        %v5480 = vpack.c.b16 %v5288, %v5284
        %v5481 = vpack.c.b16 %v5289, %v5285
        %v5482 = vpack.c.b16 %v5290, %v5286
        %v5483 = vpack.c.b16 %v5295, %v5291
        %v5484 = vpack.c.b16 %v5296, %v5292
        %v5485 = vpack.c.b16 %v5297, %v5293
        %v5486 = vpack.c.b16 %v5298, %v5294
        %v5487 = vpack.c.b16 %v5303, %v5299
        %v5488 = vpack.c.b16 %v5304, %v5300
        %v5489 = vpack.c.b16 %v5305, %v5301
        %v5490 = vpack.c.b16 %v5306, %v5302
        %v5491 = vpack.c.b16 %v5311, %v5307
        %v5492 = vpack.c.b16 %v5312, %v5308
        %v5493 = vpack.c.b16 %v5313, %v5309
        %v5494 = vpack.c.b16 %v5314, %v5310
        %v5495 = vpack.c.b16 %v5319, %v5315
        %v5496 = vpack.c.b16 %v5320, %v5316
        %v5497 = vpack.c.b16 %v5321, %v5317
        %v5498 = vpack.c.b16 %v5322, %v5318
        %v5499 = vpack.c.b16 %v5327, %v5323
        %v5500 = vpack.c.b16 %v5328, %v5324
        %v5501 = vpack.c.b16 %v5329, %v5325
        %v5502 = vpack.c.b16 %v5330, %v5326
        %v5503 = vpack.c.b16 %v5335, %v5331
        %v5504 = vpack.c.b16 %v5336, %v5332
        %v5505 = vpack.c.b16 %v5337, %v5333
        %v5506 = vpack.c.b16 %v5338, %v5334
        %v5507 = vpack.c.b16 %v5343, %v5339
        %v5508 = vpack.c.b16 %v5344, %v5340
        %v5509 = vpack.c.b16 %v5345, %v5341
        %v5510 = vpack.c.b16 %v5346, %v5342
        %v5511 = vpack.c.b16 %v5351, %v5347
        %v5512 = vpack.c.b16 %v5352, %v5348
        %v5513 = vpack.c.b16 %v5353, %v5349
        %v5514 = vpack.c.b16 %v5354, %v5350
        %v5515 = vpack.c.b16 %v5359, %v5355
        %v5516 = vpack.c.b16 %v5360, %v5356
        %v5517 = vpack.c.b16 %v5361, %v5357
        %v5518 = vpack.c.b16 %v5362, %v5358
        %v5519 = vpack.c.b16 %v5367, %v5363
        %v5520 = vpack.c.b16 %v5368, %v5364
        %v5521 = vpack.c.b16 %v5369, %v5365
        %v5522 = vpack.c.b16 %v5370, %v5366
        %v5523 = vpack.c.b16 %v5375, %v5371
        %v5524 = vpack.c.b16 %v5376, %v5372
        %v5525 = vpack.c.b16 %v5377, %v5373
        %v5526 = vpack.c.b16 %v5378, %v5374
        %v5527 = vpack.c.b16 %v5383, %v5379
        %v5528 = vpack.c.b16 %v5384, %v5380
        %v5529 = vpack.c.b16 %v5385, %v5381
        %v5530 = vpack.c.b16 %v5386, %v5382
        %v5531 = vpack.c.b16 %v5391, %v5387
        %v5532 = vpack.c.b16 %v5392, %v5388
        %v5533 = vpack.c.b16 %v5393, %v5389
        %v5534 = vpack.c.b16 %v5394, %v5390
        %v5535 = vpack.c.b16 %v5399, %v5395
        %v5536 = vpack.c.b16 %v5400, %v5396
        %v5537 = vpack.c.b16 %v5401, %v5397
        %v5538 = vpack.c.b16 %v5402, %v5398
        %v5539 = vpack.c.b16 %v5407, %v5403
        %v5540 = vpack.c.b16 %v5408, %v5404
        %v5541 = vpack.c.b16 %v5409, %v5405
        %v5542 = vpack.c.b16 %v5410, %v5406
        %v5543 = vpack.c.b16 %v5415, %v5411
        %v5544 = vpack.c.b16 %v5416, %v5412
        %v5545 = vpack.c.b16 %v5417, %v5413
        %v5546 = vpack.c.b16 %v5418, %v5414
        %5675 = vmatprep.subr.bf16.mxu0 %v5420
        %5676 = vmatpush1.bf16.msra.mxu0 %v5419
        %5677 = vmatprep.subr.bf16.mxu0 %v5424
        %5678 = vmatpush1.bf16.msra.mxu0 %v5423
        %5679 = vmatprep.subr.bf16.mxu0 %v5428
        %5680 = vmatpush1.bf16.msra.mxu0 %v5427
        %5681 = vmatprep.subr.bf16.mxu0 %v5432
        %5682 = vmatpush1.bf16.msra.mxu0 %v5431
        %5683 = vmatprep.subr.bf16.mxu0 %v5436
        %5684 = vmatpush1.bf16.msra.mxu0 %v5435
        %5685 = vmatprep.subr.bf16.mxu0 %v5440
        %5686 = vmatpush1.bf16.msra.mxu0 %v5439
        %5687 = vmatprep.subr.bf16.mxu0 %v5444
        %5688 = vmatpush1.bf16.msra.mxu0 %v5443
        %5689 = vmatprep.subr.bf16.mxu0 %v5448
        %5690 = vmatpush1.bf16.msra.mxu0 %v5447
        %5691 = vmatprep.subr.bf16.mxu0 %v5452
        %5692 = vmatpush1.bf16.msra.mxu0 %v5451
        %5693 = vmatprep.subr.bf16.mxu0 %v5456
        %5694 = vmatpush1.bf16.msra.mxu0 %v5455
        %5695 = vmatprep.subr.bf16.mxu0 %v5460
        %5696 = vmatpush1.bf16.msra.mxu0 %v5459
        %5697 = vmatprep.subr.bf16.mxu0 %v5464
        %5698 = vmatpush1.bf16.msra.mxu0 %v5463
        %5699 = vmatprep.subr.bf16.mxu0 %v5468
        %5700 = vmatpush1.bf16.msra.mxu0 %v5467
        %5701 = vmatprep.subr.bf16.mxu0 %v5472
        %5702 = vmatpush1.bf16.msra.mxu0 %v5471
        %5703 = vmatprep.subr.bf16.mxu0 %v5476
        %5704 = vmatpush1.bf16.msra.mxu0 %v5475
        %5705 = vmatprep.subr.bf16.mxu0 %v5480
        %5706 = vmatpush1.bf16.msra.mxu0 %v5479
        %5707 = vmatprep.mubr.bf16.mxu0 %v4352
        %5708 = vmatmul.mubr.bf16.gmra.mrb[0].mxu0 %v4351
        %v5709 = vpop.f32.mrb[0].mxu0
        %v5710 = vadd.f32 %v4963, %v5709
        %v5711 = vpop.f32.mrb[0].mxu0
        %v5712 = vadd.f32 %v4965, %v5711
        %v5713 = vpop.f32.mrb[0].mxu0
        %v5714 = vadd.f32 %v4967, %v5713
        %v5715 = vpop.f32.mrb[0].mxu0
        %v5716 = vadd.f32 %v4969, %v5715
        %5717 = vmatprep.mubr.bf16.mxu0 %v4356
        %5718 = vmatmul.mubr.bf16.gmra.mrb[0].mxu0 %v4355
        %v5719 = vpop.f32.mrb[0].mxu0
        %v5720 = vadd.f32 %v4973, %v5719
        %v5721 = vpop.f32.mrb[0].mxu0
        %v5722 = vadd.f32 %v4975, %v5721
        %v5723 = vpop.f32.mrb[0].mxu0
        %v5724 = vadd.f32 %v4977, %v5723
        %v5725 = vpop.f32.mrb[0].mxu0
        %v5726 = vadd.f32 %v4979, %v5725
        %5727 = vdwg.mxu0
        %5728 = vmatprep.subr.bf16.mxu0 %v5484
        %5729 = vmatpush1.bf16.msra.mxu0 %v5483
        %5730 = vmatprep.subr.bf16.mxu0 %v5488
        %5731 = vmatpush1.bf16.msra.mxu0 %v5487
        %5732 = vmatprep.subr.bf16.mxu0 %v5492
        %5733 = vmatpush1.bf16.msra.mxu0 %v5491
        %5734 = vmatprep.subr.bf16.mxu0 %v5496
        %5735 = vmatpush1.bf16.msra.mxu0 %v5495
        %5736 = vmatprep.subr.bf16.mxu0 %v5500
        %5737 = vmatpush1.bf16.msra.mxu0 %v5499
        %5738 = vmatprep.subr.bf16.mxu0 %v5504
        %5739 = vmatpush1.bf16.msra.mxu0 %v5503
        %5740 = vmatprep.subr.bf16.mxu0 %v5508
        %5741 = vmatpush1.bf16.msra.mxu0 %v5507
        %5742 = vmatprep.subr.bf16.mxu0 %v5512
        %5743 = vmatpush1.bf16.msra.mxu0 %v5511
        %5744 = vmatprep.subr.bf16.mxu0 %v5516
        %5745 = vmatpush1.bf16.msra.mxu0 %v5515
        %5746 = vmatprep.subr.bf16.mxu0 %v5520
        %5747 = vmatpush1.bf16.msra.mxu0 %v5519
        %5748 = vmatprep.subr.bf16.mxu0 %v5524
        %5749 = vmatpush1.bf16.msra.mxu0 %v5523
        %5750 = vmatprep.subr.bf16.mxu0 %v5528
        %5751 = vmatpush1.bf16.msra.mxu0 %v5527
        %5752 = vmatprep.subr.bf16.mxu0 %v5532
        %5753 = vmatpush1.bf16.msra.mxu0 %v5531
        %5754 = vmatprep.subr.bf16.mxu0 %v5536
        %5755 = vmatpush1.bf16.msra.mxu0 %v5535
        %5756 = vmatprep.subr.bf16.mxu0 %v5540
        %5757 = vmatpush1.bf16.msra.mxu0 %v5539
        %5758 = vmatprep.subr.bf16.mxu0 %v5544
        %5759 = vmatpush1.bf16.msra.mxu0 %v5543
        %5760 = vmatprep.mubr.bf16.mxu0 %v4354
        %5761 = vmatmul.mubr.bf16.gmra.mrb[0].mxu0 %v4353
        %v5762 = vpop.f32.mrb[0].mxu0
        %v5763 = vadd.f32 %v5710, %v5762
        %v5764 = vpop.f32.mrb[0].mxu0
        %v5765 = vadd.f32 %v5712, %v5764
        %v5766 = vpop.f32.mrb[0].mxu0
        %v5767 = vadd.f32 %v5714, %v5766
        %v5768 = vpop.f32.mrb[0].mxu0
        %v5769 = vadd.f32 %v5716, %v5768
        %5770 = vmatprep.mubr.bf16.mxu0 %v4358
        %5771 = vmatmul.mubr.bf16.gmra.mrb[0].mxu0 %v4357
        %v5772 = vpop.f32.mrb[0].mxu0
        %v5773 = vadd.f32 %v5720, %v5772
        %v5774 = vpop.f32.mrb[0].mxu0
        %v5775 = vadd.f32 %v5722, %v5774
        %v5776 = vpop.f32.mrb[0].mxu0
        %v5777 = vadd.f32 %v5724, %v5776
        %v5778 = vpop.f32.mrb[0].mxu0
        %v5779 = vadd.f32 %v5726, %v5778
        %5780 = vdwg.mxu0
        %5781 = vmatprep.subr.bf16.mxu0 %v5422
        %5782 = vmatpush1.bf16.msra.mxu0 %v5421
        %5783 = vmatprep.subr.bf16.mxu0 %v5426
        %5784 = vmatpush1.bf16.msra.mxu0 %v5425
        %5785 = vmatprep.subr.bf16.mxu0 %v5430
        %5786 = vmatpush1.bf16.msra.mxu0 %v5429
        %5787 = vmatprep.subr.bf16.mxu0 %v5434
        %5788 = vmatpush1.bf16.msra.mxu0 %v5433
        %5789 = vmatprep.subr.bf16.mxu0 %v5438
        %5790 = vmatpush1.bf16.msra.mxu0 %v5437
        %5791 = vmatprep.subr.bf16.mxu0 %v5442
        %5792 = vmatpush1.bf16.msra.mxu0 %v5441
        %5793 = vmatprep.subr.bf16.mxu0 %v5446
        %5794 = vmatpush1.bf16.msra.mxu0 %v5445
        %5795 = vmatprep.subr.bf16.mxu0 %v5450
        %5796 = vmatpush1.bf16.msra.mxu0 %v5449
        %5797 = vmatprep.subr.bf16.mxu0 %v5454
        %5798 = vmatpush1.bf16.msra.mxu0 %v5453
        %5799 = vmatprep.subr.bf16.mxu0 %v5458
        %5800 = vmatpush1.bf16.msra.mxu0 %v5457
        %5801 = vmatprep.subr.bf16.mxu0 %v5462
        %5802 = vmatpush1.bf16.msra.mxu0 %v5461
        %5803 = vmatprep.subr.bf16.mxu0 %v5466
        %5804 = vmatpush1.bf16.msra.mxu0 %v5465
        %5805 = vmatprep.subr.bf16.mxu0 %v5470
        %5806 = vmatpush1.bf16.msra.mxu0 %v5469
        %5807 = vmatprep.subr.bf16.mxu0 %v5474
        %5808 = vmatpush1.bf16.msra.mxu0 %v5473
        %5809 = vmatprep.subr.bf16.mxu0 %v5478
        %5810 = vmatpush1.bf16.msra.mxu0 %v5477
        %5811 = vmatprep.subr.bf16.mxu0 %v5482
        %5812 = vmatpush1.bf16.msra.mxu0 %v5481
        %5813 = vmatprep.mubr.bf16.mxu0 %v4352
        %5814 = vmatmul.mubr.bf16.gmra.mrb[0].mxu0 %v4351
        %v5815 = vpop.f32.mrb[0].mxu0
        %v5816 = vadd.f32 %v5016, %v5815
        %v5817 = vpop.f32.mrb[0].mxu0
        %v5818 = vadd.f32 %v5018, %v5817
        %v5819 = vpop.f32.mrb[0].mxu0
        %v5820 = vadd.f32 %v5020, %v5819
        %v5821 = vpop.f32.mrb[0].mxu0
        %v5822 = vadd.f32 %v5022, %v5821
        %5823 = vmatprep.mubr.bf16.mxu0 %v4356
        %5824 = vmatmul.mubr.bf16.gmra.mrb[0].mxu0 %v4355
        %v5825 = vpop.f32.mrb[0].mxu0
        %v5826 = vadd.f32 %v5026, %v5825
        %v5827 = vpop.f32.mrb[0].mxu0
        %v5828 = vadd.f32 %v5028, %v5827
        %v5829 = vpop.f32.mrb[0].mxu0
        %v5830 = vadd.f32 %v5030, %v5829
        %v5831 = vpop.f32.mrb[0].mxu0
        %v5832 = vadd.f32 %v5032, %v5831
        %5833 = vdwg.mxu0
        %5834 = vmatprep.subr.bf16.mxu0 %v5486
        %5835 = vmatpush1.bf16.msra.mxu0 %v5485
        %5836 = vmatprep.subr.bf16.mxu0 %v5490
        %5837 = vmatpush1.bf16.msra.mxu0 %v5489
        %5838 = vmatprep.subr.bf16.mxu0 %v5494
        %5839 = vmatpush1.bf16.msra.mxu0 %v5493
        %5840 = vmatprep.subr.bf16.mxu0 %v5498
        %5841 = vmatpush1.bf16.msra.mxu0 %v5497
        %5842 = vmatprep.subr.bf16.mxu0 %v5502
        %5843 = vmatpush1.bf16.msra.mxu0 %v5501
        %5844 = vmatprep.subr.bf16.mxu0 %v5506
        %5845 = vmatpush1.bf16.msra.mxu0 %v5505
        %5846 = vmatprep.subr.bf16.mxu0 %v5510
        %5847 = vmatpush1.bf16.msra.mxu0 %v5509
        %5848 = vmatprep.subr.bf16.mxu0 %v5514
        %5849 = vmatpush1.bf16.msra.mxu0 %v5513
        %5850 = vmatprep.subr.bf16.mxu0 %v5518
        %5851 = vmatpush1.bf16.msra.mxu0 %v5517
        %5852 = vmatprep.subr.bf16.mxu0 %v5522
        %5853 = vmatpush1.bf16.msra.mxu0 %v5521
        %5854 = vmatprep.subr.bf16.mxu0 %v5526
        %5855 = vmatpush1.bf16.msra.mxu0 %v5525
        %5856 = vmatprep.subr.bf16.mxu0 %v5530
        %5857 = vmatpush1.bf16.msra.mxu0 %v5529
        %5858 = vmatprep.subr.bf16.mxu0 %v5534
        %5859 = vmatpush1.bf16.msra.mxu0 %v5533
        %5860 = vmatprep.subr.bf16.mxu0 %v5538
        %5861 = vmatpush1.bf16.msra.mxu0 %v5537
        %5862 = vmatprep.subr.bf16.mxu0 %v5542
        %5863 = vmatpush1.bf16.msra.mxu0 %v5541
        %5864 = vmatprep.subr.bf16.mxu0 %v5546
        %5865 = vmatpush1.bf16.msra.mxu0 %v5545
        %5866 = vmatprep.mubr.bf16.mxu0 %v4354
        %5867 = vmatmul.mubr.bf16.gmra.mrb[0].mxu0 %v4353
        %v5868 = vpop.f32.mrb[0].mxu0
        %v5869 = vadd.f32 %v5816, %v5868
        %v5870 = vpop.f32.mrb[0].mxu0
        %v5871 = vadd.f32 %v5818, %v5870
        %v5872 = vpop.f32.mrb[0].mxu0
        %v5873 = vadd.f32 %v5820, %v5872
        %v5874 = vpop.f32.mrb[0].mxu0
        %v5875 = vadd.f32 %v5822, %v5874
        %5876 = vmatprep.mubr.bf16.mxu0 %v4358
        %5877 = vmatmul.mubr.bf16.gmra.mrb[0].mxu0 %v4357
        %v5878 = vpop.f32.mrb[0].mxu0
        %v5879 = vadd.f32 %v5826, %v5878
        %v5880 = vpop.f32.mrb[0].mxu0
        %v5881 = vadd.f32 %v5828, %v5880
        %v5882 = vpop.f32.mrb[0].mxu0
        %v5883 = vadd.f32 %v5830, %v5882
        %v5884 = vpop.f32.mrb[0].mxu0
        %v5885 = vadd.f32 %v5832, %v5884
        %5886 = vdwg.mxu0
        %v5888 = vlaneseq
        %v5889 = vshrl.u32 %v5888, 7
        %v5890 = vsub.s32 0, %v5889
        %v5891 = vrot.slane %v5034, %v5890
        %v5892 = vlaneseq
        %v5893 = vshrl.u32 %v5892, 7
        %v5894 = vsub.s32 1, %v5893
        %v5895 = vrot.slane %v5034, %v5894
        %v5896 = vlaneseq
        %v5897 = vshrl.u32 %v5896, 7
        %v5898 = vsub.s32 2, %v5897
        %v5899 = vrot.slane %v5034, %v5898
        %v5900 = vlaneseq
        %v5901 = vshrl.u32 %v5900, 7
        %v5902 = vsub.s32 3, %v5901
        %v5903 = vrot.slane %v5034, %v5902
        %v5908 = vadd.f32 %v5763, %v5891
        %v5909 = vadd.f32 %v5765, %v5895
        %v5910 = vadd.f32 %v5869, %v5899
        %v5911 = vadd.f32 %v5871, %v5903
        %v5912 = vadd.f32 %v5767, %v5891
        %v5913 = vadd.f32 %v5769, %v5895
        %v5914 = vadd.f32 %v5873, %v5899
        %v5915 = vadd.f32 %v5875, %v5903
        %v5916 = vadd.f32 %v5773, %v5891
        %v5917 = vadd.f32 %v5775, %v5895
        %v5918 = vadd.f32 %v5879, %v5899
        %v5919 = vadd.f32 %v5881, %v5903
        %v5920 = vadd.f32 %v5777, %v5891
        %v5921 = vadd.f32 %v5779, %v5895
        %v5922 = vadd.f32 %v5883, %v5899
        %v5923 = vadd.f32 %v5885, %v5903
        %v5924 = vmax.f32 %v5908, 0.0
        %v5925 = vmax.f32 %v5909, 0.0
        %v5926 = vmax.f32 %v5910, 0.0
        %v5927 = vmax.f32 %v5911, 0.0
        %v5928 = vmax.f32 %v5912, 0.0
        %v5929 = vmax.f32 %v5913, 0.0
        %v5930 = vmax.f32 %v5914, 0.0
        %v5931 = vmax.f32 %v5915, 0.0
        %v5932 = vmax.f32 %v5916, 0.0
        %v5933 = vmax.f32 %v5917, 0.0
        %v5934 = vmax.f32 %v5918, 0.0
        %v5935 = vmax.f32 %v5919, 0.0
        %v5936 = vmax.f32 %v5920, 0.0
        %v5937 = vmax.f32 %v5921, 0.0
        %v5938 = vmax.f32 %v5922, 0.0
        %v5939 = vmax.f32 %v5923, 0.0
        %5940 = vst [vmem:[%s382] sm:$0xff] %v5924
        %5941 = vst [vmem:[%s382 + $0x8] sm:$0xff] %v5925
        %5942 = vst [vmem:[%s382 + $0x10] sm:$0xff] %v5926
        %5943 = vst [vmem:[%s382 + $0x18] sm:$0xff] %v5927
        %5944 = vst [vmem:[%s382 + $0x20] sm:$0xff] %v5928
        %5945 = vst [vmem:[%s382 + $0x28] sm:$0xff] %v5929
        %5946 = vst [vmem:[%s382 + $0x30] sm:$0xff] %v5930
        %5947 = vst [vmem:[%s382 + $0x38] sm:$0xff] %v5931
        %5948 = vst [vmem:[%s382 + $0x40] sm:$0xff] %v5932
        %5949 = vst [vmem:[%s382 + $0x48] sm:$0xff] %v5933
        %5950 = vst [vmem:[%s382 + $0x50] sm:$0xff] %v5934
        %5951 = vst [vmem:[%s382 + $0x58] sm:$0xff] %v5935
        %5952 = vst [vmem:[%s382 + $0x60] sm:$0xff] %v5936
        %5953 = vst [vmem:[%s382 + $0x68] sm:$0xff] %v5937
        %5954 = vst [vmem:[%s382 + $0x70] sm:$0xff] %v5938
        %5955 = vst [vmem:[%s382 + $0x78] sm:$0xff] %v5939
        %s5956 = sand.u32 %s187, 1
        %s5957 = scalar_lea.sflag [#allocation4], %s5956
        %s5958 = sand.u32 %s187, 1
        %s5959 = smul.addr %s5958, 128
        %s5960 = scalar_lea.vmem [#allocation14], %s5959
        // Predicated region
        $region77: #{tpu_custom_call.1} parent=47 // pred_check
          %p5961 = pneg %p197
        $region78: #{tpu_custom_call.1} parent=47 // pred_check_branch
          %5963 = sbr.rel (%p5961) target = $region80
        $region79: #{tpu_custom_call.1} parent=47 // pred_region
          %s5964 = smul.u32 4, %s27
          %s5966 = ssub.s32 2048, 2048
          %5967 = vsyncadd %s5957, %s5966
          %s5968 = smul.addr %s5964, 4
          %s5969 = smul.addr %s5968, 128
          %s5970 = scalar_lea.hbm %s7, %s5969
          %s5971 = sshll.u32 %s5960, 4
          %s5972 = int_to_ptr.vmem [resolvable:$true] %s5971
          %5977 = dma.vmem_to_hbm [thread:$0]  %s5972, 2048, %s5970, %s5957, 512, 512, 32
        $region80: #{tpu_custom_call.1} parent=47 // pred_fallthru
          _
      $region48: #{tpu_custom_call.1} parent=5 // pred_fallthru
        _
      %p5978 = scmp.le.s32.totalorder 2, %s22
      // Predicated region
      $region81: #{tpu_custom_call.1} parent=5 // pred_check
        %p5979 = pneg %p5978
      $region82: #{tpu_custom_call.1} parent=5 // pred_check_branch
        %5981 = sbr.rel (%p5979) target = $region84
      $region83: #{tpu_custom_call.1} parent=5 // pred_region
        %s5982 = ssub.s32 %s22, 2
        // Predicated region
        $region85: #{tpu_custom_call.1} parent=83 // pred_check
          %p5983 = pneg %p203
        $region86: #{tpu_custom_call.1} parent=83 // pred_check_branch
          %5985 = sbr.rel (%p5983) target = $region88
        $region87: #{tpu_custom_call.1} parent=83 // pred_region
          %s5986 = sand.u32 %s188, 1
          %s5987 = scalar_lea.sflag [#allocation4], %s5986
          %s5988 = sand.u32 %s188, 1
          %s5989 = smul.addr %s5988, 128
          %s5990 = scalar_lea.vmem [#allocation14], %s5989
          %5991 = dma.done %s5987, 2048
        $region88: #{tpu_custom_call.1} parent=83 // pred_fallthru
          _
      $region84: #{tpu_custom_call.1} parent=5 // pred_fallthru
        _
    $region6: #{tpu_custom_call.1} parent=1 // loop_footer
      %s26 = sadd.s32 1, %s22
    $region7: #{tpu_custom_call.1} parent=1 // loop_footer_branch
      %21 = sbr.rel target = $region3
    $region8: #{tpu_custom_call.1} parent=1 // loop_exit
      _
    %5992 = vsyncpa [#allocation3], 1
    %s5993 = scalar_lea.sflag [#allocation3], 1
    %5994 = vsyncpa %s5993, 1
    %5995 = vsyncpa [#allocation6], 1
    %5996 = vsyncpa [#allocation9], 1
    %5997 = vsyncpa [#allocation12], 1
    %5998 = vsyncpa [#allocation4], 1
    %s5999 = scalar_lea.sflag [#allocation4], 1
    %6000 = vsyncpa %s5999, 1

</llo_original>
